<compile_context>
chip_gen: v6e
topology: v6e:2x2x1
jax: 0.10.0
libtpu: 0.0.40
codegen_flags: <defaults>
</compile_context>

<pallas_src>
import jax
import jax.numpy as jnp
from jax.experimental import pallas as pl
from jax.experimental.pallas import tpu as pltpu

_HIGHEST = jax.lax.Precision.HIGHEST


# ---------------------------------------------------------------------------
# Elementwise activations: plain jnp so they fuse into whichever producer
# uses them (here: the matmul epilogues inside the CoordAtt kernel).
# ---------------------------------------------------------------------------
def h_sigmoid(x):
    # torch: relu6(x + 3) / 6
    return jnp.clip(x + 3.0, 0.0, 6.0) * (1.0 / 6.0)


def h_swish(x):
    return x * h_sigmoid(x)


def _sigmoid(x):
    return 1.0 / (1.0 + jnp.exp(-x))


# ---------------------------------------------------------------------------
# Fused CoordAtt kernel (one grid step == one batch element).
# ---------------------------------------------------------------------------
def _coord_att_kernel(x_ref, w1_ref, s1_ref, b1_ref, wh_ref, bh_ref,
                      ww_ref, bw_ref, o_ref):
    x = x_ref[0]                                   # (C, H, W), input dtype
    xf = x.astype(jnp.float32)

    # AdaptiveAvgPool2d((None, 1)) / ((1, None)): coordinate pooling.
    x_h = jnp.mean(xf, axis=2)                     # (C, H): mean over width
    x_w = jnp.mean(xf, axis=1)                     # (C, W): mean over height

    # conv1 (1x1) + folded eval-mode BN + h_swish epilogue.  A 1x1 conv is
    # position-wise, so torch's concat -> conv1 -> split is identical to
    # running the same matmul on x_h and x_w separately.
    def conv1_bn_act(t):                           # t: (C, L) -> (mip, L)
        z = jnp.dot(w1_ref[...], t, precision=_HIGHEST,
                    preferred_element_type=jnp.float32)
        return h_swish(z * s1_ref[...] + b1_ref[...])

    y_h = conv1_bn_act(x_h)                        # (mip, H)
    y_w = conv1_bn_act(x_w)                        # (mip, W)

    # conv_h / conv_w (1x1) + sigmoid epilogue -> attention gates.
    a_h = _sigmoid(jnp.dot(wh_ref[...], y_h, precision=_HIGHEST,
                           preferred_element_type=jnp.float32) + bh_ref[...])
    a_w = _sigmoid(jnp.dot(ww_ref[...], y_w, precision=_HIGHEST,
                           preferred_element_type=jnp.float32) + bw_ref[...])

    # out = identity * a_w * a_h, in the input dtype (gates are tiny; the
    # big tensor is never upcast to f32).
    gate = a_h[:, :, None].astype(x.dtype) * a_w[:, None, :].astype(x.dtype)
    o_ref[0] = x * gate


def coord_att(x, params, *, eps=1e-5, donate_input=False,
              vmem_limit_bytes=None, interpret=False):
    """CoordAtt forward (eval-mode BatchNorm), fully fused in one Pallas kernel.

    params: w1 (mip, C), b1 (mip,), bn_gamma/bn_beta/bn_mean/bn_var (mip,),
            wh (C, mip), bh (C,), ww (C, mip), bw (C,)
    (1x1 conv weights as 2-D matrices, i.e. torch weight[:, :, 0, 0]).
    """
    n, c, h, w = x.shape
    w1 = jnp.asarray(params["w1"], jnp.float32)
    mip = w1.shape[0]
    wh = jnp.asarray(params["wh"], jnp.float32)
    ww = jnp.asarray(params["ww"], jnp.float32)
    assert w1.shape == (mip, c) and wh.shape == (c, mip) and ww.shape == (c, mip)

    # Fold eval-mode BatchNorm (+ conv1 bias) into a per-channel scale / bias:
    #   bn(conv1(t)) == scale1 * (W1 @ t) + bias1
    inv_std = 1.0 / jnp.sqrt(jnp.asarray(params["bn_var"], jnp.float32) + eps)
    scale1 = jnp.asarray(params["bn_gamma"], jnp.float32) * inv_std
    bias1 = ((jnp.asarray(params["b1"], jnp.float32)
              - jnp.asarray(params["bn_mean"], jnp.float32)) * scale1
             + jnp.asarray(params["bn_beta"], jnp.float32))
    scale1 = scale1.reshape(mip, 1)
    bias1 = bias1.reshape(mip, 1)
    bh = jnp.asarray(params["bh"], jnp.float32).reshape(c, 1)
    bw = jnp.asarray(params["bw"], jnp.float32).reshape(c, 1)

    full_map = lambda i: (0, 0)
    feat_spec = pl.BlockSpec((1, c, h, w), lambda i: (i, 0, 0, 0))

    return pl.pallas_call(
        _coord_att_kernel,
        out_shape=jax.ShapeDtypeStruct(x.shape, x.dtype),
        grid_spec=pltpu.PrefetchScalarGridSpec(
            num_scalar_prefetch=0,
            grid=(n,),
            in_specs=[
                feat_spec,                             # x (full per-batch slab)
                pl.BlockSpec((mip, c), full_map),      # conv1 weight
                pl.BlockSpec((mip, 1), full_map),      # folded BN scale
                pl.BlockSpec((mip, 1), full_map),      # folded BN bias (incl. b1)
                pl.BlockSpec((c, mip), full_map),      # conv_h weight
                pl.BlockSpec((c, 1), full_map),        # conv_h bias
                pl.BlockSpec((c, mip), full_map),      # conv_w weight
                pl.BlockSpec((c, 1), full_map),        # conv_w bias
            ],
            out_specs=feat_spec,
        ),
        compiler_params=pltpu.CompilerParams(
            dimension_semantics=("parallel",),
            vmem_limit_bytes=vmem_limit_bytes,
        ),
        input_output_aliases={0: 0} if donate_input else {},
        interpret=interpret,
    )(x, w1, scale1, bias1, wh, bh, ww, bw)


# ---------------------------------------------------------------------------
# Pure-jnp reference mirroring torch CoordAtt.forward (eval-mode BN).
# ---------------------------------------------------------------------------
def coord_att_reference(x, params, eps=1e-5):
    n, c, h, w = x.shape
    x_h = jnp.mean(x, axis=3)                                    # (n, c, h)
    x_w = jnp.mean(x, axis=2)                                    # (n, c, w)
    y = jnp.concatenate([x_h, x_w], axis=2)                      # (n, c, h+w)
    y = jnp.einsum("mc,ncl->nml", params["w1"], y, precision=_HIGHEST)
    y = y + params["b1"][None, :, None]
    y = ((y - params["bn_mean"][None, :, None])
         / jnp.sqrt(params["bn_var"][None, :, None] + eps)
         * params["bn_gamma"][None, :, None]
         + params["bn_beta"][None, :, None])
    y = h_swish(y)
    y_h, y_w = y[:, :, :h], y[:, :, h:]
    a_h = _sigmoid(jnp.einsum("om,nml->nol", params["wh"], y_h,
                              precision=_HIGHEST) + params["bh"][None, :, None])
    a_w = _sigmoid(jnp.einsum("om,nml->nol", params["ww"], y_w,
                              precision=_HIGHEST) + params["bw"][None, :, None])
    return x * a_h[:, :, :, None] * a_w[:, :, None, :]


if __name__ == "__main__":
    # Small shapes consistent with the module: CoordAtt(inp=oup=C), mip=max(8, C//32).
    N, C, H, W = 2, 32, 16, 16
    mip = max(8, C // 32)

    key = jax.random.PRNGKey(0)
    ks = jax.random.split(key, 12)
    x = jax.random.normal(ks[0], (N, C, H, W), jnp.float32) * 2.0

    params = {
        "w1": 0.2 * jax.random.normal(ks[1], (mip, C), jnp.float32),
        "b1": 0.1 * jax.random.normal(ks[2], (mip,), jnp.float32),
        "bn_gamma": 1.0 + 0.1 * jax.random.normal(ks[3], (mip,), jnp.float32),
        "bn_beta": 0.1 * jax.random.normal(ks[4], (mip,), jnp.float32),
        "bn_mean": 0.1 * jax.random.normal(ks[5], (mip,), jnp.float32),
        "bn_var": jnp.abs(1.0 + 0.1 * jax.random.normal(ks[6], (mip,), jnp.float32)),
        "wh": 0.2 * jax.random.normal(ks[7], (C, mip), jnp.float32),
        "bh": 0.1 * jax.random.normal(ks[8], (C,), jnp.float32),
        "ww": 0.2 * jax.random.normal(ks[9], (C, mip), jnp.float32),
        "bw": 0.1 * jax.random.normal(ks[10], (C,), jnp.float32),
    }

    out = jax.block_until_ready(coord_att(x, params))
    ref = coord_att_reference(x, params)

    assert out.shape == x.shape and out.dtype == x.dtype
    max_err = float(jnp.max(jnp.abs(out - ref)))
    assert jnp.allclose(out, ref, atol=1e-4, rtol=1e-4), (
        f"CoordAtt mismatch vs reference, max abs err {max_err}")

    # Sanity check on the plain-jnp activations (fused by XLA into producers).
    hs = h_sigmoid(x)
    assert jnp.allclose(hs, jnp.clip(x + 3.0, 0.0, 6.0) / 6.0, atol=1e-6)
    assert jnp.allclose(h_swish(x), x * hs, atol=1e-6)

    print("KERNEL_OK")
</pallas_src>

<mosaic_0001>
module attributes {stable_mosaic.version = 11 : i64} {
  func.func @_coord_att_kernel(%arg0: i32, %arg1: memref<1x32x16x16xf32, #tpu.memory_space<vmem>>, %arg2: memref<8x32xf32, #tpu.memory_space<vmem>>, %arg3: memref<8x1xf32, #tpu.memory_space<vmem>>, %arg4: memref<8x1xf32, #tpu.memory_space<vmem>>, %arg5: memref<32x8xf32, #tpu.memory_space<vmem>>, %arg6: memref<32x1xf32, #tpu.memory_space<vmem>>, %arg7: memref<32x8xf32, #tpu.memory_space<vmem>>, %arg8: memref<32x1xf32, #tpu.memory_space<vmem>>, %arg9: memref<1x32x16x16xf32, #tpu.memory_space<vmem>>) attributes {dimension_semantics = [#tpu.dimension_semantics<parallel>], iteration_bounds = array<i64: 2>, scalar_prefetch = 0 : i64, scratch_operands = 0 : i64, tpu.core_type = #tpu.core_type<tc>, window_params = [{transform_indices = @transform_0, window_bounds = array<i64: 1, 32, 16, 16>}, {pipeline_mode = #tpu.pipeline_mode<synchronous>, transform_indices = @transform_1, window_bounds = array<i64: 8, 32>}, {pipeline_mode = #tpu.pipeline_mode<synchronous>, transform_indices = @transform_2, window_bounds = array<i64: 8, 1>}, {pipeline_mode = #tpu.pipeline_mode<synchronous>, transform_indices = @transform_3, window_bounds = array<i64: 8, 1>}, {pipeline_mode = #tpu.pipeline_mode<synchronous>, transform_indices = @transform_4, window_bounds = array<i64: 32, 8>}, {pipeline_mode = #tpu.pipeline_mode<synchronous>, transform_indices = @transform_5, window_bounds = array<i64: 32, 1>}, {pipeline_mode = #tpu.pipeline_mode<synchronous>, transform_indices = @transform_6, window_bounds = array<i64: 32, 8>}, {pipeline_mode = #tpu.pipeline_mode<synchronous>, transform_indices = @transform_7, window_bounds = array<i64: 32, 1>}, {transform_indices = @transform_8, window_bounds = array<i64: 1, 32, 16, 16>}]} {
    %c0 = arith.constant 0 : index
    %c0_0 = arith.constant 0 : index
    %c0_1 = arith.constant 0 : index
    %c0_2 = arith.constant 0 : index
    %0 = vector.load %arg1[%c0, %c0_0, %c0_1, %c0_2] : memref<1x32x16x16xf32, #tpu.memory_space<vmem>>, vector<1x32x16x16xf32>
    %1 = vector.shape_cast %0 : vector<1x32x16x16xf32> to vector<32x16x16xf32>
    %cst = arith.constant dense<0.000000e+00> : vector<32x16xf32>
    %2 = vector.multi_reduction <add>, %1, %cst [2] : vector<32x16x16xf32> to vector<32x16xf32>
    %cst_3 = arith.constant 1.600000e+01 : f32
    %3 = vector.broadcast %cst_3 : f32 to vector<32x16xf32>
    %4 = arith.divf %2, %3 : vector<32x16xf32>
    %cst_4 = arith.constant dense<0.000000e+00> : vector<32x16xf32>
    %5 = vector.multi_reduction <add>, %1, %cst_4 [1] : vector<32x16x16xf32> to vector<32x16xf32>
    %cst_5 = arith.constant 1.600000e+01 : f32
    %6 = vector.broadcast %cst_5 : f32 to vector<32x16xf32>
    %7 = arith.divf %5, %6 : vector<32x16xf32>
    %c0_6 = arith.constant 0 : index
    %c0_7 = arith.constant 0 : index
    %8 = vector.load %arg2[%c0_6, %c0_7] : memref<8x32xf32, #tpu.memory_space<vmem>>, vector<8x32xf32>
    %cst_8 = arith.constant dense<0.000000e+00> : vector<8x16xf32>
    %9 = tpu.matmul %8, %4, %cst_8 {dimension_numbers = #tpu.dot_dimension_numbers<[1], [0], [0], [1], [0, 0, 1, 1], [], []>, precision = #tpu.contract_precision<fp32>} : vector<8x32xf32>, vector<32x16xf32>, vector<8x16xf32> -> vector<8x16xf32>
    %c0_9 = arith.constant 0 : index
    %c0_10 = arith.constant 0 : index
    %10 = vector.load %arg3[%c0_9, %c0_10] : memref<8x1xf32, #tpu.memory_space<vmem>>, vector<8x1xf32>
    %11 = vector.broadcast %10 : vector<8x1xf32> to vector<8x16xf32>
    %12 = arith.mulf %9, %11 : vector<8x16xf32>
    %c0_11 = arith.constant 0 : index
    %c0_12 = arith.constant 0 : index
    %13 = vector.load %arg4[%c0_11, %c0_12] : memref<8x1xf32, #tpu.memory_space<vmem>>, vector<8x1xf32>
    %14 = vector.broadcast %13 : vector<8x1xf32> to vector<8x16xf32>
    %15 = arith.addf %12, %14 : vector<8x16xf32>
    %cst_13 = arith.constant 3.000000e+00 : f32
    %16 = vector.broadcast %cst_13 : f32 to vector<8x16xf32>
    %17 = arith.addf %15, %16 : vector<8x16xf32>
    %cst_14 = arith.constant 0.000000e+00 : f32
    %cst_15 = arith.constant 6.000000e+00 : f32
    %18 = vector.broadcast %cst_14 : f32 to vector<8x16xf32>
    %19 = arith.maximumf %18, %17 : vector<8x16xf32>
    %20 = vector.broadcast %cst_15 : f32 to vector<8x16xf32>
    %21 = arith.minimumf %20, %19 : vector<8x16xf32>
    %cst_16 = arith.constant 0.166666672 : f32
    %22 = vector.broadcast %cst_16 : f32 to vector<8x16xf32>
    %23 = arith.mulf %21, %22 : vector<8x16xf32>
    %24 = arith.mulf %15, %23 : vector<8x16xf32>
    %c0_17 = arith.constant 0 : index
    %c0_18 = arith.constant 0 : index
    %25 = vector.load %arg2[%c0_17, %c0_18] : memref<8x32xf32, #tpu.memory_space<vmem>>, vector<8x32xf32>
    %cst_19 = arith.constant dense<0.000000e+00> : vector<8x16xf32>
    %26 = tpu.matmul %25, %7, %cst_19 {dimension_numbers = #tpu.dot_dimension_numbers<[1], [0], [0], [1], [0, 0, 1, 1], [], []>, precision = #tpu.contract_precision<fp32>} : vector<8x32xf32>, vector<32x16xf32>, vector<8x16xf32> -> vector<8x16xf32>
    %c0_20 = arith.constant 0 : index
    %c0_21 = arith.constant 0 : index
    %27 = vector.load %arg3[%c0_20, %c0_21] : memref<8x1xf32, #tpu.memory_space<vmem>>, vector<8x1xf32>
    %28 = vector.broadcast %27 : vector<8x1xf32> to vector<8x16xf32>
    %29 = arith.mulf %26, %28 : vector<8x16xf32>
    %c0_22 = arith.constant 0 : index
    %c0_23 = arith.constant 0 : index
    %30 = vector.load %arg4[%c0_22, %c0_23] : memref<8x1xf32, #tpu.memory_space<vmem>>, vector<8x1xf32>
    %31 = vector.broadcast %30 : vector<8x1xf32> to vector<8x16xf32>
    %32 = arith.addf %29, %31 : vector<8x16xf32>
    %cst_24 = arith.constant 3.000000e+00 : f32
    %33 = vector.broadcast %cst_24 : f32 to vector<8x16xf32>
    %34 = arith.addf %32, %33 : vector<8x16xf32>
    %cst_25 = arith.constant 0.000000e+00 : f32
    %cst_26 = arith.constant 6.000000e+00 : f32
    %35 = vector.broadcast %cst_25 : f32 to vector<8x16xf32>
    %36 = arith.maximumf %35, %34 : vector<8x16xf32>
    %37 = vector.broadcast %cst_26 : f32 to vector<8x16xf32>
    %38 = arith.minimumf %37, %36 : vector<8x16xf32>
    %cst_27 = arith.constant 0.166666672 : f32
    %39 = vector.broadcast %cst_27 : f32 to vector<8x16xf32>
    %40 = arith.mulf %38, %39 : vector<8x16xf32>
    %41 = arith.mulf %32, %40 : vector<8x16xf32>
    %c0_28 = arith.constant 0 : index
    %c0_29 = arith.constant 0 : index
    %42 = vector.load %arg5[%c0_28, %c0_29] : memref<32x8xf32, #tpu.memory_space<vmem>>, vector<32x8xf32>
    %cst_30 = arith.constant dense<0.000000e+00> : vector<32x16xf32>
    %43 = tpu.matmul %42, %24, %cst_30 {dimension_numbers = #tpu.dot_dimension_numbers<[1], [0], [0], [1], [0, 0, 1, 1], [], []>, precision = #tpu.contract_precision<fp32>} : vector<32x8xf32>, vector<8x16xf32>, vector<32x16xf32> -> vector<32x16xf32>
    %c0_31 = arith.constant 0 : index
    %c0_32 = arith.constant 0 : index
    %44 = vector.load %arg6[%c0_31, %c0_32] : memref<32x1xf32, #tpu.memory_space<vmem>>, vector<32x1xf32>
    %45 = vector.broadcast %44 : vector<32x1xf32> to vector<32x16xf32>
    %46 = arith.addf %43, %45 : vector<32x16xf32>
    %cst_33 = arith.constant 0.000000e+00 : f32
    %47 = vector.broadcast %cst_33 : f32 to vector<32x16xf32>
    %48 = arith.subf %47, %46 : vector<32x16xf32>
    %49 = math.exp %48 : vector<32x16xf32>
    %cst_34 = arith.constant 1.000000e+00 : f32
    %50 = vector.broadcast %cst_34 : f32 to vector<32x16xf32>
    %51 = arith.addf %50, %49 : vector<32x16xf32>
    %cst_35 = arith.constant 1.000000e+00 : f32
    %52 = vector.broadcast %cst_35 : f32 to vector<32x16xf32>
    %53 = arith.divf %52, %51 : vector<32x16xf32>
    %c0_36 = arith.constant 0 : index
    %c0_37 = arith.constant 0 : index
    %54 = vector.load %arg7[%c0_36, %c0_37] : memref<32x8xf32, #tpu.memory_space<vmem>>, vector<32x8xf32>
    %cst_38 = arith.constant dense<0.000000e+00> : vector<32x16xf32>
    %55 = tpu.matmul %54, %41, %cst_38 {dimension_numbers = #tpu.dot_dimension_numbers<[1], [0], [0], [1], [0, 0, 1, 1], [], []>, precision = #tpu.contract_precision<fp32>} : vector<32x8xf32>, vector<8x16xf32>, vector<32x16xf32> -> vector<32x16xf32>
    %c0_39 = arith.constant 0 : index
    %c0_40 = arith.constant 0 : index
    %56 = vector.load %arg8[%c0_39, %c0_40] : memref<32x1xf32, #tpu.memory_space<vmem>>, vector<32x1xf32>
    %57 = vector.broadcast %56 : vector<32x1xf32> to vector<32x16xf32>
    %58 = arith.addf %55, %57 : vector<32x16xf32>
    %cst_41 = arith.constant 0.000000e+00 : f32
    %59 = vector.broadcast %cst_41 : f32 to vector<32x16xf32>
    %60 = arith.subf %59, %58 : vector<32x16xf32>
    %61 = math.exp %60 : vector<32x16xf32>
    %cst_42 = arith.constant 1.000000e+00 : f32
    %62 = vector.broadcast %cst_42 : f32 to vector<32x16xf32>
    %63 = arith.addf %62, %61 : vector<32x16xf32>
    %cst_43 = arith.constant 1.000000e+00 : f32
    %64 = vector.broadcast %cst_43 : f32 to vector<32x16xf32>
    %65 = arith.divf %64, %63 : vector<32x16xf32>
    %66 = vector.shape_cast %53 : vector<32x16xf32> to vector<32x16x1xf32>
    %67 = vector.shape_cast %65 : vector<32x16xf32> to vector<32x1x16xf32>
    %68 = vector.broadcast %66 : vector<32x16x1xf32> to vector<32x16x16xf32>
    %69 = vector.broadcast %67 : vector<32x1x16xf32> to vector<32x16x16xf32>
    %70 = arith.mulf %68, %69 : vector<32x16x16xf32>
    %71 = arith.mulf %1, %70 : vector<32x16x16xf32>
    %c0_44 = arith.constant 0 : index
    %c0_45 = arith.constant 0 : index
    %c0_46 = arith.constant 0 : index
    %c0_47 = arith.constant 0 : index
    %72 = vector.load %arg9[%c0_44, %c0_45, %c0_46, %c0_47] : memref<1x32x16x16xf32, #tpu.memory_space<vmem>>, vector<1x32x16x16xf32>
    %73 = vector.shape_cast %72 : vector<1x32x16x16xf32> to vector<32x16x16xf32>
    %74 = vector.shape_cast %71 : vector<32x16x16xf32> to vector<1x32x16x16xf32>
    tpu.vector_store %arg9[%c0_44, %c0_45, %c0_46, %c0_47], %74 {strides = array<i32>} : memref<1x32x16x16xf32, #tpu.memory_space<vmem>>, vector<1x32x16x16xf32>,
    return
  }
  func.func @transform_0(%arg0: i32) -> (i32, i32, i32, i32) {
    %c0_i32 = arith.constant 0 : i32
    %c0_i32_0 = arith.constant 0 : i32
    %c0_i32_1 = arith.constant 0 : i32
    %c0_i32_2 = arith.constant 0 : i32
    return %arg0, %c0_i32, %c0_i32_0, %c0_i32_1 : i32, i32, i32, i32
  }
  func.func @transform_1(%arg0: i32) -> (i32, i32) {
    %c0_i32 = arith.constant 0 : i32
    %c0_i32_0 = arith.constant 0 : i32
    %c0_i32_1 = arith.constant 0 : i32
    return %c0_i32, %c0_i32_0 : i32, i32
  }
  func.func @transform_2(%arg0: i32) -> (i32, i32) {
    %c0_i32 = arith.constant 0 : i32
    %c0_i32_0 = arith.constant 0 : i32
    %c0_i32_1 = arith.constant 0 : i32
    return %c0_i32, %c0_i32_0 : i32, i32
  }
  func.func @transform_3(%arg0: i32) -> (i32, i32) {
    %c0_i32 = arith.constant 0 : i32
    %c0_i32_0 = arith.constant 0 : i32
    %c0_i32_1 = arith.constant 0 : i32
    return %c0_i32, %c0_i32_0 : i32, i32
  }
  func.func @transform_4(%arg0: i32) -> (i32, i32) {
    %c0_i32 = arith.constant 0 : i32
    %c0_i32_0 = arith.constant 0 : i32
    %c0_i32_1 = arith.constant 0 : i32
    return %c0_i32, %c0_i32_0 : i32, i32
  }
  func.func @transform_5(%arg0: i32) -> (i32, i32) {
    %c0_i32 = arith.constant 0 : i32
    %c0_i32_0 = arith.constant 0 : i32
    %c0_i32_1 = arith.constant 0 : i32
    return %c0_i32, %c0_i32_0 : i32, i32
  }
  func.func @transform_6(%arg0: i32) -> (i32, i32) {
    %c0_i32 = arith.constant 0 : i32
    %c0_i32_0 = arith.constant 0 : i32
    %c0_i32_1 = arith.constant 0 : i32
    return %c0_i32, %c0_i32_0 : i32, i32
  }
  func.func @transform_7(%arg0: i32) -> (i32, i32) {
    %c0_i32 = arith.constant 0 : i32
    %c0_i32_0 = arith.constant 0 : i32
    %c0_i32_1 = arith.constant 0 : i32
    return %c0_i32, %c0_i32_0 : i32, i32
  }
  func.func @transform_8(%arg0: i32) -> (i32, i32, i32, i32) {
    %c0_i32 = arith.constant 0 : i32
    %c0_i32_0 = arith.constant 0 : i32
    %c0_i32_1 = arith.constant 0 : i32
    %c0_i32_2 = arith.constant 0 : i32
    return %arg0, %c0_i32, %c0_i32_0, %c0_i32_1 : i32, i32, i32, i32
  }
}

</mosaic_0001>

<llo_original>
// kernel: tpu_custom_call.1
$region0: #{tpu_custom_call.1}
  #allocation0 [shape = 'u32[]', space=smem, size = 0x4, offset = 0x4, fixed_abs, tag = 'smem constant byte address 0x4 - core index']
  #allocation1 [shape = 'u32[144,128]{1,0:T(1,128)}', space=vmem, size = 0x12000, scoped, tag = 'internal scratch']
  %s0 = inlined_call_operand.vmem [shape: f32[2,32,16,16], index: 0, kind: input, shape index: {}]
  %s1 = inlined_call_operand.vmem [shape: f32[8,32], index: 1, kind: input, shape index: {}]
  %s2 = inlined_call_operand.vmem [shape: f32[8,1], index: 2, kind: input, shape index: {}]
  %s3 = inlined_call_operand.vmem [shape: f32[8,1], index: 3, kind: input, shape index: {}]
  %s4 = inlined_call_operand.vmem [shape: f32[32,8], index: 4, kind: input, shape index: {}]
  %s5 = inlined_call_operand.vmem [shape: f32[32,1], index: 5, kind: input, shape index: {}]
  %s6 = inlined_call_operand.vmem [shape: f32[32,8], index: 6, kind: input, shape index: {}]
  %s7 = inlined_call_operand.vmem [shape: f32[32,1], index: 7, kind: input, shape index: {}]
  %s8 = inlined_call_operand.vmem [shape: f32[2,32,16,16], index: 8, kind: output, shape index: {}]
  %s9 = sld [smem:[#allocation0]]
  $region65: #{tpu_custom_call.1} parent=0
    _
  %s11 = ssub.s32 1, %s9
  %s12 = scalar_select 0, %s11, %s9
  loop: start=0, step=1, limit=4
  $region2: #{tpu_custom_call.1} parent=0 // loop_pre_header
    _
  $region3: #{tpu_custom_call.1} parent=0 // loop_header
    %s14 = sphi 0, %s18
    %p15 = scmp.ge.s32.totalorder %s14, 4
    %s24 = sphi 0, %s26
    %s27 = sphi 0, %s24
    %s28 = sphi 0, %s27
    %s44 = sphi 0, %s28
    %s48 = sphi 0, %s48
    %s50 = sphi 0, %s48
    %s51 = sphi 0, %s50
    %s65 = sphi 0, %s51
    %s69 = sphi 0, %s69
    %s71 = sphi 0, %s69
    %s72 = sphi 0, %s71
    %s86 = sphi 0, %s72
    %s90 = sphi 0, %s90
    %s92 = sphi 0, %s90
    %s93 = sphi 0, %s92
    %s107 = sphi 0, %s93
    %s111 = sphi 0, %s111
    %s113 = sphi 0, %s111
    %s114 = sphi 0, %s113
    %s128 = sphi 0, %s114
    %s132 = sphi 0, %s132
    %s134 = sphi 0, %s132
    %s135 = sphi 0, %s134
    %s149 = sphi 0, %s135
    %s153 = sphi 0, %s153
    %s155 = sphi 0, %s153
    %s156 = sphi 0, %s155
    %s170 = sphi 0, %s156
    %s174 = sphi 0, %s174
    %s176 = sphi 0, %s174
    %s177 = sphi 0, %s176
    %s191 = sphi 0, %s177
    %s197 = sphi 0, %s199
    %s200 = sphi 0, %s197
    %s201 = sphi 0, %s200
    %s217 = sphi 0, %s201
  $region4: #{tpu_custom_call.1} parent=0 // loop_header_branch
    %17 = sbr.rel (%p15) target = $region8
  $region5: #{tpu_custom_call.1} parent=0 // loop_body
    %s19 = ssub.s32 %s14, 1
    %s20 = ssub.s32 %s14, 2
    %s21 = sadd.s32 %s14, 1
    %s22 = ssub.s32 %s14, %s21
    %p23 = scmp.eq.s32.totalorder %s22, 0
    %s25 = sadd.s32 %s24, 1
    %s26 = scalar_select %p23, %s24, %s25
    %p29 = pneg %p23
    %p30 = scmp.eq.s32.totalorder %s14, 1
    %p31 = por %p29, %p30
    %p32 = scmp.ne.s32.totalorder %s24, %s27
    %p33 = scmp.eq.s32.totalorder %s14, 0
    %p34 = por %p32, %p33
    %p35 = scmp.ne.s32.totalorder %s24, %s27
    %p36 = scmp.eq.s32.totalorder %s19, 1
    %p37 = por %p35, %p36
    %p38 = scmp.ne.s32.totalorder %s27, %s28
    %p39 = scmp.eq.s32.totalorder %s19, 0
    %p40 = por %p38, %p39
    %p41 = scmp.ne.s32.totalorder %s27, %s28
    %p42 = scmp.eq.s32.totalorder %s20, 1
    %p43 = por %p41, %p42
    %p45 = scmp.ne.s32.totalorder %s28, %s44
    %p46 = scmp.eq.s32.totalorder %s20, 0
    %p47 = por %p45, %p46
    %s49 = sadd.s32 %s48, 1
    %p52 = scmp.eq.s32.totalorder %s14, 1
    %p53 = scmp.ne.s32.totalorder %s48, %s50
    %p54 = scmp.eq.s32.totalorder %s14, 0
    %p55 = por %p53, %p54
    %p56 = scmp.ne.s32.totalorder %s48, %s50
    %p57 = scmp.eq.s32.totalorder %s19, 1
    %p58 = por %p56, %p57
    %p59 = scmp.ne.s32.totalorder %s50, %s51
    %p60 = scmp.eq.s32.totalorder %s19, 0
    %p61 = por %p59, %p60
    %p62 = scmp.ne.s32.totalorder %s50, %s51
    %p63 = scmp.eq.s32.totalorder %s20, 1
    %p64 = por %p62, %p63
    %p66 = scmp.ne.s32.totalorder %s51, %s65
    %p67 = scmp.eq.s32.totalorder %s20, 0
    %p68 = por %p66, %p67
    %s70 = sadd.s32 %s69, 1
    %p73 = scmp.eq.s32.totalorder %s14, 1
    %p74 = scmp.ne.s32.totalorder %s69, %s71
    %p75 = scmp.eq.s32.totalorder %s14, 0
    %p76 = por %p74, %p75
    %p77 = scmp.ne.s32.totalorder %s69, %s71
    %p78 = scmp.eq.s32.totalorder %s19, 1
    %p79 = por %p77, %p78
    %p80 = scmp.ne.s32.totalorder %s71, %s72
    %p81 = scmp.eq.s32.totalorder %s19, 0
    %p82 = por %p80, %p81
    %p83 = scmp.ne.s32.totalorder %s71, %s72
    %p84 = scmp.eq.s32.totalorder %s20, 1
    %p85 = por %p83, %p84
    %p87 = scmp.ne.s32.totalorder %s72, %s86
    %p88 = scmp.eq.s32.totalorder %s20, 0
    %p89 = por %p87, %p88
    %s91 = sadd.s32 %s90, 1
    %p94 = scmp.eq.s32.totalorder %s14, 1
    %p95 = scmp.ne.s32.totalorder %s90, %s92
    %p96 = scmp.eq.s32.totalorder %s14, 0
    %p97 = por %p95, %p96
    %p98 = scmp.ne.s32.totalorder %s90, %s92
    %p99 = scmp.eq.s32.totalorder %s19, 1
    %p100 = por %p98, %p99
    %p101 = scmp.ne.s32.totalorder %s92, %s93
    %p102 = scmp.eq.s32.totalorder %s19, 0
    %p103 = por %p101, %p102
    %p104 = scmp.ne.s32.totalorder %s92, %s93
    %p105 = scmp.eq.s32.totalorder %s20, 1
    %p106 = por %p104, %p105
    %p108 = scmp.ne.s32.totalorder %s93, %s107
    %p109 = scmp.eq.s32.totalorder %s20, 0
    %p110 = por %p108, %p109
    %s112 = sadd.s32 %s111, 1
    %p115 = scmp.eq.s32.totalorder %s14, 1
    %p116 = scmp.ne.s32.totalorder %s111, %s113
    %p117 = scmp.eq.s32.totalorder %s14, 0
    %p118 = por %p116, %p117
    %p119 = scmp.ne.s32.totalorder %s111, %s113
    %p120 = scmp.eq.s32.totalorder %s19, 1
    %p121 = por %p119, %p120
    %p122 = scmp.ne.s32.totalorder %s113, %s114
    %p123 = scmp.eq.s32.totalorder %s19, 0
    %p124 = por %p122, %p123
    %p125 = scmp.ne.s32.totalorder %s113, %s114
    %p126 = scmp.eq.s32.totalorder %s20, 1
    %p127 = por %p125, %p126
    %p129 = scmp.ne.s32.totalorder %s114, %s128
    %p130 = scmp.eq.s32.totalorder %s20, 0
    %p131 = por %p129, %p130
    %s133 = sadd.s32 %s132, 1
    %p136 = scmp.eq.s32.totalorder %s14, 1
    %p137 = scmp.ne.s32.totalorder %s132, %s134
    %p138 = scmp.eq.s32.totalorder %s14, 0
    %p139 = por %p137, %p138
    %p140 = scmp.ne.s32.totalorder %s132, %s134
    %p141 = scmp.eq.s32.totalorder %s19, 1
    %p142 = por %p140, %p141
    %p143 = scmp.ne.s32.totalorder %s134, %s135
    %p144 = scmp.eq.s32.totalorder %s19, 0
    %p145 = por %p143, %p144
    %p146 = scmp.ne.s32.totalorder %s134, %s135
    %p147 = scmp.eq.s32.totalorder %s20, 1
    %p148 = por %p146, %p147
    %p150 = scmp.ne.s32.totalorder %s135, %s149
    %p151 = scmp.eq.s32.totalorder %s20, 0
    %p152 = por %p150, %p151
    %s154 = sadd.s32 %s153, 1
    %p157 = scmp.eq.s32.totalorder %s14, 1
    %p158 = scmp.ne.s32.totalorder %s153, %s155
    %p159 = scmp.eq.s32.totalorder %s14, 0
    %p160 = por %p158, %p159
    %p161 = scmp.ne.s32.totalorder %s153, %s155
    %p162 = scmp.eq.s32.totalorder %s19, 1
    %p163 = por %p161, %p162
    %p164 = scmp.ne.s32.totalorder %s155, %s156
    %p165 = scmp.eq.s32.totalorder %s19, 0
    %p166 = por %p164, %p165
    %p167 = scmp.ne.s32.totalorder %s155, %s156
    %p168 = scmp.eq.s32.totalorder %s20, 1
    %p169 = por %p167, %p168
    %p171 = scmp.ne.s32.totalorder %s156, %s170
    %p172 = scmp.eq.s32.totalorder %s20, 0
    %p173 = por %p171, %p172
    %s175 = sadd.s32 %s174, 1
    %p178 = scmp.eq.s32.totalorder %s14, 1
    %p179 = scmp.ne.s32.totalorder %s174, %s176
    %p180 = scmp.eq.s32.totalorder %s14, 0
    %p181 = por %p179, %p180
    %p182 = scmp.ne.s32.totalorder %s174, %s176
    %p183 = scmp.eq.s32.totalorder %s19, 1
    %p184 = por %p182, %p183
    %p185 = scmp.ne.s32.totalorder %s176, %s177
    %p186 = scmp.eq.s32.totalorder %s19, 0
    %p187 = por %p185, %p186
    %p188 = scmp.ne.s32.totalorder %s176, %s177
    %p189 = scmp.eq.s32.totalorder %s20, 1
    %p190 = por %p188, %p189
    %p192 = scmp.ne.s32.totalorder %s177, %s191
    %p193 = scmp.eq.s32.totalorder %s20, 0
    %p194 = por %p192, %p193
    %s195 = ssub.s32 %s14, %s21
    %p196 = scmp.eq.s32.totalorder %s195, 0
    %s198 = sadd.s32 %s197, 1
    %s199 = scalar_select %p196, %s197, %s198
    %p202 = pneg %p196
    %p203 = scmp.eq.s32.totalorder %s14, 1
    %p204 = por %p202, %p203
    %p205 = scmp.ne.s32.totalorder %s197, %s200
    %p206 = scmp.eq.s32.totalorder %s14, 0
    %p207 = por %p205, %p206
    %p208 = scmp.ne.s32.totalorder %s197, %s200
    %p209 = scmp.eq.s32.totalorder %s19, 1
    %p210 = por %p208, %p209
    %p211 = scmp.ne.s32.totalorder %s200, %s201
    %p212 = scmp.eq.s32.totalorder %s19, 0
    %p213 = por %p211, %p212
    %p214 = scmp.ne.s32.totalorder %s200, %s201
    %p215 = scmp.eq.s32.totalorder %s20, 1
    %p216 = por %p214, %p215
    %p218 = scmp.ne.s32.totalorder %s201, %s217
    %p219 = scmp.eq.s32.totalorder %s20, 0
    %p220 = por %p218, %p219
    %p221 = scmp.le.s32.totalorder 1, %s14
    %p222 = scmp.lt.s32.totalorder %s14, 3
    %p223 = pnand %p221, %p222
    %p224 = pneg %p223
    // Predicated region
    $region9: #{tpu_custom_call.1} parent=5 // pred_check
      _
    $region10: #{tpu_custom_call.1} parent=5 // pred_check_branch
      %226 = sbr.rel (%p223) target = $region12
    $region11: #{tpu_custom_call.1} parent=5 // pred_region
      %s227 = ssub.s32 %s14, 1
      // Predicated region
      $region13: #{tpu_custom_call.1} parent=11 // pred_check
        %p228 = pneg %p61
      $region14: #{tpu_custom_call.1} parent=11 // pred_check_branch
        %230 = sbr.rel (%p228) target = $region16
      $region15: #{tpu_custom_call.1} parent=11 // pred_region
        _
      $region16: #{tpu_custom_call.1} parent=11 // pred_fallthru
        _
      // Predicated region
      $region17: #{tpu_custom_call.1} parent=11 // pred_check
        %p231 = pneg %p82
      $region18: #{tpu_custom_call.1} parent=11 // pred_check_branch
        %233 = sbr.rel (%p231) target = $region20
      $region19: #{tpu_custom_call.1} parent=11 // pred_region
        _
      $region20: #{tpu_custom_call.1} parent=11 // pred_fallthru
        _
      // Predicated region
      $region21: #{tpu_custom_call.1} parent=11 // pred_check
        %p234 = pneg %p103
      $region22: #{tpu_custom_call.1} parent=11 // pred_check_branch
        %236 = sbr.rel (%p234) target = $region24
      $region23: #{tpu_custom_call.1} parent=11 // pred_region
        _
      $region24: #{tpu_custom_call.1} parent=11 // pred_fallthru
        _
      // Predicated region
      $region25: #{tpu_custom_call.1} parent=11 // pred_check
        %p237 = pneg %p124
      $region26: #{tpu_custom_call.1} parent=11 // pred_check_branch
        %239 = sbr.rel (%p237) target = $region28
      $region27: #{tpu_custom_call.1} parent=11 // pred_region
        _
      $region28: #{tpu_custom_call.1} parent=11 // pred_fallthru
        _
      // Predicated region
      $region29: #{tpu_custom_call.1} parent=11 // pred_check
        %p240 = pneg %p145
      $region30: #{tpu_custom_call.1} parent=11 // pred_check_branch
        %242 = sbr.rel (%p240) target = $region32
      $region31: #{tpu_custom_call.1} parent=11 // pred_region
        _
      $region32: #{tpu_custom_call.1} parent=11 // pred_fallthru
        _
      // Predicated region
      $region33: #{tpu_custom_call.1} parent=11 // pred_check
        %p243 = pneg %p166
      $region34: #{tpu_custom_call.1} parent=11 // pred_check_branch
        %245 = sbr.rel (%p243) target = $region36
      $region35: #{tpu_custom_call.1} parent=11 // pred_region
        _
      $region36: #{tpu_custom_call.1} parent=11 // pred_fallthru
        _
      // Predicated region
      $region37: #{tpu_custom_call.1} parent=11 // pred_check
        %p246 = pneg %p187
      $region38: #{tpu_custom_call.1} parent=11 // pred_check_branch
        %248 = sbr.rel (%p246) target = $region40
      $region39: #{tpu_custom_call.1} parent=11 // pred_region
        _
      $region40: #{tpu_custom_call.1} parent=11 // pred_fallthru
        _
    $region12: #{tpu_custom_call.1} parent=5 // pred_fallthru
      _
    %p249 = scmp.lt.s32.totalorder %s14, 2
    // Predicated region
    $region41: #{tpu_custom_call.1} parent=5 // pred_check
      %p250 = pneg %p249
    $region42: #{tpu_custom_call.1} parent=5 // pred_check_branch
      %252 = sbr.rel (%p250) target = $region44
    $region43: #{tpu_custom_call.1} parent=5 // pred_region
      // Predicated region
      $region45: #{tpu_custom_call.1} parent=43 // pred_check
        %p253 = pneg %p34
      $region46: #{tpu_custom_call.1} parent=43 // pred_check_branch
        %255 = sbr.rel (%p253) target = $region48
      $region47: #{tpu_custom_call.1} parent=43 // pred_region
        %p256 = scmp.lt.s32.totalorder %s14, 1
        %s257 = scalar_select %p256, %s14, 1
        %s258 = smul.addr %s257, 64
        %s259 = smul.addr %s258, 8
        %s260 = scalar_lea.vmem %s0, %s259
      $region48: #{tpu_custom_call.1} parent=43 // pred_fallthru
        _
    $region44: #{tpu_custom_call.1} parent=5 // pred_fallthru
      _
    %p261 = scmp.le.s32.totalorder 1, %s14
    %p262 = scmp.lt.s32.totalorder %s14, 3
    %p263 = pnand %p261, %p262
    %p264 = pneg %p263
    // Predicated region
    $region49: #{tpu_custom_call.1} parent=5 // pred_check
      _
    $region50: #{tpu_custom_call.1} parent=5 // pred_check_branch
      %266 = sbr.rel (%p263) target = $region52
    $region51: #{tpu_custom_call.1} parent=5 // pred_region
      %s267 = ssub.s32 %s14, 1
      %p268 = scmp.lt.s32.totalorder %s19, 1
      %s269 = scalar_select %p268, %s19, 1
      %s270 = smul.addr %s269, 64
      %s271 = smul.addr %s270, 8
      %s272 = scalar_lea.vmem %s0, %s271
      %p273 = pneg %p40
      %p274 = pneg %p37
      %p275 = pneg %p61
      %p276 = pneg %p58
      %p277 = pneg %p82
      %p278 = pneg %p79
      %p279 = pneg %p103
      %p280 = pneg %p100
      %p281 = pneg %p124
      %p282 = pneg %p121
      %p283 = pneg %p145
      %p284 = pneg %p142
      %p285 = pneg %p166
      %p286 = pneg %p163
      %p287 = pneg %p187
      %p288 = pneg %p184
      %p289 = pneg %p213
      %p290 = pneg %p210
      %p291 = scmp.lt.s32.totalorder %s19, 1
      %s292 = scalar_select %p291, %s19, 1
      %s293 = smul.addr %s292, 64
      %s294 = smul.addr %s293, 8
      %s295 = scalar_lea.vmem %s8, %s294
      %p296 = scmp.lt.s32.totalorder %s19, 1
      %s297 = scalar_select %p296, %s19, 1
      %s298 = smul.addr %s297, 64
      %s299 = smul.addr %s298, 8
      %s300 = scalar_lea.vmem %s0, %s299
      %p301 = scmp.lt.s32.totalorder %s19, 1
      %s302 = scalar_select %p301, %s19, 1
      %s303 = smul.addr %s302, 64
      %s304 = smul.addr %s303, 8
      %s305 = scalar_lea.vmem %s8, %s304
      %v306 = vld [vmem:[%s300] sm:$0xff]
      %v307 = vld [vmem:[%s300 + $0x8] sm:$0xff]
      %v308 = vld [vmem:[%s300 + $0x10] sm:$0xff]
      %v309 = vld [vmem:[%s300 + $0x18] sm:$0xff]
      %v310 = vld [vmem:[%s300 + $0x20] sm:$0xff]
      %v311 = vld [vmem:[%s300 + $0x28] sm:$0xff]
      %v312 = vld [vmem:[%s300 + $0x30] sm:$0xff]
      %v313 = vld [vmem:[%s300 + $0x38] sm:$0xff]
      %v314 = vld [vmem:[%s300 + $0x40] sm:$0xff]
      %v315 = vld [vmem:[%s300 + $0x48] sm:$0xff]
      %v316 = vld [vmem:[%s300 + $0x50] sm:$0xff]
      %v317 = vld [vmem:[%s300 + $0x58] sm:$0xff]
      %v318 = vld [vmem:[%s300 + $0x60] sm:$0xff]
      %v319 = vld [vmem:[%s300 + $0x68] sm:$0xff]
      %v320 = vld [vmem:[%s300 + $0x70] sm:$0xff]
      %v321 = vld [vmem:[%s300 + $0x78] sm:$0xff]
      %v322 = vld [vmem:[%s300 + $0x80] sm:$0xff]
      %v323 = vld [vmem:[%s300 + $0x88] sm:$0xff]
      %v324 = vld [vmem:[%s300 + $0x90] sm:$0xff]
      %v325 = vld [vmem:[%s300 + $0x98] sm:$0xff]
      %v326 = vld [vmem:[%s300 + $0xa0] sm:$0xff]
      %v327 = vld [vmem:[%s300 + $0xa8] sm:$0xff]
      %v328 = vld [vmem:[%s300 + $0xb0] sm:$0xff]
      %v329 = vld [vmem:[%s300 + $0xb8] sm:$0xff]
      %v330 = vld [vmem:[%s300 + $0xc0] sm:$0xff]
      %v331 = vld [vmem:[%s300 + $0xc8] sm:$0xff]
      %v332 = vld [vmem:[%s300 + $0xd0] sm:$0xff]
      %v333 = vld [vmem:[%s300 + $0xd8] sm:$0xff]
      %v334 = vld [vmem:[%s300 + $0xe0] sm:$0xff]
      %v335 = vld [vmem:[%s300 + $0xe8] sm:$0xff]
      %v336 = vld [vmem:[%s300 + $0xf0] sm:$0xff]
      %v337 = vld [vmem:[%s300 + $0xf8] sm:$0xff]
      %v338 = vld [vmem:[%s300 + $0x100] sm:$0xff]
      %v339 = vld [vmem:[%s300 + $0x108] sm:$0xff]
      %v340 = vld [vmem:[%s300 + $0x110] sm:$0xff]
      %v341 = vld [vmem:[%s300 + $0x118] sm:$0xff]
      %v342 = vld [vmem:[%s300 + $0x120] sm:$0xff]
      %v343 = vld [vmem:[%s300 + $0x128] sm:$0xff]
      %v344 = vld [vmem:[%s300 + $0x130] sm:$0xff]
      %v345 = vld [vmem:[%s300 + $0x138] sm:$0xff]
      %v346 = vld [vmem:[%s300 + $0x140] sm:$0xff]
      %v347 = vld [vmem:[%s300 + $0x148] sm:$0xff]
      %v348 = vld [vmem:[%s300 + $0x150] sm:$0xff]
      %v349 = vld [vmem:[%s300 + $0x158] sm:$0xff]
      %v350 = vld [vmem:[%s300 + $0x160] sm:$0xff]
      %v351 = vld [vmem:[%s300 + $0x168] sm:$0xff]
      %v352 = vld [vmem:[%s300 + $0x170] sm:$0xff]
      %v353 = vld [vmem:[%s300 + $0x178] sm:$0xff]
      %v354 = vld [vmem:[%s300 + $0x180] sm:$0xff]
      %v355 = vld [vmem:[%s300 + $0x188] sm:$0xff]
      %v356 = vld [vmem:[%s300 + $0x190] sm:$0xff]
      %v357 = vld [vmem:[%s300 + $0x198] sm:$0xff]
      %v358 = vld [vmem:[%s300 + $0x1a0] sm:$0xff]
      %v359 = vld [vmem:[%s300 + $0x1a8] sm:$0xff]
      %v360 = vld [vmem:[%s300 + $0x1b0] sm:$0xff]
      %v361 = vld [vmem:[%s300 + $0x1b8] sm:$0xff]
      %v362 = vld [vmem:[%s300 + $0x1c0] sm:$0xff]
      %v363 = vld [vmem:[%s300 + $0x1c8] sm:$0xff]
      %v364 = vld [vmem:[%s300 + $0x1d0] sm:$0xff]
      %v365 = vld [vmem:[%s300 + $0x1d8] sm:$0xff]
      %v366 = vld [vmem:[%s300 + $0x1e0] sm:$0xff]
      %v367 = vld [vmem:[%s300 + $0x1e8] sm:$0xff]
      %v368 = vld [vmem:[%s300 + $0x1f0] sm:$0xff]
      %v369 = vld [vmem:[%s300 + $0x1f8] sm:$0xff]
      %vm370 = vcmask 130048
      %v371 = vsel %vm370, %v306, 0.0
      %372 = vadd.xlane.f32.xlu0 %v371
      %v373 = vpop.xlane.xlu0 %372
      %v374 = vsel %vm370, %v307, 0.0
      %375 = vadd.xlane.f32.xlu0 %v374
      %v376 = vpop.xlane.xlu0 %375
      %v377 = vsel %vm370, %v308, 0.0
      %378 = vadd.xlane.f32.xlu0 %v377
      %v379 = vpop.xlane.xlu0 %378
      %v380 = vsel %vm370, %v309, 0.0
      %381 = vadd.xlane.f32.xlu0 %v380
      %v382 = vpop.xlane.xlu0 %381
      %v383 = vsel %vm370, %v310, 0.0
      %384 = vadd.xlane.f32.xlu0 %v383
      %v385 = vpop.xlane.xlu0 %384
      %v386 = vsel %vm370, %v311, 0.0
      %387 = vadd.xlane.f32.xlu0 %v386
      %v388 = vpop.xlane.xlu0 %387
      %v389 = vsel %vm370, %v312, 0.0
      %390 = vadd.xlane.f32.xlu0 %v389
      %v391 = vpop.xlane.xlu0 %390
      %v392 = vsel %vm370, %v313, 0.0
      %393 = vadd.xlane.f32.xlu0 %v392
      %v394 = vpop.xlane.xlu0 %393
      %v395 = vsel %vm370, %v314, 0.0
      %396 = vadd.xlane.f32.xlu0 %v395
      %v397 = vpop.xlane.xlu0 %396
      %v398 = vsel %vm370, %v315, 0.0
      %399 = vadd.xlane.f32.xlu0 %v398
      %v400 = vpop.xlane.xlu0 %399
      %v401 = vsel %vm370, %v316, 0.0
      %402 = vadd.xlane.f32.xlu0 %v401
      %v403 = vpop.xlane.xlu0 %402
      %v404 = vsel %vm370, %v317, 0.0
      %405 = vadd.xlane.f32.xlu0 %v404
      %v406 = vpop.xlane.xlu0 %405
      %v407 = vsel %vm370, %v318, 0.0
      %408 = vadd.xlane.f32.xlu0 %v407
      %v409 = vpop.xlane.xlu0 %408
      %v410 = vsel %vm370, %v319, 0.0
      %411 = vadd.xlane.f32.xlu0 %v410
      %v412 = vpop.xlane.xlu0 %411
      %v413 = vsel %vm370, %v320, 0.0
      %414 = vadd.xlane.f32.xlu0 %v413
      %v415 = vpop.xlane.xlu0 %414
      %v416 = vsel %vm370, %v321, 0.0
      %417 = vadd.xlane.f32.xlu0 %v416
      %v418 = vpop.xlane.xlu0 %417
      %v419 = vsel %vm370, %v322, 0.0
      %420 = vadd.xlane.f32.xlu0 %v419
      %v421 = vpop.xlane.xlu0 %420
      %v422 = vsel %vm370, %v323, 0.0
      %423 = vadd.xlane.f32.xlu0 %v422
      %v424 = vpop.xlane.xlu0 %423
      %v425 = vsel %vm370, %v324, 0.0
      %426 = vadd.xlane.f32.xlu0 %v425
      %v427 = vpop.xlane.xlu0 %426
      %v428 = vsel %vm370, %v325, 0.0
      %429 = vadd.xlane.f32.xlu0 %v428
      %v430 = vpop.xlane.xlu0 %429
      %v431 = vsel %vm370, %v326, 0.0
      %432 = vadd.xlane.f32.xlu0 %v431
      %v433 = vpop.xlane.xlu0 %432
      %v434 = vsel %vm370, %v327, 0.0
      %435 = vadd.xlane.f32.xlu0 %v434
      %v436 = vpop.xlane.xlu0 %435
      %v437 = vsel %vm370, %v328, 0.0
      %438 = vadd.xlane.f32.xlu0 %v437
      %v439 = vpop.xlane.xlu0 %438
      %v440 = vsel %vm370, %v329, 0.0
      %441 = vadd.xlane.f32.xlu0 %v440
      %v442 = vpop.xlane.xlu0 %441
      %v443 = vsel %vm370, %v330, 0.0
      %444 = vadd.xlane.f32.xlu0 %v443
      %v445 = vpop.xlane.xlu0 %444
      %v446 = vsel %vm370, %v331, 0.0
      %447 = vadd.xlane.f32.xlu0 %v446
      %v448 = vpop.xlane.xlu0 %447
      %v449 = vsel %vm370, %v332, 0.0
      %450 = vadd.xlane.f32.xlu0 %v449
      %v451 = vpop.xlane.xlu0 %450
      %v452 = vsel %vm370, %v333, 0.0
      %453 = vadd.xlane.f32.xlu0 %v452
      %v454 = vpop.xlane.xlu0 %453
      %v455 = vsel %vm370, %v334, 0.0
      %456 = vadd.xlane.f32.xlu0 %v455
      %v457 = vpop.xlane.xlu0 %456
      %v458 = vsel %vm370, %v335, 0.0
      %459 = vadd.xlane.f32.xlu0 %v458
      %v460 = vpop.xlane.xlu0 %459
      %v461 = vsel %vm370, %v336, 0.0
      %462 = vadd.xlane.f32.xlu0 %v461
      %v463 = vpop.xlane.xlu0 %462
      %v464 = vsel %vm370, %v337, 0.0
      %465 = vadd.xlane.f32.xlu0 %v464
      %v466 = vpop.xlane.xlu0 %465
      %v467 = vsel %vm370, %v338, 0.0
      %468 = vadd.xlane.f32.xlu0 %v467
      %v469 = vpop.xlane.xlu0 %468
      %v470 = vsel %vm370, %v339, 0.0
      %471 = vadd.xlane.f32.xlu0 %v470
      %v472 = vpop.xlane.xlu0 %471
      %v473 = vsel %vm370, %v340, 0.0
      %474 = vadd.xlane.f32.xlu0 %v473
      %v475 = vpop.xlane.xlu0 %474
      %v476 = vsel %vm370, %v341, 0.0
      %477 = vadd.xlane.f32.xlu0 %v476
      %v478 = vpop.xlane.xlu0 %477
      %v479 = vsel %vm370, %v342, 0.0
      %480 = vadd.xlane.f32.xlu0 %v479
      %v481 = vpop.xlane.xlu0 %480
      %v482 = vsel %vm370, %v343, 0.0
      %483 = vadd.xlane.f32.xlu0 %v482
      %v484 = vpop.xlane.xlu0 %483
      %v485 = vsel %vm370, %v344, 0.0
      %486 = vadd.xlane.f32.xlu0 %v485
      %v487 = vpop.xlane.xlu0 %486
      %v488 = vsel %vm370, %v345, 0.0
      %489 = vadd.xlane.f32.xlu0 %v488
      %v490 = vpop.xlane.xlu0 %489
      %v491 = vsel %vm370, %v346, 0.0
      %492 = vadd.xlane.f32.xlu0 %v491
      %v493 = vpop.xlane.xlu0 %492
      %v494 = vsel %vm370, %v347, 0.0
      %495 = vadd.xlane.f32.xlu0 %v494
      %v496 = vpop.xlane.xlu0 %495
      %v497 = vsel %vm370, %v348, 0.0
      %498 = vadd.xlane.f32.xlu0 %v497
      %v499 = vpop.xlane.xlu0 %498
      %v500 = vsel %vm370, %v349, 0.0
      %501 = vadd.xlane.f32.xlu0 %v500
      %v502 = vpop.xlane.xlu0 %501
      %v503 = vsel %vm370, %v350, 0.0
      %504 = vadd.xlane.f32.xlu0 %v503
      %v505 = vpop.xlane.xlu0 %504
      %v506 = vsel %vm370, %v351, 0.0
      %507 = vadd.xlane.f32.xlu0 %v506
      %v508 = vpop.xlane.xlu0 %507
      %v509 = vsel %vm370, %v352, 0.0
      %510 = vadd.xlane.f32.xlu0 %v509
      %v511 = vpop.xlane.xlu0 %510
      %v512 = vsel %vm370, %v353, 0.0
      %513 = vadd.xlane.f32.xlu0 %v512
      %v514 = vpop.xlane.xlu0 %513
      %v515 = vsel %vm370, %v354, 0.0
      %516 = vadd.xlane.f32.xlu0 %v515
      %v517 = vpop.xlane.xlu0 %516
      %v518 = vsel %vm370, %v355, 0.0
      %519 = vadd.xlane.f32.xlu0 %v518
      %v520 = vpop.xlane.xlu0 %519
      %v521 = vsel %vm370, %v356, 0.0
      %522 = vadd.xlane.f32.xlu0 %v521
      %v523 = vpop.xlane.xlu0 %522
      %v524 = vsel %vm370, %v357, 0.0
      %525 = vadd.xlane.f32.xlu0 %v524
      %v526 = vpop.xlane.xlu0 %525
      %v527 = vsel %vm370, %v358, 0.0
      %528 = vadd.xlane.f32.xlu0 %v527
      %v529 = vpop.xlane.xlu0 %528
      %v530 = vsel %vm370, %v359, 0.0
      %531 = vadd.xlane.f32.xlu0 %v530
      %v532 = vpop.xlane.xlu0 %531
      %v533 = vsel %vm370, %v360, 0.0
      %534 = vadd.xlane.f32.xlu0 %v533
      %v535 = vpop.xlane.xlu0 %534
      %v536 = vsel %vm370, %v361, 0.0
      %537 = vadd.xlane.f32.xlu0 %v536
      %v538 = vpop.xlane.xlu0 %537
      %v539 = vsel %vm370, %v362, 0.0
      %540 = vadd.xlane.f32.xlu0 %v539
      %v541 = vpop.xlane.xlu0 %540
      %v542 = vsel %vm370, %v363, 0.0
      %543 = vadd.xlane.f32.xlu0 %v542
      %v544 = vpop.xlane.xlu0 %543
      %v545 = vsel %vm370, %v364, 0.0
      %546 = vadd.xlane.f32.xlu0 %v545
      %v547 = vpop.xlane.xlu0 %546
      %v548 = vsel %vm370, %v365, 0.0
      %549 = vadd.xlane.f32.xlu0 %v548
      %v550 = vpop.xlane.xlu0 %549
      %v551 = vsel %vm370, %v366, 0.0
      %552 = vadd.xlane.f32.xlu0 %v551
      %v553 = vpop.xlane.xlu0 %552
      %v554 = vsel %vm370, %v367, 0.0
      %555 = vadd.xlane.f32.xlu0 %v554
      %v556 = vpop.xlane.xlu0 %555
      %v557 = vsel %vm370, %v368, 0.0
      %558 = vadd.xlane.f32.xlu0 %v557
      %v559 = vpop.xlane.xlu0 %558
      %v560 = vsel %vm370, %v369, 0.0
      %561 = vadd.xlane.f32.xlu0 %v560
      %v562 = vpop.xlane.xlu0 %561
      %v563 = vrcp.pop 16.0
      %v564 = vmul.f32 %v373, %v563
      %v565 = vmul.f32 %v376, %v563
      %v566 = vmul.f32 %v379, %v563
      %v567 = vmul.f32 %v382, %v563
      %v568 = vmul.f32 %v385, %v563
      %v569 = vmul.f32 %v388, %v563
      %v570 = vmul.f32 %v391, %v563
      %v571 = vmul.f32 %v394, %v563
      %v572 = vmul.f32 %v397, %v563
      %v573 = vmul.f32 %v400, %v563
      %v574 = vmul.f32 %v403, %v563
      %v575 = vmul.f32 %v406, %v563
      %v576 = vmul.f32 %v409, %v563
      %v577 = vmul.f32 %v412, %v563
      %v578 = vmul.f32 %v415, %v563
      %v579 = vmul.f32 %v418, %v563
      %v580 = vmul.f32 %v421, %v563
      %v581 = vmul.f32 %v424, %v563
      %v582 = vmul.f32 %v427, %v563
      %v583 = vmul.f32 %v430, %v563
      %v584 = vmul.f32 %v433, %v563
      %v585 = vmul.f32 %v436, %v563
      %v586 = vmul.f32 %v439, %v563
      %v587 = vmul.f32 %v442, %v563
      %v588 = vmul.f32 %v445, %v563
      %v589 = vmul.f32 %v448, %v563
      %v590 = vmul.f32 %v451, %v563
      %v591 = vmul.f32 %v454, %v563
      %v592 = vmul.f32 %v457, %v563
      %v593 = vmul.f32 %v460, %v563
      %v594 = vmul.f32 %v463, %v563
      %v595 = vmul.f32 %v466, %v563
      %v596 = vmul.f32 %v469, %v563
      %v597 = vmul.f32 %v472, %v563
      %v598 = vmul.f32 %v475, %v563
      %v599 = vmul.f32 %v478, %v563
      %v600 = vmul.f32 %v481, %v563
      %v601 = vmul.f32 %v484, %v563
      %v602 = vmul.f32 %v487, %v563
      %v603 = vmul.f32 %v490, %v563
      %v604 = vmul.f32 %v493, %v563
      %v605 = vmul.f32 %v496, %v563
      %v606 = vmul.f32 %v499, %v563
      %v607 = vmul.f32 %v502, %v563
      %v608 = vmul.f32 %v505, %v563
      %v609 = vmul.f32 %v508, %v563
      %v610 = vmul.f32 %v511, %v563
      %v611 = vmul.f32 %v514, %v563
      %v612 = vmul.f32 %v517, %v563
      %v613 = vmul.f32 %v520, %v563
      %v614 = vmul.f32 %v523, %v563
      %v615 = vmul.f32 %v526, %v563
      %v616 = vmul.f32 %v529, %v563
      %v617 = vmul.f32 %v532, %v563
      %v618 = vmul.f32 %v535, %v563
      %v619 = vmul.f32 %v538, %v563
      %v620 = vmul.f32 %v541, %v563
      %v621 = vmul.f32 %v544, %v563
      %v622 = vmul.f32 %v547, %v563
      %v623 = vmul.f32 %v550, %v563
      %v624 = vmul.f32 %v553, %v563
      %v625 = vmul.f32 %v556, %v563
      %v626 = vmul.f32 %v559, %v563
      %v627 = vmul.f32 %v562, %v563
      %v628 = vadd.f32 %v371, %v374
      %v629 = vrot.slane %v628, 4
      %v630 = vadd.f32 %v628, %v629
      %v631 = vrot.slane %v630, 2
      %v632 = vadd.f32 %v630, %v631
      %v633 = vrot.slane %v632, 1
      %v634 = vadd.f32 %v632, %v633
      %v635 = vadd.f32 %v377, %v380
      %v636 = vrot.slane %v635, 4
      %v637 = vadd.f32 %v635, %v636
      %v638 = vrot.slane %v637, 2
      %v639 = vadd.f32 %v637, %v638
      %v640 = vrot.slane %v639, 1
      %v641 = vadd.f32 %v639, %v640
      %v642 = vadd.f32 %v383, %v386
      %v643 = vrot.slane %v642, 4
      %v644 = vadd.f32 %v642, %v643
      %v645 = vrot.slane %v644, 2
      %v646 = vadd.f32 %v644, %v645
      %v647 = vrot.slane %v646, 1
      %v648 = vadd.f32 %v646, %v647
      %v649 = vadd.f32 %v389, %v392
      %v650 = vrot.slane %v649, 4
      %v651 = vadd.f32 %v649, %v650
      %v652 = vrot.slane %v651, 2
      %v653 = vadd.f32 %v651, %v652
      %v654 = vrot.slane %v653, 1
      %v655 = vadd.f32 %v653, %v654
      %v656 = vadd.f32 %v395, %v398
      %v657 = vrot.slane %v656, 4
      %v658 = vadd.f32 %v656, %v657
      %v659 = vrot.slane %v658, 2
      %v660 = vadd.f32 %v658, %v659
      %v661 = vrot.slane %v660, 1
      %v662 = vadd.f32 %v660, %v661
      %v663 = vadd.f32 %v401, %v404
      %v664 = vrot.slane %v663, 4
      %v665 = vadd.f32 %v663, %v664
      %v666 = vrot.slane %v665, 2
      %v667 = vadd.f32 %v665, %v666
      %v668 = vrot.slane %v667, 1
      %v669 = vadd.f32 %v667, %v668
      %v670 = vadd.f32 %v407, %v410
      %v671 = vrot.slane %v670, 4
      %v672 = vadd.f32 %v670, %v671
      %v673 = vrot.slane %v672, 2
      %v674 = vadd.f32 %v672, %v673
      %v675 = vrot.slane %v674, 1
      %v676 = vadd.f32 %v674, %v675
      %v677 = vadd.f32 %v413, %v416
      %v678 = vrot.slane %v677, 4
      %v679 = vadd.f32 %v677, %v678
      %v680 = vrot.slane %v679, 2
      %v681 = vadd.f32 %v679, %v680
      %v682 = vrot.slane %v681, 1
      %v683 = vadd.f32 %v681, %v682
      %v684 = vadd.f32 %v419, %v422
      %v685 = vrot.slane %v684, 4
      %v686 = vadd.f32 %v684, %v685
      %v687 = vrot.slane %v686, 2
      %v688 = vadd.f32 %v686, %v687
      %v689 = vrot.slane %v688, 1
      %v690 = vadd.f32 %v688, %v689
      %v691 = vadd.f32 %v425, %v428
      %v692 = vrot.slane %v691, 4
      %v693 = vadd.f32 %v691, %v692
      %v694 = vrot.slane %v693, 2
      %v695 = vadd.f32 %v693, %v694
      %v696 = vrot.slane %v695, 1
      %v697 = vadd.f32 %v695, %v696
      %v698 = vadd.f32 %v431, %v434
      %v699 = vrot.slane %v698, 4
      %v700 = vadd.f32 %v698, %v699
      %v701 = vrot.slane %v700, 2
      %v702 = vadd.f32 %v700, %v701
      %v703 = vrot.slane %v702, 1
      %v704 = vadd.f32 %v702, %v703
      %v705 = vadd.f32 %v437, %v440
      %v706 = vrot.slane %v705, 4
      %v707 = vadd.f32 %v705, %v706
      %v708 = vrot.slane %v707, 2
      %v709 = vadd.f32 %v707, %v708
      %v710 = vrot.slane %v709, 1
      %v711 = vadd.f32 %v709, %v710
      %v712 = vadd.f32 %v443, %v446
      %v713 = vrot.slane %v712, 4
      %v714 = vadd.f32 %v712, %v713
      %v715 = vrot.slane %v714, 2
      %v716 = vadd.f32 %v714, %v715
      %v717 = vrot.slane %v716, 1
      %v718 = vadd.f32 %v716, %v717
      %v719 = vadd.f32 %v449, %v452
      %v720 = vrot.slane %v719, 4
      %v721 = vadd.f32 %v719, %v720
      %v722 = vrot.slane %v721, 2
      %v723 = vadd.f32 %v721, %v722
      %v724 = vrot.slane %v723, 1
      %v725 = vadd.f32 %v723, %v724
      %v726 = vadd.f32 %v455, %v458
      %v727 = vrot.slane %v726, 4
      %v728 = vadd.f32 %v726, %v727
      %v729 = vrot.slane %v728, 2
      %v730 = vadd.f32 %v728, %v729
      %v731 = vrot.slane %v730, 1
      %v732 = vadd.f32 %v730, %v731
      %v733 = vadd.f32 %v461, %v464
      %v734 = vrot.slane %v733, 4
      %v735 = vadd.f32 %v733, %v734
      %v736 = vrot.slane %v735, 2
      %v737 = vadd.f32 %v735, %v736
      %v738 = vrot.slane %v737, 1
      %v739 = vadd.f32 %v737, %v738
      %v740 = vadd.f32 %v467, %v470
      %v741 = vrot.slane %v740, 4
      %v742 = vadd.f32 %v740, %v741
      %v743 = vrot.slane %v742, 2
      %v744 = vadd.f32 %v742, %v743
      %v745 = vrot.slane %v744, 1
      %v746 = vadd.f32 %v744, %v745
      %v747 = vadd.f32 %v473, %v476
      %v748 = vrot.slane %v747, 4
      %v749 = vadd.f32 %v747, %v748
      %v750 = vrot.slane %v749, 2
      %v751 = vadd.f32 %v749, %v750
      %v752 = vrot.slane %v751, 1
      %v753 = vadd.f32 %v751, %v752
      %v754 = vadd.f32 %v479, %v482
      %v755 = vrot.slane %v754, 4
      %v756 = vadd.f32 %v754, %v755
      %v757 = vrot.slane %v756, 2
      %v758 = vadd.f32 %v756, %v757
      %v759 = vrot.slane %v758, 1
      %v760 = vadd.f32 %v758, %v759
      %v761 = vadd.f32 %v485, %v488
      %v762 = vrot.slane %v761, 4
      %v763 = vadd.f32 %v761, %v762
      %v764 = vrot.slane %v763, 2
      %v765 = vadd.f32 %v763, %v764
      %v766 = vrot.slane %v765, 1
      %v767 = vadd.f32 %v765, %v766
      %v768 = vadd.f32 %v491, %v494
      %v769 = vrot.slane %v768, 4
      %v770 = vadd.f32 %v768, %v769
      %v771 = vrot.slane %v770, 2
      %v772 = vadd.f32 %v770, %v771
      %v773 = vrot.slane %v772, 1
      %v774 = vadd.f32 %v772, %v773
      %v775 = vadd.f32 %v497, %v500
      %v776 = vrot.slane %v775, 4
      %v777 = vadd.f32 %v775, %v776
      %v778 = vrot.slane %v777, 2
      %v779 = vadd.f32 %v777, %v778
      %v780 = vrot.slane %v779, 1
      %v781 = vadd.f32 %v779, %v780
      %v782 = vadd.f32 %v503, %v506
      %v783 = vrot.slane %v782, 4
      %v784 = vadd.f32 %v782, %v783
      %v785 = vrot.slane %v784, 2
      %v786 = vadd.f32 %v784, %v785
      %v787 = vrot.slane %v786, 1
      %v788 = vadd.f32 %v786, %v787
      %v789 = vadd.f32 %v509, %v512
      %v790 = vrot.slane %v789, 4
      %v791 = vadd.f32 %v789, %v790
      %v792 = vrot.slane %v791, 2
      %v793 = vadd.f32 %v791, %v792
      %v794 = vrot.slane %v793, 1
      %v795 = vadd.f32 %v793, %v794
      %v796 = vadd.f32 %v515, %v518
      %v797 = vrot.slane %v796, 4
      %v798 = vadd.f32 %v796, %v797
      %v799 = vrot.slane %v798, 2
      %v800 = vadd.f32 %v798, %v799
      %v801 = vrot.slane %v800, 1
      %v802 = vadd.f32 %v800, %v801
      %v803 = vadd.f32 %v521, %v524
      %v804 = vrot.slane %v803, 4
      %v805 = vadd.f32 %v803, %v804
      %v806 = vrot.slane %v805, 2
      %v807 = vadd.f32 %v805, %v806
      %v808 = vrot.slane %v807, 1
      %v809 = vadd.f32 %v807, %v808
      %v810 = vadd.f32 %v527, %v530
      %v811 = vrot.slane %v810, 4
      %v812 = vadd.f32 %v810, %v811
      %v813 = vrot.slane %v812, 2
      %v814 = vadd.f32 %v812, %v813
      %v815 = vrot.slane %v814, 1
      %v816 = vadd.f32 %v814, %v815
      %v817 = vadd.f32 %v533, %v536
      %v818 = vrot.slane %v817, 4
      %v819 = vadd.f32 %v817, %v818
      %v820 = vrot.slane %v819, 2
      %v821 = vadd.f32 %v819, %v820
      %v822 = vrot.slane %v821, 1
      %v823 = vadd.f32 %v821, %v822
      %v824 = vadd.f32 %v539, %v542
      %v825 = vrot.slane %v824, 4
      %v826 = vadd.f32 %v824, %v825
      %v827 = vrot.slane %v826, 2
      %v828 = vadd.f32 %v826, %v827
      %v829 = vrot.slane %v828, 1
      %v830 = vadd.f32 %v828, %v829
      %v831 = vadd.f32 %v545, %v548
      %v832 = vrot.slane %v831, 4
      %v833 = vadd.f32 %v831, %v832
      %v834 = vrot.slane %v833, 2
      %v835 = vadd.f32 %v833, %v834
      %v836 = vrot.slane %v835, 1
      %v837 = vadd.f32 %v835, %v836
      %v838 = vadd.f32 %v551, %v554
      %v839 = vrot.slane %v838, 4
      %v840 = vadd.f32 %v838, %v839
      %v841 = vrot.slane %v840, 2
      %v842 = vadd.f32 %v840, %v841
      %v843 = vrot.slane %v842, 1
      %v844 = vadd.f32 %v842, %v843
      %v845 = vadd.f32 %v557, %v560
      %v846 = vrot.slane %v845, 4
      %v847 = vadd.f32 %v845, %v846
      %v848 = vrot.slane %v847, 2
      %v849 = vadd.f32 %v847, %v848
      %v850 = vrot.slane %v849, 1
      %v851 = vadd.f32 %v849, %v850
      %v852 = vmul.f32 %v634, %v563
      %v853 = vmul.f32 %v641, %v563
      %v854 = vmul.f32 %v648, %v563
      %v855 = vmul.f32 %v655, %v563
      %v856 = vmul.f32 %v662, %v563
      %v857 = vmul.f32 %v669, %v563
      %v858 = vmul.f32 %v676, %v563
      %v859 = vmul.f32 %v683, %v563
      %v860 = vmul.f32 %v690, %v563
      %v861 = vmul.f32 %v697, %v563
      %v862 = vmul.f32 %v704, %v563
      %v863 = vmul.f32 %v711, %v563
      %v864 = vmul.f32 %v718, %v563
      %v865 = vmul.f32 %v725, %v563
      %v866 = vmul.f32 %v732, %v563
      %v867 = vmul.f32 %v739, %v563
      %v868 = vmul.f32 %v746, %v563
      %v869 = vmul.f32 %v753, %v563
      %v870 = vmul.f32 %v760, %v563
      %v871 = vmul.f32 %v767, %v563
      %v872 = vmul.f32 %v774, %v563
      %v873 = vmul.f32 %v781, %v563
      %v874 = vmul.f32 %v788, %v563
      %v875 = vmul.f32 %v795, %v563
      %v876 = vmul.f32 %v802, %v563
      %v877 = vmul.f32 %v809, %v563
      %v878 = vmul.f32 %v816, %v563
      %v879 = vmul.f32 %v823, %v563
      %v880 = vmul.f32 %v830, %v563
      %v881 = vmul.f32 %v837, %v563
      %v882 = vmul.f32 %v844, %v563
      %v883 = vmul.f32 %v851, %v563
      %v884 = vld [vmem:[%s1] sm:$0xff]
      %v949 = vlaneseq
      %v950 = vand.u32 %v949, 127
      %v951 = vlaneseq
      %v952 = vshrl.u32 %v951, 7
      %v953 = vsub.s32 %v950, %v952
      %v954 = vrot.slane %v564, %v953
      %v955 = vadd.s32 %v950, 4294967288
      %v956 = vlaneseq
      %v957 = vshrl.u32 %v956, 7
      %v958 = vsub.s32 %v955, %v957
      %v959 = vrot.slane %v565, %v958
      %vm960 = vcmask 130112
      %v961 = vsel %vm960, %v959, %v954
      %v962 = vlaneseq
      %v963 = vshrl.u32 %v962, 7
      %v964 = vsub.s32 %v950, %v963
      %v965 = vrot.slane %v566, %v964
      %v966 = vlaneseq
      %v967 = vshrl.u32 %v966, 7
      %v968 = vsub.s32 %v955, %v967
      %v969 = vrot.slane %v567, %v968
      %v970 = vsel %vm960, %v969, %v965
      %v971 = vlaneseq
      %v972 = vshrl.u32 %v971, 7
      %v973 = vsub.s32 %v950, %v972
      %v974 = vrot.slane %v568, %v973
      %v975 = vlaneseq
      %v976 = vshrl.u32 %v975, 7
      %v977 = vsub.s32 %v955, %v976
      %v978 = vrot.slane %v569, %v977
      %v979 = vsel %vm960, %v978, %v974
      %v980 = vlaneseq
      %v981 = vshrl.u32 %v980, 7
      %v982 = vsub.s32 %v950, %v981
      %v983 = vrot.slane %v570, %v982
      %v984 = vlaneseq
      %v985 = vshrl.u32 %v984, 7
      %v986 = vsub.s32 %v955, %v985
      %v987 = vrot.slane %v571, %v986
      %v988 = vsel %vm960, %v987, %v983
      %v989 = vlaneseq
      %v990 = vshrl.u32 %v989, 7
      %v991 = vsub.s32 %v950, %v990
      %v992 = vrot.slane %v572, %v991
      %v993 = vlaneseq
      %v994 = vshrl.u32 %v993, 7
      %v995 = vsub.s32 %v955, %v994
      %v996 = vrot.slane %v573, %v995
      %v997 = vsel %vm960, %v996, %v992
      %v998 = vlaneseq
      %v999 = vshrl.u32 %v998, 7
      %v1000 = vsub.s32 %v950, %v999
      %v1001 = vrot.slane %v574, %v1000
      %v1002 = vlaneseq
      %v1003 = vshrl.u32 %v1002, 7
      %v1004 = vsub.s32 %v955, %v1003
      %v1005 = vrot.slane %v575, %v1004
      %v1006 = vsel %vm960, %v1005, %v1001
      %v1007 = vlaneseq
      %v1008 = vshrl.u32 %v1007, 7
      %v1009 = vsub.s32 %v950, %v1008
      %v1010 = vrot.slane %v576, %v1009
      %v1011 = vlaneseq
      %v1012 = vshrl.u32 %v1011, 7
      %v1013 = vsub.s32 %v955, %v1012
      %v1014 = vrot.slane %v577, %v1013
      %v1015 = vsel %vm960, %v1014, %v1010
      %v1016 = vlaneseq
      %v1017 = vshrl.u32 %v1016, 7
      %v1018 = vsub.s32 %v950, %v1017
      %v1019 = vrot.slane %v578, %v1018
      %v1020 = vlaneseq
      %v1021 = vshrl.u32 %v1020, 7
      %v1022 = vsub.s32 %v955, %v1021
      %v1023 = vrot.slane %v579, %v1022
      %v1024 = vsel %vm960, %v1023, %v1019
      %v1025 = vlaneseq
      %v1026 = vshrl.u32 %v1025, 7
      %v1027 = vsub.s32 %v950, %v1026
      %v1028 = vrot.slane %v580, %v1027
      %v1029 = vlaneseq
      %v1030 = vshrl.u32 %v1029, 7
      %v1031 = vsub.s32 %v955, %v1030
      %v1032 = vrot.slane %v581, %v1031
      %v1033 = vsel %vm960, %v1032, %v1028
      %v1034 = vlaneseq
      %v1035 = vshrl.u32 %v1034, 7
      %v1036 = vsub.s32 %v950, %v1035
      %v1037 = vrot.slane %v582, %v1036
      %v1038 = vlaneseq
      %v1039 = vshrl.u32 %v1038, 7
      %v1040 = vsub.s32 %v955, %v1039
      %v1041 = vrot.slane %v583, %v1040
      %v1042 = vsel %vm960, %v1041, %v1037
      %v1043 = vlaneseq
      %v1044 = vshrl.u32 %v1043, 7
      %v1045 = vsub.s32 %v950, %v1044
      %v1046 = vrot.slane %v584, %v1045
      %v1047 = vlaneseq
      %v1048 = vshrl.u32 %v1047, 7
      %v1049 = vsub.s32 %v955, %v1048
      %v1050 = vrot.slane %v585, %v1049
      %v1051 = vsel %vm960, %v1050, %v1046
      %v1052 = vlaneseq
      %v1053 = vshrl.u32 %v1052, 7
      %v1054 = vsub.s32 %v950, %v1053
      %v1055 = vrot.slane %v586, %v1054
      %v1056 = vlaneseq
      %v1057 = vshrl.u32 %v1056, 7
      %v1058 = vsub.s32 %v955, %v1057
      %v1059 = vrot.slane %v587, %v1058
      %v1060 = vsel %vm960, %v1059, %v1055
      %v1061 = vlaneseq
      %v1062 = vshrl.u32 %v1061, 7
      %v1063 = vsub.s32 %v950, %v1062
      %v1064 = vrot.slane %v588, %v1063
      %v1065 = vlaneseq
      %v1066 = vshrl.u32 %v1065, 7
      %v1067 = vsub.s32 %v955, %v1066
      %v1068 = vrot.slane %v589, %v1067
      %v1069 = vsel %vm960, %v1068, %v1064
      %v1070 = vlaneseq
      %v1071 = vshrl.u32 %v1070, 7
      %v1072 = vsub.s32 %v950, %v1071
      %v1073 = vrot.slane %v590, %v1072
      %v1074 = vlaneseq
      %v1075 = vshrl.u32 %v1074, 7
      %v1076 = vsub.s32 %v955, %v1075
      %v1077 = vrot.slane %v591, %v1076
      %v1078 = vsel %vm960, %v1077, %v1073
      %v1079 = vlaneseq
      %v1080 = vshrl.u32 %v1079, 7
      %v1081 = vsub.s32 %v950, %v1080
      %v1082 = vrot.slane %v592, %v1081
      %v1083 = vlaneseq
      %v1084 = vshrl.u32 %v1083, 7
      %v1085 = vsub.s32 %v955, %v1084
      %v1086 = vrot.slane %v593, %v1085
      %v1087 = vsel %vm960, %v1086, %v1082
      %v1088 = vlaneseq
      %v1089 = vshrl.u32 %v1088, 7
      %v1090 = vsub.s32 %v950, %v1089
      %v1091 = vrot.slane %v594, %v1090
      %v1092 = vlaneseq
      %v1093 = vshrl.u32 %v1092, 7
      %v1094 = vsub.s32 %v955, %v1093
      %v1095 = vrot.slane %v595, %v1094
      %v1096 = vsel %vm960, %v1095, %v1091
      %v1097 = vlaneseq
      %v1098 = vshrl.u32 %v1097, 7
      %v1099 = vsub.s32 %v950, %v1098
      %v1100 = vrot.slane %v596, %v1099
      %v1101 = vlaneseq
      %v1102 = vshrl.u32 %v1101, 7
      %v1103 = vsub.s32 %v955, %v1102
      %v1104 = vrot.slane %v597, %v1103
      %v1105 = vsel %vm960, %v1104, %v1100
      %v1106 = vlaneseq
      %v1107 = vshrl.u32 %v1106, 7
      %v1108 = vsub.s32 %v950, %v1107
      %v1109 = vrot.slane %v598, %v1108
      %v1110 = vlaneseq
      %v1111 = vshrl.u32 %v1110, 7
      %v1112 = vsub.s32 %v955, %v1111
      %v1113 = vrot.slane %v599, %v1112
      %v1114 = vsel %vm960, %v1113, %v1109
      %v1115 = vlaneseq
      %v1116 = vshrl.u32 %v1115, 7
      %v1117 = vsub.s32 %v950, %v1116
      %v1118 = vrot.slane %v600, %v1117
      %v1119 = vlaneseq
      %v1120 = vshrl.u32 %v1119, 7
      %v1121 = vsub.s32 %v955, %v1120
      %v1122 = vrot.slane %v601, %v1121
      %v1123 = vsel %vm960, %v1122, %v1118
      %v1124 = vlaneseq
      %v1125 = vshrl.u32 %v1124, 7
      %v1126 = vsub.s32 %v950, %v1125
      %v1127 = vrot.slane %v602, %v1126
      %v1128 = vlaneseq
      %v1129 = vshrl.u32 %v1128, 7
      %v1130 = vsub.s32 %v955, %v1129
      %v1131 = vrot.slane %v603, %v1130
      %v1132 = vsel %vm960, %v1131, %v1127
      %v1133 = vlaneseq
      %v1134 = vshrl.u32 %v1133, 7
      %v1135 = vsub.s32 %v950, %v1134
      %v1136 = vrot.slane %v604, %v1135
      %v1137 = vlaneseq
      %v1138 = vshrl.u32 %v1137, 7
      %v1139 = vsub.s32 %v955, %v1138
      %v1140 = vrot.slane %v605, %v1139
      %v1141 = vsel %vm960, %v1140, %v1136
      %v1142 = vlaneseq
      %v1143 = vshrl.u32 %v1142, 7
      %v1144 = vsub.s32 %v950, %v1143
      %v1145 = vrot.slane %v606, %v1144
      %v1146 = vlaneseq
      %v1147 = vshrl.u32 %v1146, 7
      %v1148 = vsub.s32 %v955, %v1147
      %v1149 = vrot.slane %v607, %v1148
      %v1150 = vsel %vm960, %v1149, %v1145
      %v1151 = vlaneseq
      %v1152 = vshrl.u32 %v1151, 7
      %v1153 = vsub.s32 %v950, %v1152
      %v1154 = vrot.slane %v608, %v1153
      %v1155 = vlaneseq
      %v1156 = vshrl.u32 %v1155, 7
      %v1157 = vsub.s32 %v955, %v1156
      %v1158 = vrot.slane %v609, %v1157
      %v1159 = vsel %vm960, %v1158, %v1154
      %v1160 = vlaneseq
      %v1161 = vshrl.u32 %v1160, 7
      %v1162 = vsub.s32 %v950, %v1161
      %v1163 = vrot.slane %v610, %v1162
      %v1164 = vlaneseq
      %v1165 = vshrl.u32 %v1164, 7
      %v1166 = vsub.s32 %v955, %v1165
      %v1167 = vrot.slane %v611, %v1166
      %v1168 = vsel %vm960, %v1167, %v1163
      %v1169 = vlaneseq
      %v1170 = vshrl.u32 %v1169, 7
      %v1171 = vsub.s32 %v950, %v1170
      %v1172 = vrot.slane %v612, %v1171
      %v1173 = vlaneseq
      %v1174 = vshrl.u32 %v1173, 7
      %v1175 = vsub.s32 %v955, %v1174
      %v1176 = vrot.slane %v613, %v1175
      %v1177 = vsel %vm960, %v1176, %v1172
      %v1178 = vlaneseq
      %v1179 = vshrl.u32 %v1178, 7
      %v1180 = vsub.s32 %v950, %v1179
      %v1181 = vrot.slane %v614, %v1180
      %v1182 = vlaneseq
      %v1183 = vshrl.u32 %v1182, 7
      %v1184 = vsub.s32 %v955, %v1183
      %v1185 = vrot.slane %v615, %v1184
      %v1186 = vsel %vm960, %v1185, %v1181
      %v1187 = vlaneseq
      %v1188 = vshrl.u32 %v1187, 7
      %v1189 = vsub.s32 %v950, %v1188
      %v1190 = vrot.slane %v616, %v1189
      %v1191 = vlaneseq
      %v1192 = vshrl.u32 %v1191, 7
      %v1193 = vsub.s32 %v955, %v1192
      %v1194 = vrot.slane %v617, %v1193
      %v1195 = vsel %vm960, %v1194, %v1190
      %v1196 = vlaneseq
      %v1197 = vshrl.u32 %v1196, 7
      %v1198 = vsub.s32 %v950, %v1197
      %v1199 = vrot.slane %v618, %v1198
      %v1200 = vlaneseq
      %v1201 = vshrl.u32 %v1200, 7
      %v1202 = vsub.s32 %v955, %v1201
      %v1203 = vrot.slane %v619, %v1202
      %v1204 = vsel %vm960, %v1203, %v1199
      %v1205 = vlaneseq
      %v1206 = vshrl.u32 %v1205, 7
      %v1207 = vsub.s32 %v950, %v1206
      %v1208 = vrot.slane %v620, %v1207
      %v1209 = vlaneseq
      %v1210 = vshrl.u32 %v1209, 7
      %v1211 = vsub.s32 %v955, %v1210
      %v1212 = vrot.slane %v621, %v1211
      %v1213 = vsel %vm960, %v1212, %v1208
      %v1214 = vlaneseq
      %v1215 = vshrl.u32 %v1214, 7
      %v1216 = vsub.s32 %v950, %v1215
      %v1217 = vrot.slane %v622, %v1216
      %v1218 = vlaneseq
      %v1219 = vshrl.u32 %v1218, 7
      %v1220 = vsub.s32 %v955, %v1219
      %v1221 = vrot.slane %v623, %v1220
      %v1222 = vsel %vm960, %v1221, %v1217
      %v1223 = vlaneseq
      %v1224 = vshrl.u32 %v1223, 7
      %v1225 = vsub.s32 %v950, %v1224
      %v1226 = vrot.slane %v624, %v1225
      %v1227 = vlaneseq
      %v1228 = vshrl.u32 %v1227, 7
      %v1229 = vsub.s32 %v955, %v1228
      %v1230 = vrot.slane %v625, %v1229
      %v1231 = vsel %vm960, %v1230, %v1226
      %v1232 = vlaneseq
      %v1233 = vshrl.u32 %v1232, 7
      %v1234 = vsub.s32 %v950, %v1233
      %v1235 = vrot.slane %v626, %v1234
      %v1236 = vlaneseq
      %v1237 = vshrl.u32 %v1236, 7
      %v1238 = vsub.s32 %v955, %v1237
      %v1239 = vrot.slane %v627, %v1238
      %v1240 = vsel %vm960, %v1239, %v1235
      %vm1241 = vcmask 1041409
      %v1242 = vsel %vm1241, %v970, %v961
      %vm1243 = vcmask 1042434
      %v1244 = vsel %vm1243, %v979, %v1242
      %vm1245 = vcmask 1043459
      %v1246 = vsel %vm1245, %v988, %v1244
      %vm1247 = vcmask 1044484
      %v1248 = vsel %vm1247, %v997, %v1246
      %vm1249 = vcmask 1045509
      %v1250 = vsel %vm1249, %v1006, %v1248
      %vm1251 = vcmask 1046534
      %v1252 = vsel %vm1251, %v1015, %v1250
      %vm1253 = vcmask 1047559
      %v1254 = vsel %vm1253, %v1024, %v1252
      %v1255 = vsel %vm1241, %v1042, %v1033
      %v1256 = vsel %vm1243, %v1051, %v1255
      %v1257 = vsel %vm1245, %v1060, %v1256
      %v1258 = vsel %vm1247, %v1069, %v1257
      %v1259 = vsel %vm1249, %v1078, %v1258
      %v1260 = vsel %vm1251, %v1087, %v1259
      %v1261 = vsel %vm1253, %v1096, %v1260
      %v1262 = vsel %vm1241, %v1114, %v1105
      %v1263 = vsel %vm1243, %v1123, %v1262
      %v1264 = vsel %vm1245, %v1132, %v1263
      %v1265 = vsel %vm1247, %v1141, %v1264
      %v1266 = vsel %vm1249, %v1150, %v1265
      %v1267 = vsel %vm1251, %v1159, %v1266
      %v1268 = vsel %vm1253, %v1168, %v1267
      %v1269 = vsel %vm1241, %v1186, %v1177
      %v1270 = vsel %vm1243, %v1195, %v1269
      %v1271 = vsel %vm1245, %v1204, %v1270
      %v1272 = vsel %vm1247, %v1213, %v1271
      %v1273 = vsel %vm1249, %v1222, %v1272
      %v1274 = vsel %vm1251, %v1231, %v1273
      %v1275 = vsel %vm1253, %v1240, %v1274
      %vm1280 = vcmask 261120
      %v1282 = vsel %vm1280, %v884, 0
      %1284 = vmatprep.subr.mxu0 0.0
      %1285 = vmatpush1.msra.mxu0 0.0
      %1286 = vmatprep.subr.mxu0 0.0
      %1287 = vmatpush1.msra.mxu0 0.0
      %1288 = vmatprep.subr.mxu0 0.0
      %1289 = vmatpush1.msra.mxu0 0.0
      %1290 = vmatprep.subr.mxu0 0.0
      %1291 = vmatpush1.msra.mxu0 0.0
      %1292 = vmatprep.subr.mxu0 0.0
      %1293 = vmatpush1.msra.mxu0 0.0
      %1294 = vmatprep.subr.mxu0 0.0
      %1295 = vmatpush1.msra.mxu0 0.0
      %1296 = vmatprep.subr.mxu0 0.0
      %1297 = vmatpush1.msra.mxu0 0.0
      %1298 = vmatprep.subr.mxu0 0.0
      %1299 = vmatpush1.msra.mxu0 0.0
      %1300 = vmatprep.subr.mxu0 0.0
      %1301 = vmatpush1.msra.mxu0 0.0
      %1302 = vmatprep.subr.mxu0 0.0
      %1303 = vmatpush1.msra.mxu0 0.0
      %1304 = vmatprep.subr.mxu0 0.0
      %1305 = vmatpush1.msra.mxu0 0.0
      %1306 = vmatprep.subr.mxu0 0.0
      %1307 = vmatpush1.msra.mxu0 0.0
      %1308 = vmatprep.subr.mxu0 0.0
      %v1309 = vand.u32 %v1275, 4294901760
      %1310 = vmatpush1.msra.mxu0 %v1309
      %1311 = vmatprep.subr.mxu0 0.0
      %v1312 = vand.u32 %v1268, 4294901760
      %1313 = vmatpush1.msra.mxu0 %v1312
      %1314 = vmatprep.subr.mxu0 0.0
      %v1315 = vand.u32 %v1261, 4294901760
      %1316 = vmatpush1.msra.mxu0 %v1315
      %1317 = vmatprep.subr.mxu0 0.0
      %v1318 = vand.u32 %v1254, 4294901760
      %1319 = vmatpush1.msra.mxu0 %v1318
      %1320 = vmatprep.subr.mxu0 0.0
      %1321 = vmatpush2.msra.mxu0 0.0
      %1322 = vmatprep.subr.mxu0 0.0
      %1323 = vmatpush2.msra.mxu0 0.0
      %1324 = vmatprep.subr.mxu0 0.0
      %1325 = vmatpush2.msra.mxu0 0.0
      %1326 = vmatprep.subr.mxu0 0.0
      %1327 = vmatpush2.msra.mxu0 0.0
      %1328 = vmatprep.subr.mxu0 0.0
      %1329 = vmatpush2.msra.mxu0 0.0
      %1330 = vmatprep.subr.mxu0 0.0
      %1331 = vmatpush2.msra.mxu0 0.0
      %1332 = vmatprep.subr.mxu0 0.0
      %1333 = vmatpush2.msra.mxu0 0.0
      %1334 = vmatprep.subr.mxu0 0.0
      %1335 = vmatpush2.msra.mxu0 0.0
      %1336 = vmatprep.subr.mxu0 0.0
      %1337 = vmatpush2.msra.mxu0 0.0
      %1338 = vmatprep.subr.mxu0 0.0
      %1339 = vmatpush2.msra.mxu0 0.0
      %1340 = vmatprep.subr.mxu0 0.0
      %1341 = vmatpush2.msra.mxu0 0.0
      %1342 = vmatprep.subr.mxu0 0.0
      %1343 = vmatpush2.msra.mxu0 0.0
      %1344 = vmatprep.subr.mxu0 0.0
      %1345 = vmatpush2.msra.mxu0 0.0
      %1346 = vmatprep.subr.mxu0 0.0
      %1347 = vmatpush2.msra.mxu0 0.0
      %1348 = vmatprep.subr.mxu0 0.0
      %1349 = vmatpush2.msra.mxu0 0.0
      %1350 = vmatprep.subr.mxu0 0.0
      %1351 = vmatpush2.msra.mxu0 0.0
      %1352 = vmatprep.mubr.f32.mxu0 0.0
      %v1353 = vand.u32 %v1282, 4294901760
      %v1354 = vsub.f32 %v1282, %v1353
      %v1355 = vand.u32 %v1354, 4294901760
      %v1356 = vsub.f32 %v1354, %v1355
      %v1357 = vand.u32 %v1356, 4294901760
      %1358 = vmatmul.mubr.f32.gmra.mxu0 %v1357
      %v1359 = vpop.f32.mrf.mxu0
      %v1360 = vadd.f32 0.0, %v1359
      %v1361 = vpop.f32.mrf.mxu0
      %1362 = vdwg.mxu0
      %1363 = vmatprep.subr.mxu0 0.0
      %1364 = vmatpush1.msra.mxu0 0.0
      %1365 = vmatprep.subr.mxu0 0.0
      %1366 = vmatpush1.msra.mxu0 0.0
      %1367 = vmatprep.subr.mxu0 0.0
      %1368 = vmatpush1.msra.mxu0 0.0
      %1369 = vmatprep.subr.mxu0 0.0
      %1370 = vmatpush1.msra.mxu0 0.0
      %1371 = vmatprep.subr.mxu0 0.0
      %1372 = vmatpush1.msra.mxu0 0.0
      %1373 = vmatprep.subr.mxu0 0.0
      %1374 = vmatpush1.msra.mxu0 0.0
      %1375 = vmatprep.subr.mxu0 0.0
      %1376 = vmatpush1.msra.mxu0 0.0
      %1377 = vmatprep.subr.mxu0 0.0
      %1378 = vmatpush1.msra.mxu0 0.0
      %1379 = vmatprep.subr.mxu0 0.0
      %1380 = vmatpush1.msra.mxu0 0.0
      %1381 = vmatprep.subr.mxu0 0.0
      %1382 = vmatpush1.msra.mxu0 0.0
      %1383 = vmatprep.subr.mxu0 0.0
      %1384 = vmatpush1.msra.mxu0 0.0
      %1385 = vmatprep.subr.mxu0 0.0
      %1386 = vmatpush1.msra.mxu0 0.0
      %1387 = vmatprep.subr.mxu0 0.0
      %v1388 = vand.u32 %v1275, 4294901760
      %v1389 = vsub.f32 %v1275, %v1388
      %v1390 = vand.u32 %v1389, 4294901760
      %v1391 = vsub.f32 %v1389, %v1390
      %v1392 = vand.u32 %v1391, 4294901760
      %1393 = vmatpush1.msra.mxu0 %v1392
      %1394 = vmatprep.subr.mxu0 0.0
      %v1395 = vand.u32 %v1268, 4294901760
      %v1396 = vsub.f32 %v1268, %v1395
      %v1397 = vand.u32 %v1396, 4294901760
      %v1398 = vsub.f32 %v1396, %v1397
      %v1399 = vand.u32 %v1398, 4294901760
      %1400 = vmatpush1.msra.mxu0 %v1399
      %1401 = vmatprep.subr.mxu0 0.0
      %v1402 = vand.u32 %v1261, 4294901760
      %v1403 = vsub.f32 %v1261, %v1402
      %v1404 = vand.u32 %v1403, 4294901760
      %v1405 = vsub.f32 %v1403, %v1404
      %v1406 = vand.u32 %v1405, 4294901760
      %1407 = vmatpush1.msra.mxu0 %v1406
      %1408 = vmatprep.subr.mxu0 0.0
      %v1409 = vand.u32 %v1254, 4294901760
      %v1410 = vsub.f32 %v1254, %v1409
      %v1411 = vand.u32 %v1410, 4294901760
      %v1412 = vsub.f32 %v1410, %v1411
      %v1413 = vand.u32 %v1412, 4294901760
      %1414 = vmatpush1.msra.mxu0 %v1413
      %1415 = vmatprep.subr.mxu0 0.0
      %1416 = vmatpush2.msra.mxu0 0.0
      %1417 = vmatprep.subr.mxu0 0.0
      %1418 = vmatpush2.msra.mxu0 0.0
      %1419 = vmatprep.subr.mxu0 0.0
      %1420 = vmatpush2.msra.mxu0 0.0
      %1421 = vmatprep.subr.mxu0 0.0
      %1422 = vmatpush2.msra.mxu0 0.0
      %1423 = vmatprep.subr.mxu0 0.0
      %1424 = vmatpush2.msra.mxu0 0.0
      %1425 = vmatprep.subr.mxu0 0.0
      %1426 = vmatpush2.msra.mxu0 0.0
      %1427 = vmatprep.subr.mxu0 0.0
      %1428 = vmatpush2.msra.mxu0 0.0
      %1429 = vmatprep.subr.mxu0 0.0
      %1430 = vmatpush2.msra.mxu0 0.0
      %1431 = vmatprep.subr.mxu0 0.0
      %1432 = vmatpush2.msra.mxu0 0.0
      %1433 = vmatprep.subr.mxu0 0.0
      %1434 = vmatpush2.msra.mxu0 0.0
      %1435 = vmatprep.subr.mxu0 0.0
      %1436 = vmatpush2.msra.mxu0 0.0
      %1437 = vmatprep.subr.mxu0 0.0
      %1438 = vmatpush2.msra.mxu0 0.0
      %1439 = vmatprep.subr.mxu0 0.0
      %1440 = vmatpush2.msra.mxu0 0.0
      %1441 = vmatprep.subr.mxu0 0.0
      %1442 = vmatpush2.msra.mxu0 0.0
      %1443 = vmatprep.subr.mxu0 0.0
      %1444 = vmatpush2.msra.mxu0 0.0
      %1445 = vmatprep.subr.mxu0 0.0
      %1446 = vmatpush2.msra.mxu0 0.0
      %1447 = vmatprep.mubr.f32.mxu0 0.0
      %v1448 = vand.u32 %v1282, 4294901760
      %1449 = vmatmul.mubr.f32.gmra.mxu0 %v1448
      %v1450 = vpop.f32.mrf.mxu0
      %v1451 = vadd.f32 %v1360, %v1450
      %v1452 = vpop.f32.mrf.mxu0
      %1453 = vdwg.mxu0
      %1454 = vmatprep.subr.mxu0 0.0
      %1455 = vmatpush1.msra.mxu0 0.0
      %1456 = vmatprep.subr.mxu0 0.0
      %1457 = vmatpush1.msra.mxu0 0.0
      %1458 = vmatprep.subr.mxu0 0.0
      %1459 = vmatpush1.msra.mxu0 0.0
      %1460 = vmatprep.subr.mxu0 0.0
      %1461 = vmatpush1.msra.mxu0 0.0
      %1462 = vmatprep.subr.mxu0 0.0
      %1463 = vmatpush1.msra.mxu0 0.0
      %1464 = vmatprep.subr.mxu0 0.0
      %1465 = vmatpush1.msra.mxu0 0.0
      %1466 = vmatprep.subr.mxu0 0.0
      %1467 = vmatpush1.msra.mxu0 0.0
      %1468 = vmatprep.subr.mxu0 0.0
      %1469 = vmatpush1.msra.mxu0 0.0
      %1470 = vmatprep.subr.mxu0 0.0
      %1471 = vmatpush1.msra.mxu0 0.0
      %1472 = vmatprep.subr.mxu0 0.0
      %1473 = vmatpush1.msra.mxu0 0.0
      %1474 = vmatprep.subr.mxu0 0.0
      %1475 = vmatpush1.msra.mxu0 0.0
      %1476 = vmatprep.subr.mxu0 0.0
      %1477 = vmatpush1.msra.mxu0 0.0
      %1478 = vmatprep.subr.mxu0 0.0
      %v1479 = vand.u32 %v1275, 4294901760
      %v1480 = vsub.f32 %v1275, %v1479
      %1481 = vmatpush1.msra.mxu0 %v1480
      %1482 = vmatprep.subr.mxu0 0.0
      %v1483 = vand.u32 %v1268, 4294901760
      %v1484 = vsub.f32 %v1268, %v1483
      %1485 = vmatpush1.msra.mxu0 %v1484
      %1486 = vmatprep.subr.mxu0 0.0
      %v1487 = vand.u32 %v1261, 4294901760
      %v1488 = vsub.f32 %v1261, %v1487
      %1489 = vmatpush1.msra.mxu0 %v1488
      %1490 = vmatprep.subr.mxu0 0.0
      %v1491 = vand.u32 %v1254, 4294901760
      %v1492 = vsub.f32 %v1254, %v1491
      %1493 = vmatpush1.msra.mxu0 %v1492
      %1494 = vmatprep.subr.mxu0 0.0
      %1495 = vmatpush2.msra.mxu0 0.0
      %1496 = vmatprep.subr.mxu0 0.0
      %1497 = vmatpush2.msra.mxu0 0.0
      %1498 = vmatprep.subr.mxu0 0.0
      %1499 = vmatpush2.msra.mxu0 0.0
      %1500 = vmatprep.subr.mxu0 0.0
      %1501 = vmatpush2.msra.mxu0 0.0
      %1502 = vmatprep.subr.mxu0 0.0
      %1503 = vmatpush2.msra.mxu0 0.0
      %1504 = vmatprep.subr.mxu0 0.0
      %1505 = vmatpush2.msra.mxu0 0.0
      %1506 = vmatprep.subr.mxu0 0.0
      %1507 = vmatpush2.msra.mxu0 0.0
      %1508 = vmatprep.subr.mxu0 0.0
      %1509 = vmatpush2.msra.mxu0 0.0
      %1510 = vmatprep.subr.mxu0 0.0
      %1511 = vmatpush2.msra.mxu0 0.0
      %1512 = vmatprep.subr.mxu0 0.0
      %1513 = vmatpush2.msra.mxu0 0.0
      %1514 = vmatprep.subr.mxu0 0.0
      %1515 = vmatpush2.msra.mxu0 0.0
      %1516 = vmatprep.subr.mxu0 0.0
      %1517 = vmatpush2.msra.mxu0 0.0
      %1518 = vmatprep.subr.mxu0 0.0
      %1519 = vmatpush2.msra.mxu0 0.0
      %1520 = vmatprep.subr.mxu0 0.0
      %1521 = vmatpush2.msra.mxu0 0.0
      %1522 = vmatprep.subr.mxu0 0.0
      %1523 = vmatpush2.msra.mxu0 0.0
      %1524 = vmatprep.subr.mxu0 0.0
      %1525 = vmatpush2.msra.mxu0 0.0
      %1526 = vmatprep.mubr.f32.mxu0 0.0
      %v1527 = vand.u32 %v1282, 4294901760
      %v1528 = vsub.f32 %v1282, %v1527
      %1529 = vmatmul.mubr.f32.gmra.mxu0 %v1528
      %v1530 = vpop.f32.mrf.mxu0
      %v1531 = vadd.f32 %v1451, %v1530
      %v1532 = vpop.f32.mrf.mxu0
      %1533 = vdwg.mxu0
      %1534 = vmatprep.subr.mxu0 0.0
      %1535 = vmatpush1.msra.mxu0 0.0
      %1536 = vmatprep.subr.mxu0 0.0
      %1537 = vmatpush1.msra.mxu0 0.0
      %1538 = vmatprep.subr.mxu0 0.0
      %1539 = vmatpush1.msra.mxu0 0.0
      %1540 = vmatprep.subr.mxu0 0.0
      %1541 = vmatpush1.msra.mxu0 0.0
      %1542 = vmatprep.subr.mxu0 0.0
      %1543 = vmatpush1.msra.mxu0 0.0
      %1544 = vmatprep.subr.mxu0 0.0
      %1545 = vmatpush1.msra.mxu0 0.0
      %1546 = vmatprep.subr.mxu0 0.0
      %1547 = vmatpush1.msra.mxu0 0.0
      %1548 = vmatprep.subr.mxu0 0.0
      %1549 = vmatpush1.msra.mxu0 0.0
      %1550 = vmatprep.subr.mxu0 0.0
      %1551 = vmatpush1.msra.mxu0 0.0
      %1552 = vmatprep.subr.mxu0 0.0
      %1553 = vmatpush1.msra.mxu0 0.0
      %1554 = vmatprep.subr.mxu0 0.0
      %1555 = vmatpush1.msra.mxu0 0.0
      %1556 = vmatprep.subr.mxu0 0.0
      %1557 = vmatpush1.msra.mxu0 0.0
      %1558 = vmatprep.subr.mxu0 0.0
      %v1559 = vand.u32 %v1275, 4294901760
      %1560 = vmatpush1.msra.mxu0 %v1559
      %1561 = vmatprep.subr.mxu0 0.0
      %v1562 = vand.u32 %v1268, 4294901760
      %1563 = vmatpush1.msra.mxu0 %v1562
      %1564 = vmatprep.subr.mxu0 0.0
      %v1565 = vand.u32 %v1261, 4294901760
      %1566 = vmatpush1.msra.mxu0 %v1565
      %1567 = vmatprep.subr.mxu0 0.0
      %v1568 = vand.u32 %v1254, 4294901760
      %1569 = vmatpush1.msra.mxu0 %v1568
      %1570 = vmatprep.subr.mxu0 0.0
      %1571 = vmatpush2.msra.mxu0 0.0
      %1572 = vmatprep.subr.mxu0 0.0
      %1573 = vmatpush2.msra.mxu0 0.0
      %1574 = vmatprep.subr.mxu0 0.0
      %1575 = vmatpush2.msra.mxu0 0.0
      %1576 = vmatprep.subr.mxu0 0.0
      %1577 = vmatpush2.msra.mxu0 0.0
      %1578 = vmatprep.subr.mxu0 0.0
      %1579 = vmatpush2.msra.mxu0 0.0
      %1580 = vmatprep.subr.mxu0 0.0
      %1581 = vmatpush2.msra.mxu0 0.0
      %1582 = vmatprep.subr.mxu0 0.0
      %1583 = vmatpush2.msra.mxu0 0.0
      %1584 = vmatprep.subr.mxu0 0.0
      %1585 = vmatpush2.msra.mxu0 0.0
      %1586 = vmatprep.subr.mxu0 0.0
      %1587 = vmatpush2.msra.mxu0 0.0
      %1588 = vmatprep.subr.mxu0 0.0
      %1589 = vmatpush2.msra.mxu0 0.0
      %1590 = vmatprep.subr.mxu0 0.0
      %1591 = vmatpush2.msra.mxu0 0.0
      %1592 = vmatprep.subr.mxu0 0.0
      %1593 = vmatpush2.msra.mxu0 0.0
      %1594 = vmatprep.subr.mxu0 0.0
      %1595 = vmatpush2.msra.mxu0 0.0
      %1596 = vmatprep.subr.mxu0 0.0
      %1597 = vmatpush2.msra.mxu0 0.0
      %1598 = vmatprep.subr.mxu0 0.0
      %1599 = vmatpush2.msra.mxu0 0.0
      %1600 = vmatprep.subr.mxu0 0.0
      %1601 = vmatpush2.msra.mxu0 0.0
      %1602 = vmatprep.mubr.f32.mxu0 0.0
      %v1603 = vand.u32 %v1282, 4294901760
      %v1604 = vsub.f32 %v1282, %v1603
      %v1605 = vand.u32 %v1604, 4294901760
      %1606 = vmatmul.mubr.f32.gmra.mxu0 %v1605
      %v1607 = vpop.f32.mrf.mxu0
      %v1608 = vadd.f32 %v1531, %v1607
      %v1609 = vpop.f32.mrf.mxu0
      %1610 = vdwg.mxu0
      %1611 = vmatprep.subr.mxu0 0.0
      %1612 = vmatpush1.msra.mxu0 0.0
      %1613 = vmatprep.subr.mxu0 0.0
      %1614 = vmatpush1.msra.mxu0 0.0
      %1615 = vmatprep.subr.mxu0 0.0
      %1616 = vmatpush1.msra.mxu0 0.0
      %1617 = vmatprep.subr.mxu0 0.0
      %1618 = vmatpush1.msra.mxu0 0.0
      %1619 = vmatprep.subr.mxu0 0.0
      %1620 = vmatpush1.msra.mxu0 0.0
      %1621 = vmatprep.subr.mxu0 0.0
      %1622 = vmatpush1.msra.mxu0 0.0
      %1623 = vmatprep.subr.mxu0 0.0
      %1624 = vmatpush1.msra.mxu0 0.0
      %1625 = vmatprep.subr.mxu0 0.0
      %1626 = vmatpush1.msra.mxu0 0.0
      %1627 = vmatprep.subr.mxu0 0.0
      %1628 = vmatpush1.msra.mxu0 0.0
      %1629 = vmatprep.subr.mxu0 0.0
      %1630 = vmatpush1.msra.mxu0 0.0
      %1631 = vmatprep.subr.mxu0 0.0
      %1632 = vmatpush1.msra.mxu0 0.0
      %1633 = vmatprep.subr.mxu0 0.0
      %1634 = vmatpush1.msra.mxu0 0.0
      %1635 = vmatprep.subr.mxu0 0.0
      %v1636 = vand.u32 %v1275, 4294901760
      %v1637 = vsub.f32 %v1275, %v1636
      %v1638 = vand.u32 %v1637, 4294901760
      %1639 = vmatpush1.msra.mxu0 %v1638
      %1640 = vmatprep.subr.mxu0 0.0
      %v1641 = vand.u32 %v1268, 4294901760
      %v1642 = vsub.f32 %v1268, %v1641
      %v1643 = vand.u32 %v1642, 4294901760
      %1644 = vmatpush1.msra.mxu0 %v1643
      %1645 = vmatprep.subr.mxu0 0.0
      %v1646 = vand.u32 %v1261, 4294901760
      %v1647 = vsub.f32 %v1261, %v1646
      %v1648 = vand.u32 %v1647, 4294901760
      %1649 = vmatpush1.msra.mxu0 %v1648
      %1650 = vmatprep.subr.mxu0 0.0
      %v1651 = vand.u32 %v1254, 4294901760
      %v1652 = vsub.f32 %v1254, %v1651
      %v1653 = vand.u32 %v1652, 4294901760
      %1654 = vmatpush1.msra.mxu0 %v1653
      %1655 = vmatprep.subr.mxu0 0.0
      %1656 = vmatpush2.msra.mxu0 0.0
      %1657 = vmatprep.subr.mxu0 0.0
      %1658 = vmatpush2.msra.mxu0 0.0
      %1659 = vmatprep.subr.mxu0 0.0
      %1660 = vmatpush2.msra.mxu0 0.0
      %1661 = vmatprep.subr.mxu0 0.0
      %1662 = vmatpush2.msra.mxu0 0.0
      %1663 = vmatprep.subr.mxu0 0.0
      %1664 = vmatpush2.msra.mxu0 0.0
      %1665 = vmatprep.subr.mxu0 0.0
      %1666 = vmatpush2.msra.mxu0 0.0
      %1667 = vmatprep.subr.mxu0 0.0
      %1668 = vmatpush2.msra.mxu0 0.0
      %1669 = vmatprep.subr.mxu0 0.0
      %1670 = vmatpush2.msra.mxu0 0.0
      %1671 = vmatprep.subr.mxu0 0.0
      %1672 = vmatpush2.msra.mxu0 0.0
      %1673 = vmatprep.subr.mxu0 0.0
      %1674 = vmatpush2.msra.mxu0 0.0
      %1675 = vmatprep.subr.mxu0 0.0
      %1676 = vmatpush2.msra.mxu0 0.0
      %1677 = vmatprep.subr.mxu0 0.0
      %1678 = vmatpush2.msra.mxu0 0.0
      %1679 = vmatprep.subr.mxu0 0.0
      %1680 = vmatpush2.msra.mxu0 0.0
      %1681 = vmatprep.subr.mxu0 0.0
      %1682 = vmatpush2.msra.mxu0 0.0
      %1683 = vmatprep.subr.mxu0 0.0
      %1684 = vmatpush2.msra.mxu0 0.0
      %1685 = vmatprep.subr.mxu0 0.0
      %1686 = vmatpush2.msra.mxu0 0.0
      %1687 = vmatprep.mubr.f32.mxu0 0.0
      %v1688 = vand.u32 %v1282, 4294901760
      %1689 = vmatmul.mubr.f32.gmra.mxu0 %v1688
      %v1690 = vpop.f32.mrf.mxu0
      %v1691 = vadd.f32 %v1608, %v1690
      %v1692 = vpop.f32.mrf.mxu0
      %1693 = vdwg.mxu0
      %1694 = vmatprep.subr.mxu0 0.0
      %1695 = vmatpush1.msra.mxu0 0.0
      %1696 = vmatprep.subr.mxu0 0.0
      %1697 = vmatpush1.msra.mxu0 0.0
      %1698 = vmatprep.subr.mxu0 0.0
      %1699 = vmatpush1.msra.mxu0 0.0
      %1700 = vmatprep.subr.mxu0 0.0
      %1701 = vmatpush1.msra.mxu0 0.0
      %1702 = vmatprep.subr.mxu0 0.0
      %1703 = vmatpush1.msra.mxu0 0.0
      %1704 = vmatprep.subr.mxu0 0.0
      %1705 = vmatpush1.msra.mxu0 0.0
      %1706 = vmatprep.subr.mxu0 0.0
      %1707 = vmatpush1.msra.mxu0 0.0
      %1708 = vmatprep.subr.mxu0 0.0
      %1709 = vmatpush1.msra.mxu0 0.0
      %1710 = vmatprep.subr.mxu0 0.0
      %1711 = vmatpush1.msra.mxu0 0.0
      %1712 = vmatprep.subr.mxu0 0.0
      %1713 = vmatpush1.msra.mxu0 0.0
      %1714 = vmatprep.subr.mxu0 0.0
      %1715 = vmatpush1.msra.mxu0 0.0
      %1716 = vmatprep.subr.mxu0 0.0
      %1717 = vmatpush1.msra.mxu0 0.0
      %1718 = vmatprep.subr.mxu0 0.0
      %v1719 = vand.u32 %v1275, 4294901760
      %1720 = vmatpush1.msra.mxu0 %v1719
      %1721 = vmatprep.subr.mxu0 0.0
      %v1722 = vand.u32 %v1268, 4294901760
      %1723 = vmatpush1.msra.mxu0 %v1722
      %1724 = vmatprep.subr.mxu0 0.0
      %v1725 = vand.u32 %v1261, 4294901760
      %1726 = vmatpush1.msra.mxu0 %v1725
      %1727 = vmatprep.subr.mxu0 0.0
      %v1728 = vand.u32 %v1254, 4294901760
      %1729 = vmatpush1.msra.mxu0 %v1728
      %1730 = vmatprep.subr.mxu0 0.0
      %1731 = vmatpush2.msra.mxu0 0.0
      %1732 = vmatprep.subr.mxu0 0.0
      %1733 = vmatpush2.msra.mxu0 0.0
      %1734 = vmatprep.subr.mxu0 0.0
      %1735 = vmatpush2.msra.mxu0 0.0
      %1736 = vmatprep.subr.mxu0 0.0
      %1737 = vmatpush2.msra.mxu0 0.0
      %1738 = vmatprep.subr.mxu0 0.0
      %1739 = vmatpush2.msra.mxu0 0.0
      %1740 = vmatprep.subr.mxu0 0.0
      %1741 = vmatpush2.msra.mxu0 0.0
      %1742 = vmatprep.subr.mxu0 0.0
      %1743 = vmatpush2.msra.mxu0 0.0
      %1744 = vmatprep.subr.mxu0 0.0
      %1745 = vmatpush2.msra.mxu0 0.0
      %1746 = vmatprep.subr.mxu0 0.0
      %1747 = vmatpush2.msra.mxu0 0.0
      %1748 = vmatprep.subr.mxu0 0.0
      %1749 = vmatpush2.msra.mxu0 0.0
      %1750 = vmatprep.subr.mxu0 0.0
      %1751 = vmatpush2.msra.mxu0 0.0
      %1752 = vmatprep.subr.mxu0 0.0
      %1753 = vmatpush2.msra.mxu0 0.0
      %1754 = vmatprep.subr.mxu0 0.0
      %1755 = vmatpush2.msra.mxu0 0.0
      %1756 = vmatprep.subr.mxu0 0.0
      %1757 = vmatpush2.msra.mxu0 0.0
      %1758 = vmatprep.subr.mxu0 0.0
      %1759 = vmatpush2.msra.mxu0 0.0
      %1760 = vmatprep.subr.mxu0 0.0
      %1761 = vmatpush2.msra.mxu0 0.0
      %1762 = vmatprep.mubr.f32.mxu0 0.0
      %v1763 = vand.u32 %v1282, 4294901760
      %1764 = vmatmul.mubr.f32.gmra.mxu0 %v1763
      %v1765 = vpop.f32.mrf.mxu0
      %v1766 = vadd.f32 %v1691, %v1765
      %v1767 = vpop.f32.mrf.mxu0
      %1768 = vdwg.mxu0
      %v1769 = vld [vmem:[%s2] sm:$0xff]
      %1771 = vset.pattern.permute.xlu0 0
      %1772 = vperm.xlu0 %1771, %v1769
      %v1773 = vpop.permute.xlu0 %1772
      %v1775 = vmul.f32 %v1766, %v1773
      %v1776 = vld [vmem:[%s3] sm:$0xff]
      %1778 = vset.pattern.permute.xlu0 0
      %1779 = vperm.xlu0 %1778, %v1776
      %v1780 = vpop.permute.xlu0 %1779
      %v1782 = vadd.f32 %v1775, %v1780
      %v1783 = vadd.f32 %v1782, 3.0
      %v1784 = vmax.f32 %v1783, 0.0
      %v1785 = vmin.f32 %v1784, 6.0
      %v1786 = vmul.f32 %v1785, 0.16666667
      %v1787 = vmul.f32 %v1782, %v1786
      %v1820 = vsel %vm1241, %v853, %v852
      %v1821 = vsel %vm1243, %v854, %v1820
      %v1822 = vsel %vm1245, %v855, %v1821
      %v1823 = vsel %vm1247, %v856, %v1822
      %v1824 = vsel %vm1249, %v857, %v1823
      %v1825 = vsel %vm1251, %v858, %v1824
      %v1826 = vsel %vm1253, %v859, %v1825
      %v1827 = vsel %vm1241, %v861, %v860
      %v1828 = vsel %vm1243, %v862, %v1827
      %v1829 = vsel %vm1245, %v863, %v1828
      %v1830 = vsel %vm1247, %v864, %v1829
      %v1831 = vsel %vm1249, %v865, %v1830
      %v1832 = vsel %vm1251, %v866, %v1831
      %v1833 = vsel %vm1253, %v867, %v1832
      %v1834 = vsel %vm1241, %v869, %v868
      %v1835 = vsel %vm1243, %v870, %v1834
      %v1836 = vsel %vm1245, %v871, %v1835
      %v1837 = vsel %vm1247, %v872, %v1836
      %v1838 = vsel %vm1249, %v873, %v1837
      %v1839 = vsel %vm1251, %v874, %v1838
      %v1840 = vsel %vm1253, %v875, %v1839
      %v1841 = vsel %vm1241, %v877, %v876
      %v1842 = vsel %vm1243, %v878, %v1841
      %v1843 = vsel %vm1245, %v879, %v1842
      %v1844 = vsel %vm1247, %v880, %v1843
      %v1845 = vsel %vm1249, %v881, %v1844
      %v1846 = vsel %vm1251, %v882, %v1845
      %v1847 = vsel %vm1253, %v883, %v1846
      %1852 = vmatprep.subr.mxu0 0.0
      %1853 = vmatpush1.msra.mxu0 0.0
      %1854 = vmatprep.subr.mxu0 0.0
      %1855 = vmatpush1.msra.mxu0 0.0
      %1856 = vmatprep.subr.mxu0 0.0
      %1857 = vmatpush1.msra.mxu0 0.0
      %1858 = vmatprep.subr.mxu0 0.0
      %1859 = vmatpush1.msra.mxu0 0.0
      %1860 = vmatprep.subr.mxu0 0.0
      %1861 = vmatpush1.msra.mxu0 0.0
      %1862 = vmatprep.subr.mxu0 0.0
      %1863 = vmatpush1.msra.mxu0 0.0
      %1864 = vmatprep.subr.mxu0 0.0
      %1865 = vmatpush1.msra.mxu0 0.0
      %1866 = vmatprep.subr.mxu0 0.0
      %1867 = vmatpush1.msra.mxu0 0.0
      %1868 = vmatprep.subr.mxu0 0.0
      %1869 = vmatpush1.msra.mxu0 0.0
      %1870 = vmatprep.subr.mxu0 0.0
      %1871 = vmatpush1.msra.mxu0 0.0
      %1872 = vmatprep.subr.mxu0 0.0
      %1873 = vmatpush1.msra.mxu0 0.0
      %1874 = vmatprep.subr.mxu0 0.0
      %1875 = vmatpush1.msra.mxu0 0.0
      %1876 = vmatprep.subr.mxu0 0.0
      %v1877 = vand.u32 %v1847, 4294901760
      %1878 = vmatpush1.msra.mxu0 %v1877
      %1879 = vmatprep.subr.mxu0 0.0
      %v1880 = vand.u32 %v1840, 4294901760
      %1881 = vmatpush1.msra.mxu0 %v1880
      %1882 = vmatprep.subr.mxu0 0.0
      %v1883 = vand.u32 %v1833, 4294901760
      %1884 = vmatpush1.msra.mxu0 %v1883
      %1885 = vmatprep.subr.mxu0 0.0
      %v1886 = vand.u32 %v1826, 4294901760
      %1887 = vmatpush1.msra.mxu0 %v1886
      %1888 = vmatprep.subr.mxu0 0.0
      %1889 = vmatpush2.msra.mxu0 0.0
      %1890 = vmatprep.subr.mxu0 0.0
      %1891 = vmatpush2.msra.mxu0 0.0
      %1892 = vmatprep.subr.mxu0 0.0
      %1893 = vmatpush2.msra.mxu0 0.0
      %1894 = vmatprep.subr.mxu0 0.0
      %1895 = vmatpush2.msra.mxu0 0.0
      %1896 = vmatprep.subr.mxu0 0.0
      %1897 = vmatpush2.msra.mxu0 0.0
      %1898 = vmatprep.subr.mxu0 0.0
      %1899 = vmatpush2.msra.mxu0 0.0
      %1900 = vmatprep.subr.mxu0 0.0
      %1901 = vmatpush2.msra.mxu0 0.0
      %1902 = vmatprep.subr.mxu0 0.0
      %1903 = vmatpush2.msra.mxu0 0.0
      %1904 = vmatprep.subr.mxu0 0.0
      %1905 = vmatpush2.msra.mxu0 0.0
      %1906 = vmatprep.subr.mxu0 0.0
      %1907 = vmatpush2.msra.mxu0 0.0
      %1908 = vmatprep.subr.mxu0 0.0
      %1909 = vmatpush2.msra.mxu0 0.0
      %1910 = vmatprep.subr.mxu0 0.0
      %1911 = vmatpush2.msra.mxu0 0.0
      %1912 = vmatprep.subr.mxu0 0.0
      %1913 = vmatpush2.msra.mxu0 0.0
      %1914 = vmatprep.subr.mxu0 0.0
      %1915 = vmatpush2.msra.mxu0 0.0
      %1916 = vmatprep.subr.mxu0 0.0
      %1917 = vmatpush2.msra.mxu0 0.0
      %1918 = vmatprep.subr.mxu0 0.0
      %1919 = vmatpush2.msra.mxu0 0.0
      %1920 = vmatprep.mubr.f32.mxu0 0.0
      %v1921 = vand.u32 %v1282, 4294901760
      %v1922 = vsub.f32 %v1282, %v1921
      %v1923 = vand.u32 %v1922, 4294901760
      %v1924 = vsub.f32 %v1922, %v1923
      %v1925 = vand.u32 %v1924, 4294901760
      %1926 = vmatmul.mubr.f32.gmra.mxu0 %v1925
      %v1927 = vpop.f32.mrf.mxu0
      %v1928 = vadd.f32 0.0, %v1927
      %v1929 = vpop.f32.mrf.mxu0
      %1930 = vdwg.mxu0
      %1931 = vmatprep.subr.mxu0 0.0
      %1932 = vmatpush1.msra.mxu0 0.0
      %1933 = vmatprep.subr.mxu0 0.0
      %1934 = vmatpush1.msra.mxu0 0.0
      %1935 = vmatprep.subr.mxu0 0.0
      %1936 = vmatpush1.msra.mxu0 0.0
      %1937 = vmatprep.subr.mxu0 0.0
      %1938 = vmatpush1.msra.mxu0 0.0
      %1939 = vmatprep.subr.mxu0 0.0
      %1940 = vmatpush1.msra.mxu0 0.0
      %1941 = vmatprep.subr.mxu0 0.0
      %1942 = vmatpush1.msra.mxu0 0.0
      %1943 = vmatprep.subr.mxu0 0.0
      %1944 = vmatpush1.msra.mxu0 0.0
      %1945 = vmatprep.subr.mxu0 0.0
      %1946 = vmatpush1.msra.mxu0 0.0
      %1947 = vmatprep.subr.mxu0 0.0
      %1948 = vmatpush1.msra.mxu0 0.0
      %1949 = vmatprep.subr.mxu0 0.0
      %1950 = vmatpush1.msra.mxu0 0.0
      %1951 = vmatprep.subr.mxu0 0.0
      %1952 = vmatpush1.msra.mxu0 0.0
      %1953 = vmatprep.subr.mxu0 0.0
      %1954 = vmatpush1.msra.mxu0 0.0
      %1955 = vmatprep.subr.mxu0 0.0
      %v1956 = vand.u32 %v1847, 4294901760
      %v1957 = vsub.f32 %v1847, %v1956
      %v1958 = vand.u32 %v1957, 4294901760
      %v1959 = vsub.f32 %v1957, %v1958
      %v1960 = vand.u32 %v1959, 4294901760
      %1961 = vmatpush1.msra.mxu0 %v1960
      %1962 = vmatprep.subr.mxu0 0.0
      %v1963 = vand.u32 %v1840, 4294901760
      %v1964 = vsub.f32 %v1840, %v1963
      %v1965 = vand.u32 %v1964, 4294901760
      %v1966 = vsub.f32 %v1964, %v1965
      %v1967 = vand.u32 %v1966, 4294901760
      %1968 = vmatpush1.msra.mxu0 %v1967
      %1969 = vmatprep.subr.mxu0 0.0
      %v1970 = vand.u32 %v1833, 4294901760
      %v1971 = vsub.f32 %v1833, %v1970
      %v1972 = vand.u32 %v1971, 4294901760
      %v1973 = vsub.f32 %v1971, %v1972
      %v1974 = vand.u32 %v1973, 4294901760
      %1975 = vmatpush1.msra.mxu0 %v1974
      %1976 = vmatprep.subr.mxu0 0.0
      %v1977 = vand.u32 %v1826, 4294901760
      %v1978 = vsub.f32 %v1826, %v1977
      %v1979 = vand.u32 %v1978, 4294901760
      %v1980 = vsub.f32 %v1978, %v1979
      %v1981 = vand.u32 %v1980, 4294901760
      %1982 = vmatpush1.msra.mxu0 %v1981
      %1983 = vmatprep.subr.mxu0 0.0
      %1984 = vmatpush2.msra.mxu0 0.0
      %1985 = vmatprep.subr.mxu0 0.0
      %1986 = vmatpush2.msra.mxu0 0.0
      %1987 = vmatprep.subr.mxu0 0.0
      %1988 = vmatpush2.msra.mxu0 0.0
      %1989 = vmatprep.subr.mxu0 0.0
      %1990 = vmatpush2.msra.mxu0 0.0
      %1991 = vmatprep.subr.mxu0 0.0
      %1992 = vmatpush2.msra.mxu0 0.0
      %1993 = vmatprep.subr.mxu0 0.0
      %1994 = vmatpush2.msra.mxu0 0.0
      %1995 = vmatprep.subr.mxu0 0.0
      %1996 = vmatpush2.msra.mxu0 0.0
      %1997 = vmatprep.subr.mxu0 0.0
      %1998 = vmatpush2.msra.mxu0 0.0
      %1999 = vmatprep.subr.mxu0 0.0
      %2000 = vmatpush2.msra.mxu0 0.0
      %2001 = vmatprep.subr.mxu0 0.0
      %2002 = vmatpush2.msra.mxu0 0.0
      %2003 = vmatprep.subr.mxu0 0.0
      %2004 = vmatpush2.msra.mxu0 0.0
      %2005 = vmatprep.subr.mxu0 0.0
      %2006 = vmatpush2.msra.mxu0 0.0
      %2007 = vmatprep.subr.mxu0 0.0
      %2008 = vmatpush2.msra.mxu0 0.0
      %2009 = vmatprep.subr.mxu0 0.0
      %2010 = vmatpush2.msra.mxu0 0.0
      %2011 = vmatprep.subr.mxu0 0.0
      %2012 = vmatpush2.msra.mxu0 0.0
      %2013 = vmatprep.subr.mxu0 0.0
      %2014 = vmatpush2.msra.mxu0 0.0
      %2015 = vmatprep.mubr.f32.mxu0 0.0
      %v2016 = vand.u32 %v1282, 4294901760
      %2017 = vmatmul.mubr.f32.gmra.mxu0 %v2016
      %v2018 = vpop.f32.mrf.mxu0
      %v2019 = vadd.f32 %v1928, %v2018
      %v2020 = vpop.f32.mrf.mxu0
      %2021 = vdwg.mxu0
      %2022 = vmatprep.subr.mxu0 0.0
      %2023 = vmatpush1.msra.mxu0 0.0
      %2024 = vmatprep.subr.mxu0 0.0
      %2025 = vmatpush1.msra.mxu0 0.0
      %2026 = vmatprep.subr.mxu0 0.0
      %2027 = vmatpush1.msra.mxu0 0.0
      %2028 = vmatprep.subr.mxu0 0.0
      %2029 = vmatpush1.msra.mxu0 0.0
      %2030 = vmatprep.subr.mxu0 0.0
      %2031 = vmatpush1.msra.mxu0 0.0
      %2032 = vmatprep.subr.mxu0 0.0
      %2033 = vmatpush1.msra.mxu0 0.0
      %2034 = vmatprep.subr.mxu0 0.0
      %2035 = vmatpush1.msra.mxu0 0.0
      %2036 = vmatprep.subr.mxu0 0.0
      %2037 = vmatpush1.msra.mxu0 0.0
      %2038 = vmatprep.subr.mxu0 0.0
      %2039 = vmatpush1.msra.mxu0 0.0
      %2040 = vmatprep.subr.mxu0 0.0
      %2041 = vmatpush1.msra.mxu0 0.0
      %2042 = vmatprep.subr.mxu0 0.0
      %2043 = vmatpush1.msra.mxu0 0.0
      %2044 = vmatprep.subr.mxu0 0.0
      %2045 = vmatpush1.msra.mxu0 0.0
      %2046 = vmatprep.subr.mxu0 0.0
      %v2047 = vand.u32 %v1847, 4294901760
      %v2048 = vsub.f32 %v1847, %v2047
      %2049 = vmatpush1.msra.mxu0 %v2048
      %2050 = vmatprep.subr.mxu0 0.0
      %v2051 = vand.u32 %v1840, 4294901760
      %v2052 = vsub.f32 %v1840, %v2051
      %2053 = vmatpush1.msra.mxu0 %v2052
      %2054 = vmatprep.subr.mxu0 0.0
      %v2055 = vand.u32 %v1833, 4294901760
      %v2056 = vsub.f32 %v1833, %v2055
      %2057 = vmatpush1.msra.mxu0 %v2056
      %2058 = vmatprep.subr.mxu0 0.0
      %v2059 = vand.u32 %v1826, 4294901760
      %v2060 = vsub.f32 %v1826, %v2059
      %2061 = vmatpush1.msra.mxu0 %v2060
      %2062 = vmatprep.subr.mxu0 0.0
      %2063 = vmatpush2.msra.mxu0 0.0
      %2064 = vmatprep.subr.mxu0 0.0
      %2065 = vmatpush2.msra.mxu0 0.0
      %2066 = vmatprep.subr.mxu0 0.0
      %2067 = vmatpush2.msra.mxu0 0.0
      %2068 = vmatprep.subr.mxu0 0.0
      %2069 = vmatpush2.msra.mxu0 0.0
      %2070 = vmatprep.subr.mxu0 0.0
      %2071 = vmatpush2.msra.mxu0 0.0
      %2072 = vmatprep.subr.mxu0 0.0
      %2073 = vmatpush2.msra.mxu0 0.0
      %2074 = vmatprep.subr.mxu0 0.0
      %2075 = vmatpush2.msra.mxu0 0.0
      %2076 = vmatprep.subr.mxu0 0.0
      %2077 = vmatpush2.msra.mxu0 0.0
      %2078 = vmatprep.subr.mxu0 0.0
      %2079 = vmatpush2.msra.mxu0 0.0
      %2080 = vmatprep.subr.mxu0 0.0
      %2081 = vmatpush2.msra.mxu0 0.0
      %2082 = vmatprep.subr.mxu0 0.0
      %2083 = vmatpush2.msra.mxu0 0.0
      %2084 = vmatprep.subr.mxu0 0.0
      %2085 = vmatpush2.msra.mxu0 0.0
      %2086 = vmatprep.subr.mxu0 0.0
      %2087 = vmatpush2.msra.mxu0 0.0
      %2088 = vmatprep.subr.mxu0 0.0
      %2089 = vmatpush2.msra.mxu0 0.0
      %2090 = vmatprep.subr.mxu0 0.0
      %2091 = vmatpush2.msra.mxu0 0.0
      %2092 = vmatprep.subr.mxu0 0.0
      %2093 = vmatpush2.msra.mxu0 0.0
      %2094 = vmatprep.mubr.f32.mxu0 0.0
      %v2095 = vand.u32 %v1282, 4294901760
      %v2096 = vsub.f32 %v1282, %v2095
      %2097 = vmatmul.mubr.f32.gmra.mxu0 %v2096
      %v2098 = vpop.f32.mrf.mxu0
      %v2099 = vadd.f32 %v2019, %v2098
      %v2100 = vpop.f32.mrf.mxu0
      %2101 = vdwg.mxu0
      %2102 = vmatprep.subr.mxu0 0.0
      %2103 = vmatpush1.msra.mxu0 0.0
      %2104 = vmatprep.subr.mxu0 0.0
      %2105 = vmatpush1.msra.mxu0 0.0
      %2106 = vmatprep.subr.mxu0 0.0
      %2107 = vmatpush1.msra.mxu0 0.0
      %2108 = vmatprep.subr.mxu0 0.0
      %2109 = vmatpush1.msra.mxu0 0.0
      %2110 = vmatprep.subr.mxu0 0.0
      %2111 = vmatpush1.msra.mxu0 0.0
      %2112 = vmatprep.subr.mxu0 0.0
      %2113 = vmatpush1.msra.mxu0 0.0
      %2114 = vmatprep.subr.mxu0 0.0
      %2115 = vmatpush1.msra.mxu0 0.0
      %2116 = vmatprep.subr.mxu0 0.0
      %2117 = vmatpush1.msra.mxu0 0.0
      %2118 = vmatprep.subr.mxu0 0.0
      %2119 = vmatpush1.msra.mxu0 0.0
      %2120 = vmatprep.subr.mxu0 0.0
      %2121 = vmatpush1.msra.mxu0 0.0
      %2122 = vmatprep.subr.mxu0 0.0
      %2123 = vmatpush1.msra.mxu0 0.0
      %2124 = vmatprep.subr.mxu0 0.0
      %2125 = vmatpush1.msra.mxu0 0.0
      %2126 = vmatprep.subr.mxu0 0.0
      %v2127 = vand.u32 %v1847, 4294901760
      %2128 = vmatpush1.msra.mxu0 %v2127
      %2129 = vmatprep.subr.mxu0 0.0
      %v2130 = vand.u32 %v1840, 4294901760
      %2131 = vmatpush1.msra.mxu0 %v2130
      %2132 = vmatprep.subr.mxu0 0.0
      %v2133 = vand.u32 %v1833, 4294901760
      %2134 = vmatpush1.msra.mxu0 %v2133
      %2135 = vmatprep.subr.mxu0 0.0
      %v2136 = vand.u32 %v1826, 4294901760
      %2137 = vmatpush1.msra.mxu0 %v2136
      %2138 = vmatprep.subr.mxu0 0.0
      %2139 = vmatpush2.msra.mxu0 0.0
      %2140 = vmatprep.subr.mxu0 0.0
      %2141 = vmatpush2.msra.mxu0 0.0
      %2142 = vmatprep.subr.mxu0 0.0
      %2143 = vmatpush2.msra.mxu0 0.0
      %2144 = vmatprep.subr.mxu0 0.0
      %2145 = vmatpush2.msra.mxu0 0.0
      %2146 = vmatprep.subr.mxu0 0.0
      %2147 = vmatpush2.msra.mxu0 0.0
      %2148 = vmatprep.subr.mxu0 0.0
      %2149 = vmatpush2.msra.mxu0 0.0
      %2150 = vmatprep.subr.mxu0 0.0
      %2151 = vmatpush2.msra.mxu0 0.0
      %2152 = vmatprep.subr.mxu0 0.0
      %2153 = vmatpush2.msra.mxu0 0.0
      %2154 = vmatprep.subr.mxu0 0.0
      %2155 = vmatpush2.msra.mxu0 0.0
      %2156 = vmatprep.subr.mxu0 0.0
      %2157 = vmatpush2.msra.mxu0 0.0
      %2158 = vmatprep.subr.mxu0 0.0
      %2159 = vmatpush2.msra.mxu0 0.0
      %2160 = vmatprep.subr.mxu0 0.0
      %2161 = vmatpush2.msra.mxu0 0.0
      %2162 = vmatprep.subr.mxu0 0.0
      %2163 = vmatpush2.msra.mxu0 0.0
      %2164 = vmatprep.subr.mxu0 0.0
      %2165 = vmatpush2.msra.mxu0 0.0
      %2166 = vmatprep.subr.mxu0 0.0
      %2167 = vmatpush2.msra.mxu0 0.0
      %2168 = vmatprep.subr.mxu0 0.0
      %2169 = vmatpush2.msra.mxu0 0.0
      %2170 = vmatprep.mubr.f32.mxu0 0.0
      %v2171 = vand.u32 %v1282, 4294901760
      %v2172 = vsub.f32 %v1282, %v2171
      %v2173 = vand.u32 %v2172, 4294901760
      %2174 = vmatmul.mubr.f32.gmra.mxu0 %v2173
      %v2175 = vpop.f32.mrf.mxu0
      %v2176 = vadd.f32 %v2099, %v2175
      %v2177 = vpop.f32.mrf.mxu0
      %2178 = vdwg.mxu0
      %2179 = vmatprep.subr.mxu0 0.0
      %2180 = vmatpush1.msra.mxu0 0.0
      %2181 = vmatprep.subr.mxu0 0.0
      %2182 = vmatpush1.msra.mxu0 0.0
      %2183 = vmatprep.subr.mxu0 0.0
      %2184 = vmatpush1.msra.mxu0 0.0
      %2185 = vmatprep.subr.mxu0 0.0
      %2186 = vmatpush1.msra.mxu0 0.0
      %2187 = vmatprep.subr.mxu0 0.0
      %2188 = vmatpush1.msra.mxu0 0.0
      %2189 = vmatprep.subr.mxu0 0.0
      %2190 = vmatpush1.msra.mxu0 0.0
      %2191 = vmatprep.subr.mxu0 0.0
      %2192 = vmatpush1.msra.mxu0 0.0
      %2193 = vmatprep.subr.mxu0 0.0
      %2194 = vmatpush1.msra.mxu0 0.0
      %2195 = vmatprep.subr.mxu0 0.0
      %2196 = vmatpush1.msra.mxu0 0.0
      %2197 = vmatprep.subr.mxu0 0.0
      %2198 = vmatpush1.msra.mxu0 0.0
      %2199 = vmatprep.subr.mxu0 0.0
      %2200 = vmatpush1.msra.mxu0 0.0
      %2201 = vmatprep.subr.mxu0 0.0
      %2202 = vmatpush1.msra.mxu0 0.0
      %2203 = vmatprep.subr.mxu0 0.0
      %v2204 = vand.u32 %v1847, 4294901760
      %v2205 = vsub.f32 %v1847, %v2204
      %v2206 = vand.u32 %v2205, 4294901760
      %2207 = vmatpush1.msra.mxu0 %v2206
      %2208 = vmatprep.subr.mxu0 0.0
      %v2209 = vand.u32 %v1840, 4294901760
      %v2210 = vsub.f32 %v1840, %v2209
      %v2211 = vand.u32 %v2210, 4294901760
      %2212 = vmatpush1.msra.mxu0 %v2211
      %2213 = vmatprep.subr.mxu0 0.0
      %v2214 = vand.u32 %v1833, 4294901760
      %v2215 = vsub.f32 %v1833, %v2214
      %v2216 = vand.u32 %v2215, 4294901760
      %2217 = vmatpush1.msra.mxu0 %v2216
      %2218 = vmatprep.subr.mxu0 0.0
      %v2219 = vand.u32 %v1826, 4294901760
      %v2220 = vsub.f32 %v1826, %v2219
      %v2221 = vand.u32 %v2220, 4294901760
      %2222 = vmatpush1.msra.mxu0 %v2221
      %2223 = vmatprep.subr.mxu0 0.0
      %2224 = vmatpush2.msra.mxu0 0.0
      %2225 = vmatprep.subr.mxu0 0.0
      %2226 = vmatpush2.msra.mxu0 0.0
      %2227 = vmatprep.subr.mxu0 0.0
      %2228 = vmatpush2.msra.mxu0 0.0
      %2229 = vmatprep.subr.mxu0 0.0
      %2230 = vmatpush2.msra.mxu0 0.0
      %2231 = vmatprep.subr.mxu0 0.0
      %2232 = vmatpush2.msra.mxu0 0.0
      %2233 = vmatprep.subr.mxu0 0.0
      %2234 = vmatpush2.msra.mxu0 0.0
      %2235 = vmatprep.subr.mxu0 0.0
      %2236 = vmatpush2.msra.mxu0 0.0
      %2237 = vmatprep.subr.mxu0 0.0
      %2238 = vmatpush2.msra.mxu0 0.0
      %2239 = vmatprep.subr.mxu0 0.0
      %2240 = vmatpush2.msra.mxu0 0.0
      %2241 = vmatprep.subr.mxu0 0.0
      %2242 = vmatpush2.msra.mxu0 0.0
      %2243 = vmatprep.subr.mxu0 0.0
      %2244 = vmatpush2.msra.mxu0 0.0
      %2245 = vmatprep.subr.mxu0 0.0
      %2246 = vmatpush2.msra.mxu0 0.0
      %2247 = vmatprep.subr.mxu0 0.0
      %2248 = vmatpush2.msra.mxu0 0.0
      %2249 = vmatprep.subr.mxu0 0.0
      %2250 = vmatpush2.msra.mxu0 0.0
      %2251 = vmatprep.subr.mxu0 0.0
      %2252 = vmatpush2.msra.mxu0 0.0
      %2253 = vmatprep.subr.mxu0 0.0
      %2254 = vmatpush2.msra.mxu0 0.0
      %2255 = vmatprep.mubr.f32.mxu0 0.0
      %v2256 = vand.u32 %v1282, 4294901760
      %2257 = vmatmul.mubr.f32.gmra.mxu0 %v2256
      %v2258 = vpop.f32.mrf.mxu0
      %v2259 = vadd.f32 %v2176, %v2258
      %v2260 = vpop.f32.mrf.mxu0
      %2261 = vdwg.mxu0
      %2262 = vmatprep.subr.mxu0 0.0
      %2263 = vmatpush1.msra.mxu0 0.0
      %2264 = vmatprep.subr.mxu0 0.0
      %2265 = vmatpush1.msra.mxu0 0.0
      %2266 = vmatprep.subr.mxu0 0.0
      %2267 = vmatpush1.msra.mxu0 0.0
      %2268 = vmatprep.subr.mxu0 0.0
      %2269 = vmatpush1.msra.mxu0 0.0
      %2270 = vmatprep.subr.mxu0 0.0
      %2271 = vmatpush1.msra.mxu0 0.0
      %2272 = vmatprep.subr.mxu0 0.0
      %2273 = vmatpush1.msra.mxu0 0.0
      %2274 = vmatprep.subr.mxu0 0.0
      %2275 = vmatpush1.msra.mxu0 0.0
      %2276 = vmatprep.subr.mxu0 0.0
      %2277 = vmatpush1.msra.mxu0 0.0
      %2278 = vmatprep.subr.mxu0 0.0
      %2279 = vmatpush1.msra.mxu0 0.0
      %2280 = vmatprep.subr.mxu0 0.0
      %2281 = vmatpush1.msra.mxu0 0.0
      %2282 = vmatprep.subr.mxu0 0.0
      %2283 = vmatpush1.msra.mxu0 0.0
      %2284 = vmatprep.subr.mxu0 0.0
      %2285 = vmatpush1.msra.mxu0 0.0
      %2286 = vmatprep.subr.mxu0 0.0
      %v2287 = vand.u32 %v1847, 4294901760
      %2288 = vmatpush1.msra.mxu0 %v2287
      %2289 = vmatprep.subr.mxu0 0.0
      %v2290 = vand.u32 %v1840, 4294901760
      %2291 = vmatpush1.msra.mxu0 %v2290
      %2292 = vmatprep.subr.mxu0 0.0
      %v2293 = vand.u32 %v1833, 4294901760
      %2294 = vmatpush1.msra.mxu0 %v2293
      %2295 = vmatprep.subr.mxu0 0.0
      %v2296 = vand.u32 %v1826, 4294901760
      %2297 = vmatpush1.msra.mxu0 %v2296
      %2298 = vmatprep.subr.mxu0 0.0
      %2299 = vmatpush2.msra.mxu0 0.0
      %2300 = vmatprep.subr.mxu0 0.0
      %2301 = vmatpush2.msra.mxu0 0.0
      %2302 = vmatprep.subr.mxu0 0.0
      %2303 = vmatpush2.msra.mxu0 0.0
      %2304 = vmatprep.subr.mxu0 0.0
      %2305 = vmatpush2.msra.mxu0 0.0
      %2306 = vmatprep.subr.mxu0 0.0
      %2307 = vmatpush2.msra.mxu0 0.0
      %2308 = vmatprep.subr.mxu0 0.0
      %2309 = vmatpush2.msra.mxu0 0.0
      %2310 = vmatprep.subr.mxu0 0.0
      %2311 = vmatpush2.msra.mxu0 0.0
      %2312 = vmatprep.subr.mxu0 0.0
      %2313 = vmatpush2.msra.mxu0 0.0
      %2314 = vmatprep.subr.mxu0 0.0
      %2315 = vmatpush2.msra.mxu0 0.0
      %2316 = vmatprep.subr.mxu0 0.0
      %2317 = vmatpush2.msra.mxu0 0.0
      %2318 = vmatprep.subr.mxu0 0.0
      %2319 = vmatpush2.msra.mxu0 0.0
      %2320 = vmatprep.subr.mxu0 0.0
      %2321 = vmatpush2.msra.mxu0 0.0
      %2322 = vmatprep.subr.mxu0 0.0
      %2323 = vmatpush2.msra.mxu0 0.0
      %2324 = vmatprep.subr.mxu0 0.0
      %2325 = vmatpush2.msra.mxu0 0.0
      %2326 = vmatprep.subr.mxu0 0.0
      %2327 = vmatpush2.msra.mxu0 0.0
      %2328 = vmatprep.subr.mxu0 0.0
      %2329 = vmatpush2.msra.mxu0 0.0
      %2330 = vmatprep.mubr.f32.mxu0 0.0
      %v2331 = vand.u32 %v1282, 4294901760
      %2332 = vmatmul.mubr.f32.gmra.mxu0 %v2331
      %v2333 = vpop.f32.mrf.mxu0
      %v2334 = vadd.f32 %v2259, %v2333
      %v2335 = vpop.f32.mrf.mxu0
      %2336 = vdwg.mxu0
      %v2337 = vmul.f32 %v2334, %v1773
      %v2338 = vadd.f32 %v2337, %v1780
      %v2339 = vadd.f32 %v2338, 3.0
      %v2340 = vmax.f32 %v2339, 0.0
      %v2341 = vmin.f32 %v2340, 6.0
      %v2342 = vmul.f32 %v2341, 0.16666667
      %v2343 = vmul.f32 %v2338, %v2342
      %v2344 = vld [vmem:[%s4] sm:$0xff]
      %v2345 = vld [vmem:[%s4 + $0x8] sm:$0xff]
      %v2346 = vld [vmem:[%s4 + $0x10] sm:$0xff]
      %v2347 = vld [vmem:[%s4 + $0x18] sm:$0xff]
      %v2348 = vld [vmem:[%s5] sm:$0xff]
      %v2349 = vld [vmem:[%s5 + $0x8] sm:$0xff]
      %v2350 = vld [vmem:[%s5 + $0x10] sm:$0xff]
      %v2351 = vld [vmem:[%s5 + $0x18] sm:$0xff]
      %2353 = vset.pattern.permute.xlu0 0
      %2354 = vperm.xlu0 %2353, %v2348
      %v2355 = vpop.permute.xlu0 %2354
      %2358 = vset.pattern.permute.xlu0 0
      %2359 = vperm.xlu0 %2358, %v2349
      %v2360 = vpop.permute.xlu0 %2359
      %2363 = vset.pattern.permute.xlu0 0
      %2364 = vperm.xlu0 %2363, %v2350
      %v2365 = vpop.permute.xlu0 %2364
      %2368 = vset.pattern.permute.xlu0 0
      %2369 = vperm.xlu0 %2368, %v2351
      %v2370 = vpop.permute.xlu0 %2369
      %vm2372 = vcmask 64512
      %v2374 = vsel %vm2372, %v2344, 0
      %v2377 = vsel %vm2372, %v2345, 0
      %v2380 = vsel %vm2372, %v2346, 0
      %v2383 = vsel %vm2372, %v2347, 0
      %2385 = vmatprep.subr.mxu0 0.0
      %2386 = vmatpush1.msra.mxu0 0.0
      %2387 = vmatprep.subr.mxu0 0.0
      %2388 = vmatpush1.msra.mxu0 0.0
      %2389 = vmatprep.subr.mxu0 0.0
      %2390 = vmatpush1.msra.mxu0 0.0
      %2391 = vmatprep.subr.mxu0 0.0
      %2392 = vmatpush1.msra.mxu0 0.0
      %2393 = vmatprep.subr.mxu0 0.0
      %2394 = vmatpush1.msra.mxu0 0.0
      %2395 = vmatprep.subr.mxu0 0.0
      %2396 = vmatpush1.msra.mxu0 0.0
      %2397 = vmatprep.subr.mxu0 0.0
      %2398 = vmatpush1.msra.mxu0 0.0
      %2399 = vmatprep.subr.mxu0 0.0
      %2400 = vmatpush1.msra.mxu0 0.0
      %2401 = vmatprep.subr.mxu0 0.0
      %2402 = vmatpush1.msra.mxu0 0.0
      %2403 = vmatprep.subr.mxu0 0.0
      %2404 = vmatpush1.msra.mxu0 0.0
      %2405 = vmatprep.subr.mxu0 0.0
      %2406 = vmatpush1.msra.mxu0 0.0
      %2407 = vmatprep.subr.mxu0 0.0
      %2408 = vmatpush1.msra.mxu0 0.0
      %2409 = vmatprep.subr.mxu0 0.0
      %2410 = vmatpush1.msra.mxu0 0.0
      %2411 = vmatprep.subr.mxu0 0.0
      %2412 = vmatpush1.msra.mxu0 0.0
      %2413 = vmatprep.subr.mxu0 0.0
      %2414 = vmatpush1.msra.mxu0 0.0
      %2415 = vmatprep.subr.mxu0 0.0
      %v2416 = vand.u32 %v1787, 4294901760
      %2417 = vmatpush1.msra.mxu0 %v2416
      %2418 = vmatprep.subr.mxu0 0.0
      %2419 = vmatpush2.msra.mxu0 0.0
      %2420 = vmatprep.subr.mxu0 0.0
      %2421 = vmatpush2.msra.mxu0 0.0
      %2422 = vmatprep.subr.mxu0 0.0
      %2423 = vmatpush2.msra.mxu0 0.0
      %2424 = vmatprep.subr.mxu0 0.0
      %2425 = vmatpush2.msra.mxu0 0.0
      %2426 = vmatprep.subr.mxu0 0.0
      %2427 = vmatpush2.msra.mxu0 0.0
      %2428 = vmatprep.subr.mxu0 0.0
      %2429 = vmatpush2.msra.mxu0 0.0
      %2430 = vmatprep.subr.mxu0 0.0
      %2431 = vmatpush2.msra.mxu0 0.0
      %2432 = vmatprep.subr.mxu0 0.0
      %2433 = vmatpush2.msra.mxu0 0.0
      %2434 = vmatprep.subr.mxu0 0.0
      %2435 = vmatpush2.msra.mxu0 0.0
      %2436 = vmatprep.subr.mxu0 0.0
      %2437 = vmatpush2.msra.mxu0 0.0
      %2438 = vmatprep.subr.mxu0 0.0
      %2439 = vmatpush2.msra.mxu0 0.0
      %2440 = vmatprep.subr.mxu0 0.0
      %2441 = vmatpush2.msra.mxu0 0.0
      %2442 = vmatprep.subr.mxu0 0.0
      %2443 = vmatpush2.msra.mxu0 0.0
      %2444 = vmatprep.subr.mxu0 0.0
      %2445 = vmatpush2.msra.mxu0 0.0
      %2446 = vmatprep.subr.mxu0 0.0
      %2447 = vmatpush2.msra.mxu0 0.0
      %2448 = vmatprep.subr.mxu0 0.0
      %2449 = vmatpush2.msra.mxu0 0.0
      %2450 = vmatprep.mubr.f32.mxu0 0.0
      %v2451 = vand.u32 %v2374, 4294901760
      %v2452 = vsub.f32 %v2374, %v2451
      %v2453 = vand.u32 %v2452, 4294901760
      %v2454 = vsub.f32 %v2452, %v2453
      %v2455 = vand.u32 %v2454, 4294901760
      %2456 = vmatmul.mubr.f32.gmra.mxu0 %v2455
      %v2457 = vpop.f32.mrf.mxu0
      %v2458 = vadd.f32 %v2355, %v2457
      %v2459 = vpop.f32.mrf.mxu0
      %2460 = vmatprep.mubr.f32.mxu0 0.0
      %v2461 = vand.u32 %v2377, 4294901760
      %v2462 = vsub.f32 %v2377, %v2461
      %v2463 = vand.u32 %v2462, 4294901760
      %v2464 = vsub.f32 %v2462, %v2463
      %v2465 = vand.u32 %v2464, 4294901760
      %2466 = vmatmul.mubr.f32.gmra.mxu0 %v2465
      %v2467 = vpop.f32.mrf.mxu0
      %v2468 = vadd.f32 %v2360, %v2467
      %v2469 = vpop.f32.mrf.mxu0
      %2470 = vmatprep.mubr.f32.mxu0 0.0
      %v2471 = vand.u32 %v2380, 4294901760
      %v2472 = vsub.f32 %v2380, %v2471
      %v2473 = vand.u32 %v2472, 4294901760
      %v2474 = vsub.f32 %v2472, %v2473
      %v2475 = vand.u32 %v2474, 4294901760
      %2476 = vmatmul.mubr.f32.gmra.mxu0 %v2475
      %v2477 = vpop.f32.mrf.mxu0
      %v2478 = vadd.f32 %v2365, %v2477
      %v2479 = vpop.f32.mrf.mxu0
      %2480 = vmatprep.mubr.f32.mxu0 0.0
      %v2481 = vand.u32 %v2383, 4294901760
      %v2482 = vsub.f32 %v2383, %v2481
      %v2483 = vand.u32 %v2482, 4294901760
      %v2484 = vsub.f32 %v2482, %v2483
      %v2485 = vand.u32 %v2484, 4294901760
      %2486 = vmatmul.mubr.f32.gmra.mxu0 %v2485
      %v2487 = vpop.f32.mrf.mxu0
      %v2488 = vadd.f32 %v2370, %v2487
      %v2489 = vpop.f32.mrf.mxu0
      %2490 = vdwg.mxu0
      %2491 = vmatprep.subr.mxu0 0.0
      %2492 = vmatpush1.msra.mxu0 0.0
      %2493 = vmatprep.subr.mxu0 0.0
      %2494 = vmatpush1.msra.mxu0 0.0
      %2495 = vmatprep.subr.mxu0 0.0
      %2496 = vmatpush1.msra.mxu0 0.0
      %2497 = vmatprep.subr.mxu0 0.0
      %2498 = vmatpush1.msra.mxu0 0.0
      %2499 = vmatprep.subr.mxu0 0.0
      %2500 = vmatpush1.msra.mxu0 0.0
      %2501 = vmatprep.subr.mxu0 0.0
      %2502 = vmatpush1.msra.mxu0 0.0
      %2503 = vmatprep.subr.mxu0 0.0
      %2504 = vmatpush1.msra.mxu0 0.0
      %2505 = vmatprep.subr.mxu0 0.0
      %2506 = vmatpush1.msra.mxu0 0.0
      %2507 = vmatprep.subr.mxu0 0.0
      %2508 = vmatpush1.msra.mxu0 0.0
      %2509 = vmatprep.subr.mxu0 0.0
      %2510 = vmatpush1.msra.mxu0 0.0
      %2511 = vmatprep.subr.mxu0 0.0
      %2512 = vmatpush1.msra.mxu0 0.0
      %2513 = vmatprep.subr.mxu0 0.0
      %2514 = vmatpush1.msra.mxu0 0.0
      %2515 = vmatprep.subr.mxu0 0.0
      %2516 = vmatpush1.msra.mxu0 0.0
      %2517 = vmatprep.subr.mxu0 0.0
      %2518 = vmatpush1.msra.mxu0 0.0
      %2519 = vmatprep.subr.mxu0 0.0
      %2520 = vmatpush1.msra.mxu0 0.0
      %2521 = vmatprep.subr.mxu0 0.0
      %v2522 = vand.u32 %v1787, 4294901760
      %v2523 = vsub.f32 %v1787, %v2522
      %v2524 = vand.u32 %v2523, 4294901760
      %v2525 = vsub.f32 %v2523, %v2524
      %v2526 = vand.u32 %v2525, 4294901760
      %2527 = vmatpush1.msra.mxu0 %v2526
      %2528 = vmatprep.subr.mxu0 0.0
      %2529 = vmatpush2.msra.mxu0 0.0
      %2530 = vmatprep.subr.mxu0 0.0
      %2531 = vmatpush2.msra.mxu0 0.0
      %2532 = vmatprep.subr.mxu0 0.0
      %2533 = vmatpush2.msra.mxu0 0.0
      %2534 = vmatprep.subr.mxu0 0.0
      %2535 = vmatpush2.msra.mxu0 0.0
      %2536 = vmatprep.subr.mxu0 0.0
      %2537 = vmatpush2.msra.mxu0 0.0
      %2538 = vmatprep.subr.mxu0 0.0
      %2539 = vmatpush2.msra.mxu0 0.0
      %2540 = vmatprep.subr.mxu0 0.0
      %2541 = vmatpush2.msra.mxu0 0.0
      %2542 = vmatprep.subr.mxu0 0.0
      %2543 = vmatpush2.msra.mxu0 0.0
      %2544 = vmatprep.subr.mxu0 0.0
      %2545 = vmatpush2.msra.mxu0 0.0
      %2546 = vmatprep.subr.mxu0 0.0
      %2547 = vmatpush2.msra.mxu0 0.0
      %2548 = vmatprep.subr.mxu0 0.0
      %2549 = vmatpush2.msra.mxu0 0.0
      %2550 = vmatprep.subr.mxu0 0.0
      %2551 = vmatpush2.msra.mxu0 0.0
      %2552 = vmatprep.subr.mxu0 0.0
      %2553 = vmatpush2.msra.mxu0 0.0
      %2554 = vmatprep.subr.mxu0 0.0
      %2555 = vmatpush2.msra.mxu0 0.0
      %2556 = vmatprep.subr.mxu0 0.0
      %2557 = vmatpush2.msra.mxu0 0.0
      %2558 = vmatprep.subr.mxu0 0.0
      %2559 = vmatpush2.msra.mxu0 0.0
      %2560 = vmatprep.mubr.f32.mxu0 0.0
      %v2561 = vand.u32 %v2374, 4294901760
      %2562 = vmatmul.mubr.f32.gmra.mxu0 %v2561
      %v2563 = vpop.f32.mrf.mxu0
      %v2564 = vadd.f32 %v2458, %v2563
      %v2565 = vpop.f32.mrf.mxu0
      %2566 = vmatprep.mubr.f32.mxu0 0.0
      %v2567 = vand.u32 %v2377, 4294901760
      %2568 = vmatmul.mubr.f32.gmra.mxu0 %v2567
      %v2569 = vpop.f32.mrf.mxu0
      %v2570 = vadd.f32 %v2468, %v2569
      %v2571 = vpop.f32.mrf.mxu0
      %2572 = vmatprep.mubr.f32.mxu0 0.0
      %v2573 = vand.u32 %v2380, 4294901760
      %2574 = vmatmul.mubr.f32.gmra.mxu0 %v2573
      %v2575 = vpop.f32.mrf.mxu0
      %v2576 = vadd.f32 %v2478, %v2575
      %v2577 = vpop.f32.mrf.mxu0
      %2578 = vmatprep.mubr.f32.mxu0 0.0
      %v2579 = vand.u32 %v2383, 4294901760
      %2580 = vmatmul.mubr.f32.gmra.mxu0 %v2579
      %v2581 = vpop.f32.mrf.mxu0
      %v2582 = vadd.f32 %v2488, %v2581
      %v2583 = vpop.f32.mrf.mxu0
      %2584 = vdwg.mxu0
      %2585 = vmatprep.subr.mxu0 0.0
      %2586 = vmatpush1.msra.mxu0 0.0
      %2587 = vmatprep.subr.mxu0 0.0
      %2588 = vmatpush1.msra.mxu0 0.0
      %2589 = vmatprep.subr.mxu0 0.0
      %2590 = vmatpush1.msra.mxu0 0.0
      %2591 = vmatprep.subr.mxu0 0.0
      %2592 = vmatpush1.msra.mxu0 0.0
      %2593 = vmatprep.subr.mxu0 0.0
      %2594 = vmatpush1.msra.mxu0 0.0
      %2595 = vmatprep.subr.mxu0 0.0
      %2596 = vmatpush1.msra.mxu0 0.0
      %2597 = vmatprep.subr.mxu0 0.0
      %2598 = vmatpush1.msra.mxu0 0.0
      %2599 = vmatprep.subr.mxu0 0.0
      %2600 = vmatpush1.msra.mxu0 0.0
      %2601 = vmatprep.subr.mxu0 0.0
      %2602 = vmatpush1.msra.mxu0 0.0
      %2603 = vmatprep.subr.mxu0 0.0
      %2604 = vmatpush1.msra.mxu0 0.0
      %2605 = vmatprep.subr.mxu0 0.0
      %2606 = vmatpush1.msra.mxu0 0.0
      %2607 = vmatprep.subr.mxu0 0.0
      %2608 = vmatpush1.msra.mxu0 0.0
      %2609 = vmatprep.subr.mxu0 0.0
      %2610 = vmatpush1.msra.mxu0 0.0
      %2611 = vmatprep.subr.mxu0 0.0
      %2612 = vmatpush1.msra.mxu0 0.0
      %2613 = vmatprep.subr.mxu0 0.0
      %2614 = vmatpush1.msra.mxu0 0.0
      %2615 = vmatprep.subr.mxu0 0.0
      %v2616 = vand.u32 %v1787, 4294901760
      %v2617 = vsub.f32 %v1787, %v2616
      %2618 = vmatpush1.msra.mxu0 %v2617
      %2619 = vmatprep.subr.mxu0 0.0
      %2620 = vmatpush2.msra.mxu0 0.0
      %2621 = vmatprep.subr.mxu0 0.0
      %2622 = vmatpush2.msra.mxu0 0.0
      %2623 = vmatprep.subr.mxu0 0.0
      %2624 = vmatpush2.msra.mxu0 0.0
      %2625 = vmatprep.subr.mxu0 0.0
      %2626 = vmatpush2.msra.mxu0 0.0
      %2627 = vmatprep.subr.mxu0 0.0
      %2628 = vmatpush2.msra.mxu0 0.0
      %2629 = vmatprep.subr.mxu0 0.0
      %2630 = vmatpush2.msra.mxu0 0.0
      %2631 = vmatprep.subr.mxu0 0.0
      %2632 = vmatpush2.msra.mxu0 0.0
      %2633 = vmatprep.subr.mxu0 0.0
      %2634 = vmatpush2.msra.mxu0 0.0
      %2635 = vmatprep.subr.mxu0 0.0
      %2636 = vmatpush2.msra.mxu0 0.0
      %2637 = vmatprep.subr.mxu0 0.0
      %2638 = vmatpush2.msra.mxu0 0.0
      %2639 = vmatprep.subr.mxu0 0.0
      %2640 = vmatpush2.msra.mxu0 0.0
      %2641 = vmatprep.subr.mxu0 0.0
      %2642 = vmatpush2.msra.mxu0 0.0
      %2643 = vmatprep.subr.mxu0 0.0
      %2644 = vmatpush2.msra.mxu0 0.0
      %2645 = vmatprep.subr.mxu0 0.0
      %2646 = vmatpush2.msra.mxu0 0.0
      %2647 = vmatprep.subr.mxu0 0.0
      %2648 = vmatpush2.msra.mxu0 0.0
      %2649 = vmatprep.subr.mxu0 0.0
      %2650 = vmatpush2.msra.mxu0 0.0
      %2651 = vmatprep.mubr.f32.mxu0 0.0
      %v2652 = vand.u32 %v2374, 4294901760
      %v2653 = vsub.f32 %v2374, %v2652
      %2654 = vmatmul.mubr.f32.gmra.mxu0 %v2653
      %v2655 = vpop.f32.mrf.mxu0
      %v2656 = vadd.f32 %v2564, %v2655
      %v2657 = vpop.f32.mrf.mxu0
      %2658 = vmatprep.mubr.f32.mxu0 0.0
      %v2659 = vand.u32 %v2377, 4294901760
      %v2660 = vsub.f32 %v2377, %v2659
      %2661 = vmatmul.mubr.f32.gmra.mxu0 %v2660
      %v2662 = vpop.f32.mrf.mxu0
      %v2663 = vadd.f32 %v2570, %v2662
      %v2664 = vpop.f32.mrf.mxu0
      %2665 = vmatprep.mubr.f32.mxu0 0.0
      %v2666 = vand.u32 %v2380, 4294901760
      %v2667 = vsub.f32 %v2380, %v2666
      %2668 = vmatmul.mubr.f32.gmra.mxu0 %v2667
      %v2669 = vpop.f32.mrf.mxu0
      %v2670 = vadd.f32 %v2576, %v2669
      %v2671 = vpop.f32.mrf.mxu0
      %2672 = vmatprep.mubr.f32.mxu0 0.0
      %v2673 = vand.u32 %v2383, 4294901760
      %v2674 = vsub.f32 %v2383, %v2673
      %2675 = vmatmul.mubr.f32.gmra.mxu0 %v2674
      %v2676 = vpop.f32.mrf.mxu0
      %v2677 = vadd.f32 %v2582, %v2676
      %v2678 = vpop.f32.mrf.mxu0
      %2679 = vdwg.mxu0
      %2680 = vmatprep.subr.mxu0 0.0
      %2681 = vmatpush1.msra.mxu0 0.0
      %2682 = vmatprep.subr.mxu0 0.0
      %2683 = vmatpush1.msra.mxu0 0.0
      %2684 = vmatprep.subr.mxu0 0.0
      %2685 = vmatpush1.msra.mxu0 0.0
      %2686 = vmatprep.subr.mxu0 0.0
      %2687 = vmatpush1.msra.mxu0 0.0
      %2688 = vmatprep.subr.mxu0 0.0
      %2689 = vmatpush1.msra.mxu0 0.0
      %2690 = vmatprep.subr.mxu0 0.0
      %2691 = vmatpush1.msra.mxu0 0.0
      %2692 = vmatprep.subr.mxu0 0.0
      %2693 = vmatpush1.msra.mxu0 0.0
      %2694 = vmatprep.subr.mxu0 0.0
      %2695 = vmatpush1.msra.mxu0 0.0
      %2696 = vmatprep.subr.mxu0 0.0
      %2697 = vmatpush1.msra.mxu0 0.0
      %2698 = vmatprep.subr.mxu0 0.0
      %2699 = vmatpush1.msra.mxu0 0.0
      %2700 = vmatprep.subr.mxu0 0.0
      %2701 = vmatpush1.msra.mxu0 0.0
      %2702 = vmatprep.subr.mxu0 0.0
      %2703 = vmatpush1.msra.mxu0 0.0
      %2704 = vmatprep.subr.mxu0 0.0
      %2705 = vmatpush1.msra.mxu0 0.0
      %2706 = vmatprep.subr.mxu0 0.0
      %2707 = vmatpush1.msra.mxu0 0.0
      %2708 = vmatprep.subr.mxu0 0.0
      %2709 = vmatpush1.msra.mxu0 0.0
      %2710 = vmatprep.subr.mxu0 0.0
      %v2711 = vand.u32 %v1787, 4294901760
      %2712 = vmatpush1.msra.mxu0 %v2711
      %2713 = vmatprep.subr.mxu0 0.0
      %2714 = vmatpush2.msra.mxu0 0.0
      %2715 = vmatprep.subr.mxu0 0.0
      %2716 = vmatpush2.msra.mxu0 0.0
      %2717 = vmatprep.subr.mxu0 0.0
      %2718 = vmatpush2.msra.mxu0 0.0
      %2719 = vmatprep.subr.mxu0 0.0
      %2720 = vmatpush2.msra.mxu0 0.0
      %2721 = vmatprep.subr.mxu0 0.0
      %2722 = vmatpush2.msra.mxu0 0.0
      %2723 = vmatprep.subr.mxu0 0.0
      %2724 = vmatpush2.msra.mxu0 0.0
      %2725 = vmatprep.subr.mxu0 0.0
      %2726 = vmatpush2.msra.mxu0 0.0
      %2727 = vmatprep.subr.mxu0 0.0
      %2728 = vmatpush2.msra.mxu0 0.0
      %2729 = vmatprep.subr.mxu0 0.0
      %2730 = vmatpush2.msra.mxu0 0.0
      %2731 = vmatprep.subr.mxu0 0.0
      %2732 = vmatpush2.msra.mxu0 0.0
      %2733 = vmatprep.subr.mxu0 0.0
      %2734 = vmatpush2.msra.mxu0 0.0
      %2735 = vmatprep.subr.mxu0 0.0
      %2736 = vmatpush2.msra.mxu0 0.0
      %2737 = vmatprep.subr.mxu0 0.0
      %2738 = vmatpush2.msra.mxu0 0.0
      %2739 = vmatprep.subr.mxu0 0.0
      %2740 = vmatpush2.msra.mxu0 0.0
      %2741 = vmatprep.subr.mxu0 0.0
      %2742 = vmatpush2.msra.mxu0 0.0
      %2743 = vmatprep.subr.mxu0 0.0
      %2744 = vmatpush2.msra.mxu0 0.0
      %2745 = vmatprep.mubr.f32.mxu0 0.0
      %v2746 = vand.u32 %v2374, 4294901760
      %v2747 = vsub.f32 %v2374, %v2746
      %v2748 = vand.u32 %v2747, 4294901760
      %2749 = vmatmul.mubr.f32.gmra.mxu0 %v2748
      %v2750 = vpop.f32.mrf.mxu0
      %v2751 = vadd.f32 %v2656, %v2750
      %v2752 = vpop.f32.mrf.mxu0
      %2753 = vmatprep.mubr.f32.mxu0 0.0
      %v2754 = vand.u32 %v2377, 4294901760
      %v2755 = vsub.f32 %v2377, %v2754
      %v2756 = vand.u32 %v2755, 4294901760
      %2757 = vmatmul.mubr.f32.gmra.mxu0 %v2756
      %v2758 = vpop.f32.mrf.mxu0
      %v2759 = vadd.f32 %v2663, %v2758
      %v2760 = vpop.f32.mrf.mxu0
      %2761 = vmatprep.mubr.f32.mxu0 0.0
      %v2762 = vand.u32 %v2380, 4294901760
      %v2763 = vsub.f32 %v2380, %v2762
      %v2764 = vand.u32 %v2763, 4294901760
      %2765 = vmatmul.mubr.f32.gmra.mxu0 %v2764
      %v2766 = vpop.f32.mrf.mxu0
      %v2767 = vadd.f32 %v2670, %v2766
      %v2768 = vpop.f32.mrf.mxu0
      %2769 = vmatprep.mubr.f32.mxu0 0.0
      %v2770 = vand.u32 %v2383, 4294901760
      %v2771 = vsub.f32 %v2383, %v2770
      %v2772 = vand.u32 %v2771, 4294901760
      %2773 = vmatmul.mubr.f32.gmra.mxu0 %v2772
      %v2774 = vpop.f32.mrf.mxu0
      %v2775 = vadd.f32 %v2677, %v2774
      %v2776 = vpop.f32.mrf.mxu0
      %2777 = vdwg.mxu0
      %2778 = vmatprep.subr.mxu0 0.0
      %2779 = vmatpush1.msra.mxu0 0.0
      %2780 = vmatprep.subr.mxu0 0.0
      %2781 = vmatpush1.msra.mxu0 0.0
      %2782 = vmatprep.subr.mxu0 0.0
      %2783 = vmatpush1.msra.mxu0 0.0
      %2784 = vmatprep.subr.mxu0 0.0
      %2785 = vmatpush1.msra.mxu0 0.0
      %2786 = vmatprep.subr.mxu0 0.0
      %2787 = vmatpush1.msra.mxu0 0.0
      %2788 = vmatprep.subr.mxu0 0.0
      %2789 = vmatpush1.msra.mxu0 0.0
      %2790 = vmatprep.subr.mxu0 0.0
      %2791 = vmatpush1.msra.mxu0 0.0
      %2792 = vmatprep.subr.mxu0 0.0
      %2793 = vmatpush1.msra.mxu0 0.0
      %2794 = vmatprep.subr.mxu0 0.0
      %2795 = vmatpush1.msra.mxu0 0.0
      %2796 = vmatprep.subr.mxu0 0.0
      %2797 = vmatpush1.msra.mxu0 0.0
      %2798 = vmatprep.subr.mxu0 0.0
      %2799 = vmatpush1.msra.mxu0 0.0
      %2800 = vmatprep.subr.mxu0 0.0
      %2801 = vmatpush1.msra.mxu0 0.0
      %2802 = vmatprep.subr.mxu0 0.0
      %2803 = vmatpush1.msra.mxu0 0.0
      %2804 = vmatprep.subr.mxu0 0.0
      %2805 = vmatpush1.msra.mxu0 0.0
      %2806 = vmatprep.subr.mxu0 0.0
      %2807 = vmatpush1.msra.mxu0 0.0
      %2808 = vmatprep.subr.mxu0 0.0
      %v2809 = vand.u32 %v1787, 4294901760
      %v2810 = vsub.f32 %v1787, %v2809
      %v2811 = vand.u32 %v2810, 4294901760
      %2812 = vmatpush1.msra.mxu0 %v2811
      %2813 = vmatprep.subr.mxu0 0.0
      %2814 = vmatpush2.msra.mxu0 0.0
      %2815 = vmatprep.subr.mxu0 0.0
      %2816 = vmatpush2.msra.mxu0 0.0
      %2817 = vmatprep.subr.mxu0 0.0
      %2818 = vmatpush2.msra.mxu0 0.0
      %2819 = vmatprep.subr.mxu0 0.0
      %2820 = vmatpush2.msra.mxu0 0.0
      %2821 = vmatprep.subr.mxu0 0.0
      %2822 = vmatpush2.msra.mxu0 0.0
      %2823 = vmatprep.subr.mxu0 0.0
      %2824 = vmatpush2.msra.mxu0 0.0
      %2825 = vmatprep.subr.mxu0 0.0
      %2826 = vmatpush2.msra.mxu0 0.0
      %2827 = vmatprep.subr.mxu0 0.0
      %2828 = vmatpush2.msra.mxu0 0.0
      %2829 = vmatprep.subr.mxu0 0.0
      %2830 = vmatpush2.msra.mxu0 0.0
      %2831 = vmatprep.subr.mxu0 0.0
      %2832 = vmatpush2.msra.mxu0 0.0
      %2833 = vmatprep.subr.mxu0 0.0
      %2834 = vmatpush2.msra.mxu0 0.0
      %2835 = vmatprep.subr.mxu0 0.0
      %2836 = vmatpush2.msra.mxu0 0.0
      %2837 = vmatprep.subr.mxu0 0.0
      %2838 = vmatpush2.msra.mxu0 0.0
      %2839 = vmatprep.subr.mxu0 0.0
      %2840 = vmatpush2.msra.mxu0 0.0
      %2841 = vmatprep.subr.mxu0 0.0
      %2842 = vmatpush2.msra.mxu0 0.0
      %2843 = vmatprep.subr.mxu0 0.0
      %2844 = vmatpush2.msra.mxu0 0.0
      %2845 = vmatprep.mubr.f32.mxu0 0.0
      %v2846 = vand.u32 %v2374, 4294901760
      %2847 = vmatmul.mubr.f32.gmra.mxu0 %v2846
      %v2848 = vpop.f32.mrf.mxu0
      %v2849 = vadd.f32 %v2751, %v2848
      %v2850 = vpop.f32.mrf.mxu0
      %2851 = vmatprep.mubr.f32.mxu0 0.0
      %v2852 = vand.u32 %v2377, 4294901760
      %2853 = vmatmul.mubr.f32.gmra.mxu0 %v2852
      %v2854 = vpop.f32.mrf.mxu0
      %v2855 = vadd.f32 %v2759, %v2854
      %v2856 = vpop.f32.mrf.mxu0
      %2857 = vmatprep.mubr.f32.mxu0 0.0
      %v2858 = vand.u32 %v2380, 4294901760
      %2859 = vmatmul.mubr.f32.gmra.mxu0 %v2858
      %v2860 = vpop.f32.mrf.mxu0
      %v2861 = vadd.f32 %v2767, %v2860
      %v2862 = vpop.f32.mrf.mxu0
      %2863 = vmatprep.mubr.f32.mxu0 0.0
      %v2864 = vand.u32 %v2383, 4294901760
      %2865 = vmatmul.mubr.f32.gmra.mxu0 %v2864
      %v2866 = vpop.f32.mrf.mxu0
      %v2867 = vadd.f32 %v2775, %v2866
      %v2868 = vpop.f32.mrf.mxu0
      %2869 = vdwg.mxu0
      %2870 = vmatprep.subr.mxu0 0.0
      %2871 = vmatpush1.msra.mxu0 0.0
      %2872 = vmatprep.subr.mxu0 0.0
      %2873 = vmatpush1.msra.mxu0 0.0
      %2874 = vmatprep.subr.mxu0 0.0
      %2875 = vmatpush1.msra.mxu0 0.0
      %2876 = vmatprep.subr.mxu0 0.0
      %2877 = vmatpush1.msra.mxu0 0.0
      %2878 = vmatprep.subr.mxu0 0.0
      %2879 = vmatpush1.msra.mxu0 0.0
      %2880 = vmatprep.subr.mxu0 0.0
      %2881 = vmatpush1.msra.mxu0 0.0
      %2882 = vmatprep.subr.mxu0 0.0
      %2883 = vmatpush1.msra.mxu0 0.0
      %2884 = vmatprep.subr.mxu0 0.0
      %2885 = vmatpush1.msra.mxu0 0.0
      %2886 = vmatprep.subr.mxu0 0.0
      %2887 = vmatpush1.msra.mxu0 0.0
      %2888 = vmatprep.subr.mxu0 0.0
      %2889 = vmatpush1.msra.mxu0 0.0
      %2890 = vmatprep.subr.mxu0 0.0
      %2891 = vmatpush1.msra.mxu0 0.0
      %2892 = vmatprep.subr.mxu0 0.0
      %2893 = vmatpush1.msra.mxu0 0.0
      %2894 = vmatprep.subr.mxu0 0.0
      %2895 = vmatpush1.msra.mxu0 0.0
      %2896 = vmatprep.subr.mxu0 0.0
      %2897 = vmatpush1.msra.mxu0 0.0
      %2898 = vmatprep.subr.mxu0 0.0
      %2899 = vmatpush1.msra.mxu0 0.0
      %2900 = vmatprep.subr.mxu0 0.0
      %v2901 = vand.u32 %v1787, 4294901760
      %2902 = vmatpush1.msra.mxu0 %v2901
      %2903 = vmatprep.subr.mxu0 0.0
      %2904 = vmatpush2.msra.mxu0 0.0
      %2905 = vmatprep.subr.mxu0 0.0
      %2906 = vmatpush2.msra.mxu0 0.0
      %2907 = vmatprep.subr.mxu0 0.0
      %2908 = vmatpush2.msra.mxu0 0.0
      %2909 = vmatprep.subr.mxu0 0.0
      %2910 = vmatpush2.msra.mxu0 0.0
      %2911 = vmatprep.subr.mxu0 0.0
      %2912 = vmatpush2.msra.mxu0 0.0
      %2913 = vmatprep.subr.mxu0 0.0
      %2914 = vmatpush2.msra.mxu0 0.0
      %2915 = vmatprep.subr.mxu0 0.0
      %2916 = vmatpush2.msra.mxu0 0.0
      %2917 = vmatprep.subr.mxu0 0.0
      %2918 = vmatpush2.msra.mxu0 0.0
      %2919 = vmatprep.subr.mxu0 0.0
      %2920 = vmatpush2.msra.mxu0 0.0
      %2921 = vmatprep.subr.mxu0 0.0
      %2922 = vmatpush2.msra.mxu0 0.0
      %2923 = vmatprep.subr.mxu0 0.0
      %2924 = vmatpush2.msra.mxu0 0.0
      %2925 = vmatprep.subr.mxu0 0.0
      %2926 = vmatpush2.msra.mxu0 0.0
      %2927 = vmatprep.subr.mxu0 0.0
      %2928 = vmatpush2.msra.mxu0 0.0
      %2929 = vmatprep.subr.mxu0 0.0
      %2930 = vmatpush2.msra.mxu0 0.0
      %2931 = vmatprep.subr.mxu0 0.0
      %2932 = vmatpush2.msra.mxu0 0.0
      %2933 = vmatprep.subr.mxu0 0.0
      %2934 = vmatpush2.msra.mxu0 0.0
      %2935 = vmatprep.mubr.f32.mxu0 0.0
      %v2936 = vand.u32 %v2374, 4294901760
      %2937 = vmatmul.mubr.f32.gmra.mxu0 %v2936
      %v2938 = vpop.f32.mrf.mxu0
      %v2939 = vadd.f32 %v2849, %v2938
      %v2940 = vpop.f32.mrf.mxu0
      %2941 = vmatprep.mubr.f32.mxu0 0.0
      %v2942 = vand.u32 %v2377, 4294901760
      %2943 = vmatmul.mubr.f32.gmra.mxu0 %v2942
      %v2944 = vpop.f32.mrf.mxu0
      %v2945 = vadd.f32 %v2855, %v2944
      %v2946 = vpop.f32.mrf.mxu0
      %2947 = vmatprep.mubr.f32.mxu0 0.0
      %v2948 = vand.u32 %v2380, 4294901760
      %2949 = vmatmul.mubr.f32.gmra.mxu0 %v2948
      %v2950 = vpop.f32.mrf.mxu0
      %v2951 = vadd.f32 %v2861, %v2950
      %v2952 = vpop.f32.mrf.mxu0
      %2953 = vmatprep.mubr.f32.mxu0 0.0
      %v2954 = vand.u32 %v2383, 4294901760
      %2955 = vmatmul.mubr.f32.gmra.mxu0 %v2954
      %v2956 = vpop.f32.mrf.mxu0
      %v2957 = vadd.f32 %v2867, %v2956
      %v2958 = vpop.f32.mrf.mxu0
      %2959 = vdwg.mxu0
      %v2960 = vsub.f32 0.0, %v2939
      %v2961 = vsub.f32 0.0, %v2945
      %v2962 = vsub.f32 0.0, %v2951
      %v2963 = vsub.f32 0.0, %v2957
      %v2964 = vmul.f32 %v2960, 1.442695
      %v2965 = vpow.pop %v2964
      %v2966 = vmul.f32 %v2961, 1.442695
      %v2967 = vpow.pop %v2966
      %v2968 = vmul.f32 %v2962, 1.442695
      %v2969 = vpow.pop %v2968
      %v2970 = vmul.f32 %v2963, 1.442695
      %v2971 = vpow.pop %v2970
      %v2972 = vadd.f32 %v2965, 1.0
      %v2973 = vadd.f32 %v2967, 1.0
      %v2974 = vadd.f32 %v2969, 1.0
      %v2975 = vadd.f32 %v2971, 1.0
      %v2976 = vrcp.pop %v2972
      %v2977 = vmul.f32 1.0, %v2976
      %v2978 = vrcp.pop %v2973
      %v2979 = vmul.f32 1.0, %v2978
      %v2980 = vrcp.pop %v2974
      %v2981 = vmul.f32 1.0, %v2980
      %v2982 = vrcp.pop %v2975
      %v2983 = vmul.f32 1.0, %v2982
      %v2984 = vld [vmem:[%s6] sm:$0xff]
      %v2985 = vld [vmem:[%s6 + $0x8] sm:$0xff]
      %v2986 = vld [vmem:[%s6 + $0x10] sm:$0xff]
      %v2987 = vld [vmem:[%s6 + $0x18] sm:$0xff]
      %v2988 = vld [vmem:[%s7] sm:$0xff]
      %v2989 = vld [vmem:[%s7 + $0x8] sm:$0xff]
      %v2990 = vld [vmem:[%s7 + $0x10] sm:$0xff]
      %v2991 = vld [vmem:[%s7 + $0x18] sm:$0xff]
      %2993 = vset.pattern.permute.xlu0 0
      %2994 = vperm.xlu0 %2993, %v2988
      %v2995 = vpop.permute.xlu0 %2994
      %2998 = vset.pattern.permute.xlu0 0
      %2999 = vperm.xlu0 %2998, %v2989
      %v3000 = vpop.permute.xlu0 %2999
      %3003 = vset.pattern.permute.xlu0 0
      %3004 = vperm.xlu0 %3003, %v2990
      %v3005 = vpop.permute.xlu0 %3004
      %3008 = vset.pattern.permute.xlu0 0
      %3009 = vperm.xlu0 %3008, %v2991
      %v3010 = vpop.permute.xlu0 %3009
      %v3013 = vsel %vm2372, %v2984, 0
      %v3016 = vsel %vm2372, %v2985, 0
      %v3019 = vsel %vm2372, %v2986, 0
      %v3022 = vsel %vm2372, %v2987, 0
      %3024 = vmatprep.subr.mxu0 0.0
      %3025 = vmatpush1.msra.mxu0 0.0
      %3026 = vmatprep.subr.mxu0 0.0
      %3027 = vmatpush1.msra.mxu0 0.0
      %3028 = vmatprep.subr.mxu0 0.0
      %3029 = vmatpush1.msra.mxu0 0.0
      %3030 = vmatprep.subr.mxu0 0.0
      %3031 = vmatpush1.msra.mxu0 0.0
      %3032 = vmatprep.subr.mxu0 0.0
      %3033 = vmatpush1.msra.mxu0 0.0
      %3034 = vmatprep.subr.mxu0 0.0
      %3035 = vmatpush1.msra.mxu0 0.0
      %3036 = vmatprep.subr.mxu0 0.0
      %3037 = vmatpush1.msra.mxu0 0.0
      %3038 = vmatprep.subr.mxu0 0.0
      %3039 = vmatpush1.msra.mxu0 0.0
      %3040 = vmatprep.subr.mxu0 0.0
      %3041 = vmatpush1.msra.mxu0 0.0
      %3042 = vmatprep.subr.mxu0 0.0
      %3043 = vmatpush1.msra.mxu0 0.0
      %3044 = vmatprep.subr.mxu0 0.0
      %3045 = vmatpush1.msra.mxu0 0.0
      %3046 = vmatprep.subr.mxu0 0.0
      %3047 = vmatpush1.msra.mxu0 0.0
      %3048 = vmatprep.subr.mxu0 0.0
      %3049 = vmatpush1.msra.mxu0 0.0
      %3050 = vmatprep.subr.mxu0 0.0
      %3051 = vmatpush1.msra.mxu0 0.0
      %3052 = vmatprep.subr.mxu0 0.0
      %3053 = vmatpush1.msra.mxu0 0.0
      %3054 = vmatprep.subr.mxu0 0.0
      %v3055 = vand.u32 %v2343, 4294901760
      %3056 = vmatpush1.msra.mxu0 %v3055
      %3057 = vmatprep.subr.mxu0 0.0
      %3058 = vmatpush2.msra.mxu0 0.0
      %3059 = vmatprep.subr.mxu0 0.0
      %3060 = vmatpush2.msra.mxu0 0.0
      %3061 = vmatprep.subr.mxu0 0.0
      %3062 = vmatpush2.msra.mxu0 0.0
      %3063 = vmatprep.subr.mxu0 0.0
      %3064 = vmatpush2.msra.mxu0 0.0
      %3065 = vmatprep.subr.mxu0 0.0
      %3066 = vmatpush2.msra.mxu0 0.0
      %3067 = vmatprep.subr.mxu0 0.0
      %3068 = vmatpush2.msra.mxu0 0.0
      %3069 = vmatprep.subr.mxu0 0.0
      %3070 = vmatpush2.msra.mxu0 0.0
      %3071 = vmatprep.subr.mxu0 0.0
      %3072 = vmatpush2.msra.mxu0 0.0
      %3073 = vmatprep.subr.mxu0 0.0
      %3074 = vmatpush2.msra.mxu0 0.0
      %3075 = vmatprep.subr.mxu0 0.0
      %3076 = vmatpush2.msra.mxu0 0.0
      %3077 = vmatprep.subr.mxu0 0.0
      %3078 = vmatpush2.msra.mxu0 0.0
      %3079 = vmatprep.subr.mxu0 0.0
      %3080 = vmatpush2.msra.mxu0 0.0
      %3081 = vmatprep.subr.mxu0 0.0
      %3082 = vmatpush2.msra.mxu0 0.0
      %3083 = vmatprep.subr.mxu0 0.0
      %3084 = vmatpush2.msra.mxu0 0.0
      %3085 = vmatprep.subr.mxu0 0.0
      %3086 = vmatpush2.msra.mxu0 0.0
      %3087 = vmatprep.subr.mxu0 0.0
      %3088 = vmatpush2.msra.mxu0 0.0
      %3089 = vmatprep.mubr.f32.mxu0 0.0
      %v3090 = vand.u32 %v3013, 4294901760
      %v3091 = vsub.f32 %v3013, %v3090
      %v3092 = vand.u32 %v3091, 4294901760
      %v3093 = vsub.f32 %v3091, %v3092
      %v3094 = vand.u32 %v3093, 4294901760
      %3095 = vmatmul.mubr.f32.gmra.mxu0 %v3094
      %v3096 = vpop.f32.mrf.mxu0
      %v3097 = vadd.f32 %v2995, %v3096
      %v3098 = vpop.f32.mrf.mxu0
      %3099 = vmatprep.mubr.f32.mxu0 0.0
      %v3100 = vand.u32 %v3016, 4294901760
      %v3101 = vsub.f32 %v3016, %v3100
      %v3102 = vand.u32 %v3101, 4294901760
      %v3103 = vsub.f32 %v3101, %v3102
      %v3104 = vand.u32 %v3103, 4294901760
      %3105 = vmatmul.mubr.f32.gmra.mxu0 %v3104
      %v3106 = vpop.f32.mrf.mxu0
      %v3107 = vadd.f32 %v3000, %v3106
      %v3108 = vpop.f32.mrf.mxu0
      %3109 = vmatprep.mubr.f32.mxu0 0.0
      %v3110 = vand.u32 %v3019, 4294901760
      %v3111 = vsub.f32 %v3019, %v3110
      %v3112 = vand.u32 %v3111, 4294901760
      %v3113 = vsub.f32 %v3111, %v3112
      %v3114 = vand.u32 %v3113, 4294901760
      %3115 = vmatmul.mubr.f32.gmra.mxu0 %v3114
      %v3116 = vpop.f32.mrf.mxu0
      %v3117 = vadd.f32 %v3005, %v3116
      %v3118 = vpop.f32.mrf.mxu0
      %3119 = vmatprep.mubr.f32.mxu0 0.0
      %v3120 = vand.u32 %v3022, 4294901760
      %v3121 = vsub.f32 %v3022, %v3120
      %v3122 = vand.u32 %v3121, 4294901760
      %v3123 = vsub.f32 %v3121, %v3122
      %v3124 = vand.u32 %v3123, 4294901760
      %3125 = vmatmul.mubr.f32.gmra.mxu0 %v3124
      %v3126 = vpop.f32.mrf.mxu0
      %v3127 = vadd.f32 %v3010, %v3126
      %v3128 = vpop.f32.mrf.mxu0
      %3129 = vdwg.mxu0
      %3130 = vmatprep.subr.mxu0 0.0
      %3131 = vmatpush1.msra.mxu0 0.0
      %3132 = vmatprep.subr.mxu0 0.0
      %3133 = vmatpush1.msra.mxu0 0.0
      %3134 = vmatprep.subr.mxu0 0.0
      %3135 = vmatpush1.msra.mxu0 0.0
      %3136 = vmatprep.subr.mxu0 0.0
      %3137 = vmatpush1.msra.mxu0 0.0
      %3138 = vmatprep.subr.mxu0 0.0
      %3139 = vmatpush1.msra.mxu0 0.0
      %3140 = vmatprep.subr.mxu0 0.0
      %3141 = vmatpush1.msra.mxu0 0.0
      %3142 = vmatprep.subr.mxu0 0.0
      %3143 = vmatpush1.msra.mxu0 0.0
      %3144 = vmatprep.subr.mxu0 0.0
      %3145 = vmatpush1.msra.mxu0 0.0
      %3146 = vmatprep.subr.mxu0 0.0
      %3147 = vmatpush1.msra.mxu0 0.0
      %3148 = vmatprep.subr.mxu0 0.0
      %3149 = vmatpush1.msra.mxu0 0.0
      %3150 = vmatprep.subr.mxu0 0.0
      %3151 = vmatpush1.msra.mxu0 0.0
      %3152 = vmatprep.subr.mxu0 0.0
      %3153 = vmatpush1.msra.mxu0 0.0
      %3154 = vmatprep.subr.mxu0 0.0
      %3155 = vmatpush1.msra.mxu0 0.0
      %3156 = vmatprep.subr.mxu0 0.0
      %3157 = vmatpush1.msra.mxu0 0.0
      %3158 = vmatprep.subr.mxu0 0.0
      %3159 = vmatpush1.msra.mxu0 0.0
      %3160 = vmatprep.subr.mxu0 0.0
      %v3161 = vand.u32 %v2343, 4294901760
      %v3162 = vsub.f32 %v2343, %v3161
      %v3163 = vand.u32 %v3162, 4294901760
      %v3164 = vsub.f32 %v3162, %v3163
      %v3165 = vand.u32 %v3164, 4294901760
      %3166 = vmatpush1.msra.mxu0 %v3165
      %3167 = vmatprep.subr.mxu0 0.0
      %3168 = vmatpush2.msra.mxu0 0.0
      %3169 = vmatprep.subr.mxu0 0.0
      %3170 = vmatpush2.msra.mxu0 0.0
      %3171 = vmatprep.subr.mxu0 0.0
      %3172 = vmatpush2.msra.mxu0 0.0
      %3173 = vmatprep.subr.mxu0 0.0
      %3174 = vmatpush2.msra.mxu0 0.0
      %3175 = vmatprep.subr.mxu0 0.0
      %3176 = vmatpush2.msra.mxu0 0.0
      %3177 = vmatprep.subr.mxu0 0.0
      %3178 = vmatpush2.msra.mxu0 0.0
      %3179 = vmatprep.subr.mxu0 0.0
      %3180 = vmatpush2.msra.mxu0 0.0
      %3181 = vmatprep.subr.mxu0 0.0
      %3182 = vmatpush2.msra.mxu0 0.0
      %3183 = vmatprep.subr.mxu0 0.0
      %3184 = vmatpush2.msra.mxu0 0.0
      %3185 = vmatprep.subr.mxu0 0.0
      %3186 = vmatpush2.msra.mxu0 0.0
      %3187 = vmatprep.subr.mxu0 0.0
      %3188 = vmatpush2.msra.mxu0 0.0
      %3189 = vmatprep.subr.mxu0 0.0
      %3190 = vmatpush2.msra.mxu0 0.0
      %3191 = vmatprep.subr.mxu0 0.0
      %3192 = vmatpush2.msra.mxu0 0.0
      %3193 = vmatprep.subr.mxu0 0.0
      %3194 = vmatpush2.msra.mxu0 0.0
      %3195 = vmatprep.subr.mxu0 0.0
      %3196 = vmatpush2.msra.mxu0 0.0
      %3197 = vmatprep.subr.mxu0 0.0
      %3198 = vmatpush2.msra.mxu0 0.0
      %3199 = vmatprep.mubr.f32.mxu0 0.0
      %v3200 = vand.u32 %v3013, 4294901760
      %3201 = vmatmul.mubr.f32.gmra.mxu0 %v3200
      %v3202 = vpop.f32.mrf.mxu0
      %v3203 = vadd.f32 %v3097, %v3202
      %v3204 = vpop.f32.mrf.mxu0
      %3205 = vmatprep.mubr.f32.mxu0 0.0
      %v3206 = vand.u32 %v3016, 4294901760
      %3207 = vmatmul.mubr.f32.gmra.mxu0 %v3206
      %v3208 = vpop.f32.mrf.mxu0
      %v3209 = vadd.f32 %v3107, %v3208
      %v3210 = vpop.f32.mrf.mxu0
      %3211 = vmatprep.mubr.f32.mxu0 0.0
      %v3212 = vand.u32 %v3019, 4294901760
      %3213 = vmatmul.mubr.f32.gmra.mxu0 %v3212
      %v3214 = vpop.f32.mrf.mxu0
      %v3215 = vadd.f32 %v3117, %v3214
      %v3216 = vpop.f32.mrf.mxu0
      %3217 = vmatprep.mubr.f32.mxu0 0.0
      %v3218 = vand.u32 %v3022, 4294901760
      %3219 = vmatmul.mubr.f32.gmra.mxu0 %v3218
      %v3220 = vpop.f32.mrf.mxu0
      %v3221 = vadd.f32 %v3127, %v3220
      %v3222 = vpop.f32.mrf.mxu0
      %3223 = vdwg.mxu0
      %3224 = vmatprep.subr.mxu0 0.0
      %3225 = vmatpush1.msra.mxu0 0.0
      %3226 = vmatprep.subr.mxu0 0.0
      %3227 = vmatpush1.msra.mxu0 0.0
      %3228 = vmatprep.subr.mxu0 0.0
      %3229 = vmatpush1.msra.mxu0 0.0
      %3230 = vmatprep.subr.mxu0 0.0
      %3231 = vmatpush1.msra.mxu0 0.0
      %3232 = vmatprep.subr.mxu0 0.0
      %3233 = vmatpush1.msra.mxu0 0.0
      %3234 = vmatprep.subr.mxu0 0.0
      %3235 = vmatpush1.msra.mxu0 0.0
      %3236 = vmatprep.subr.mxu0 0.0
      %3237 = vmatpush1.msra.mxu0 0.0
      %3238 = vmatprep.subr.mxu0 0.0
      %3239 = vmatpush1.msra.mxu0 0.0
      %3240 = vmatprep.subr.mxu0 0.0
      %3241 = vmatpush1.msra.mxu0 0.0
      %3242 = vmatprep.subr.mxu0 0.0
      %3243 = vmatpush1.msra.mxu0 0.0
      %3244 = vmatprep.subr.mxu0 0.0
      %3245 = vmatpush1.msra.mxu0 0.0
      %3246 = vmatprep.subr.mxu0 0.0
      %3247 = vmatpush1.msra.mxu0 0.0
      %3248 = vmatprep.subr.mxu0 0.0
      %3249 = vmatpush1.msra.mxu0 0.0
      %3250 = vmatprep.subr.mxu0 0.0
      %3251 = vmatpush1.msra.mxu0 0.0
      %3252 = vmatprep.subr.mxu0 0.0
      %3253 = vmatpush1.msra.mxu0 0.0
      %3254 = vmatprep.subr.mxu0 0.0
      %v3255 = vand.u32 %v2343, 4294901760
      %v3256 = vsub.f32 %v2343, %v3255
      %3257 = vmatpush1.msra.mxu0 %v3256
      %3258 = vmatprep.subr.mxu0 0.0
      %3259 = vmatpush2.msra.mxu0 0.0
      %3260 = vmatprep.subr.mxu0 0.0
      %3261 = vmatpush2.msra.mxu0 0.0
      %3262 = vmatprep.subr.mxu0 0.0
      %3263 = vmatpush2.msra.mxu0 0.0
      %3264 = vmatprep.subr.mxu0 0.0
      %3265 = vmatpush2.msra.mxu0 0.0
      %3266 = vmatprep.subr.mxu0 0.0
      %3267 = vmatpush2.msra.mxu0 0.0
      %3268 = vmatprep.subr.mxu0 0.0
      %3269 = vmatpush2.msra.mxu0 0.0
      %3270 = vmatprep.subr.mxu0 0.0
      %3271 = vmatpush2.msra.mxu0 0.0
      %3272 = vmatprep.subr.mxu0 0.0
      %3273 = vmatpush2.msra.mxu0 0.0
      %3274 = vmatprep.subr.mxu0 0.0
      %3275 = vmatpush2.msra.mxu0 0.0
      %3276 = vmatprep.subr.mxu0 0.0
      %3277 = vmatpush2.msra.mxu0 0.0
      %3278 = vmatprep.subr.mxu0 0.0
      %3279 = vmatpush2.msra.mxu0 0.0
      %3280 = vmatprep.subr.mxu0 0.0
      %3281 = vmatpush2.msra.mxu0 0.0
      %3282 = vmatprep.subr.mxu0 0.0
      %3283 = vmatpush2.msra.mxu0 0.0
      %3284 = vmatprep.subr.mxu0 0.0
      %3285 = vmatpush2.msra.mxu0 0.0
      %3286 = vmatprep.subr.mxu0 0.0
      %3287 = vmatpush2.msra.mxu0 0.0
      %3288 = vmatprep.subr.mxu0 0.0
      %3289 = vmatpush2.msra.mxu0 0.0
      %3290 = vmatprep.mubr.f32.mxu0 0.0
      %v3291 = vand.u32 %v3013, 4294901760
      %v3292 = vsub.f32 %v3013, %v3291
      %3293 = vmatmul.mubr.f32.gmra.mxu0 %v3292
      %v3294 = vpop.f32.mrf.mxu0
      %v3295 = vadd.f32 %v3203, %v3294
      %v3296 = vpop.f32.mrf.mxu0
      %3297 = vmatprep.mubr.f32.mxu0 0.0
      %v3298 = vand.u32 %v3016, 4294901760
      %v3299 = vsub.f32 %v3016, %v3298
      %3300 = vmatmul.mubr.f32.gmra.mxu0 %v3299
      %v3301 = vpop.f32.mrf.mxu0
      %v3302 = vadd.f32 %v3209, %v3301
      %v3303 = vpop.f32.mrf.mxu0
      %3304 = vmatprep.mubr.f32.mxu0 0.0
      %v3305 = vand.u32 %v3019, 4294901760
      %v3306 = vsub.f32 %v3019, %v3305
      %3307 = vmatmul.mubr.f32.gmra.mxu0 %v3306
      %v3308 = vpop.f32.mrf.mxu0
      %v3309 = vadd.f32 %v3215, %v3308
      %v3310 = vpop.f32.mrf.mxu0
      %3311 = vmatprep.mubr.f32.mxu0 0.0
      %v3312 = vand.u32 %v3022, 4294901760
      %v3313 = vsub.f32 %v3022, %v3312
      %3314 = vmatmul.mubr.f32.gmra.mxu0 %v3313
      %v3315 = vpop.f32.mrf.mxu0
      %v3316 = vadd.f32 %v3221, %v3315
      %v3317 = vpop.f32.mrf.mxu0
      %3318 = vdwg.mxu0
      %3319 = vmatprep.subr.mxu0 0.0
      %3320 = vmatpush1.msra.mxu0 0.0
      %3321 = vmatprep.subr.mxu0 0.0
      %3322 = vmatpush1.msra.mxu0 0.0
      %3323 = vmatprep.subr.mxu0 0.0
      %3324 = vmatpush1.msra.mxu0 0.0
      %3325 = vmatprep.subr.mxu0 0.0
      %3326 = vmatpush1.msra.mxu0 0.0
      %3327 = vmatprep.subr.mxu0 0.0
      %3328 = vmatpush1.msra.mxu0 0.0
      %3329 = vmatprep.subr.mxu0 0.0
      %3330 = vmatpush1.msra.mxu0 0.0
      %3331 = vmatprep.subr.mxu0 0.0
      %3332 = vmatpush1.msra.mxu0 0.0
      %3333 = vmatprep.subr.mxu0 0.0
      %3334 = vmatpush1.msra.mxu0 0.0
      %3335 = vmatprep.subr.mxu0 0.0
      %3336 = vmatpush1.msra.mxu0 0.0
      %3337 = vmatprep.subr.mxu0 0.0
      %3338 = vmatpush1.msra.mxu0 0.0
      %3339 = vmatprep.subr.mxu0 0.0
      %3340 = vmatpush1.msra.mxu0 0.0
      %3341 = vmatprep.subr.mxu0 0.0
      %3342 = vmatpush1.msra.mxu0 0.0
      %3343 = vmatprep.subr.mxu0 0.0
      %3344 = vmatpush1.msra.mxu0 0.0
      %3345 = vmatprep.subr.mxu0 0.0
      %3346 = vmatpush1.msra.mxu0 0.0
      %3347 = vmatprep.subr.mxu0 0.0
      %3348 = vmatpush1.msra.mxu0 0.0
      %3349 = vmatprep.subr.mxu0 0.0
      %v3350 = vand.u32 %v2343, 4294901760
      %3351 = vmatpush1.msra.mxu0 %v3350
      %3352 = vmatprep.subr.mxu0 0.0
      %3353 = vmatpush2.msra.mxu0 0.0
      %3354 = vmatprep.subr.mxu0 0.0
      %3355 = vmatpush2.msra.mxu0 0.0
      %3356 = vmatprep.subr.mxu0 0.0
      %3357 = vmatpush2.msra.mxu0 0.0
      %3358 = vmatprep.subr.mxu0 0.0
      %3359 = vmatpush2.msra.mxu0 0.0
      %3360 = vmatprep.subr.mxu0 0.0
      %3361 = vmatpush2.msra.mxu0 0.0
      %3362 = vmatprep.subr.mxu0 0.0
      %3363 = vmatpush2.msra.mxu0 0.0
      %3364 = vmatprep.subr.mxu0 0.0
      %3365 = vmatpush2.msra.mxu0 0.0
      %3366 = vmatprep.subr.mxu0 0.0
      %3367 = vmatpush2.msra.mxu0 0.0
      %3368 = vmatprep.subr.mxu0 0.0
      %3369 = vmatpush2.msra.mxu0 0.0
      %3370 = vmatprep.subr.mxu0 0.0
      %3371 = vmatpush2.msra.mxu0 0.0
      %3372 = vmatprep.subr.mxu0 0.0
      %3373 = vmatpush2.msra.mxu0 0.0
      %3374 = vmatprep.subr.mxu0 0.0
      %3375 = vmatpush2.msra.mxu0 0.0
      %3376 = vmatprep.subr.mxu0 0.0
      %3377 = vmatpush2.msra.mxu0 0.0
      %3378 = vmatprep.subr.mxu0 0.0
      %3379 = vmatpush2.msra.mxu0 0.0
      %3380 = vmatprep.subr.mxu0 0.0
      %3381 = vmatpush2.msra.mxu0 0.0
      %3382 = vmatprep.subr.mxu0 0.0
      %3383 = vmatpush2.msra.mxu0 0.0
      %3384 = vmatprep.mubr.f32.mxu0 0.0
      %v3385 = vand.u32 %v3013, 4294901760
      %v3386 = vsub.f32 %v3013, %v3385
      %v3387 = vand.u32 %v3386, 4294901760
      %3388 = vmatmul.mubr.f32.gmra.mxu0 %v3387
      %v3389 = vpop.f32.mrf.mxu0
      %v3390 = vadd.f32 %v3295, %v3389
      %v3391 = vpop.f32.mrf.mxu0
      %3392 = vmatprep.mubr.f32.mxu0 0.0
      %v3393 = vand.u32 %v3016, 4294901760
      %v3394 = vsub.f32 %v3016, %v3393
      %v3395 = vand.u32 %v3394, 4294901760
      %3396 = vmatmul.mubr.f32.gmra.mxu0 %v3395
      %v3397 = vpop.f32.mrf.mxu0
      %v3398 = vadd.f32 %v3302, %v3397
      %v3399 = vpop.f32.mrf.mxu0
      %3400 = vmatprep.mubr.f32.mxu0 0.0
      %v3401 = vand.u32 %v3019, 4294901760
      %v3402 = vsub.f32 %v3019, %v3401
      %v3403 = vand.u32 %v3402, 4294901760
      %3404 = vmatmul.mubr.f32.gmra.mxu0 %v3403
      %v3405 = vpop.f32.mrf.mxu0
      %v3406 = vadd.f32 %v3309, %v3405
      %v3407 = vpop.f32.mrf.mxu0
      %3408 = vmatprep.mubr.f32.mxu0 0.0
      %v3409 = vand.u32 %v3022, 4294901760
      %v3410 = vsub.f32 %v3022, %v3409
      %v3411 = vand.u32 %v3410, 4294901760
      %3412 = vmatmul.mubr.f32.gmra.mxu0 %v3411
      %v3413 = vpop.f32.mrf.mxu0
      %v3414 = vadd.f32 %v3316, %v3413
      %v3415 = vpop.f32.mrf.mxu0
      %3416 = vdwg.mxu0
      %3417 = vmatprep.subr.mxu0 0.0
      %3418 = vmatpush1.msra.mxu0 0.0
      %3419 = vmatprep.subr.mxu0 0.0
      %3420 = vmatpush1.msra.mxu0 0.0
      %3421 = vmatprep.subr.mxu0 0.0
      %3422 = vmatpush1.msra.mxu0 0.0
      %3423 = vmatprep.subr.mxu0 0.0
      %3424 = vmatpush1.msra.mxu0 0.0
      %3425 = vmatprep.subr.mxu0 0.0
      %3426 = vmatpush1.msra.mxu0 0.0
      %3427 = vmatprep.subr.mxu0 0.0
      %3428 = vmatpush1.msra.mxu0 0.0
      %3429 = vmatprep.subr.mxu0 0.0
      %3430 = vmatpush1.msra.mxu0 0.0
      %3431 = vmatprep.subr.mxu0 0.0
      %3432 = vmatpush1.msra.mxu0 0.0
      %3433 = vmatprep.subr.mxu0 0.0
      %3434 = vmatpush1.msra.mxu0 0.0
      %3435 = vmatprep.subr.mxu0 0.0
      %3436 = vmatpush1.msra.mxu0 0.0
      %3437 = vmatprep.subr.mxu0 0.0
      %3438 = vmatpush1.msra.mxu0 0.0
      %3439 = vmatprep.subr.mxu0 0.0
      %3440 = vmatpush1.msra.mxu0 0.0
      %3441 = vmatprep.subr.mxu0 0.0
      %3442 = vmatpush1.msra.mxu0 0.0
      %3443 = vmatprep.subr.mxu0 0.0
      %3444 = vmatpush1.msra.mxu0 0.0
      %3445 = vmatprep.subr.mxu0 0.0
      %3446 = vmatpush1.msra.mxu0 0.0
      %3447 = vmatprep.subr.mxu0 0.0
      %v3448 = vand.u32 %v2343, 4294901760
      %v3449 = vsub.f32 %v2343, %v3448
      %v3450 = vand.u32 %v3449, 4294901760
      %3451 = vmatpush1.msra.mxu0 %v3450
      %3452 = vmatprep.subr.mxu0 0.0
      %3453 = vmatpush2.msra.mxu0 0.0
      %3454 = vmatprep.subr.mxu0 0.0
      %3455 = vmatpush2.msra.mxu0 0.0
      %3456 = vmatprep.subr.mxu0 0.0
      %3457 = vmatpush2.msra.mxu0 0.0
      %3458 = vmatprep.subr.mxu0 0.0
      %3459 = vmatpush2.msra.mxu0 0.0
      %3460 = vmatprep.subr.mxu0 0.0
      %3461 = vmatpush2.msra.mxu0 0.0
      %3462 = vmatprep.subr.mxu0 0.0
      %3463 = vmatpush2.msra.mxu0 0.0
      %3464 = vmatprep.subr.mxu0 0.0
      %3465 = vmatpush2.msra.mxu0 0.0
      %3466 = vmatprep.subr.mxu0 0.0
      %3467 = vmatpush2.msra.mxu0 0.0
      %3468 = vmatprep.subr.mxu0 0.0
      %3469 = vmatpush2.msra.mxu0 0.0
      %3470 = vmatprep.subr.mxu0 0.0
      %3471 = vmatpush2.msra.mxu0 0.0
      %3472 = vmatprep.subr.mxu0 0.0
      %3473 = vmatpush2.msra.mxu0 0.0
      %3474 = vmatprep.subr.mxu0 0.0
      %3475 = vmatpush2.msra.mxu0 0.0
      %3476 = vmatprep.subr.mxu0 0.0
      %3477 = vmatpush2.msra.mxu0 0.0
      %3478 = vmatprep.subr.mxu0 0.0
      %3479 = vmatpush2.msra.mxu0 0.0
      %3480 = vmatprep.subr.mxu0 0.0
      %3481 = vmatpush2.msra.mxu0 0.0
      %3482 = vmatprep.subr.mxu0 0.0
      %3483 = vmatpush2.msra.mxu0 0.0
      %3484 = vmatprep.mubr.f32.mxu0 0.0
      %v3485 = vand.u32 %v3013, 4294901760
      %3486 = vmatmul.mubr.f32.gmra.mxu0 %v3485
      %v3487 = vpop.f32.mrf.mxu0
      %v3488 = vadd.f32 %v3390, %v3487
      %v3489 = vpop.f32.mrf.mxu0
      %3490 = vmatprep.mubr.f32.mxu0 0.0
      %v3491 = vand.u32 %v3016, 4294901760
      %3492 = vmatmul.mubr.f32.gmra.mxu0 %v3491
      %v3493 = vpop.f32.mrf.mxu0
      %v3494 = vadd.f32 %v3398, %v3493
      %v3495 = vpop.f32.mrf.mxu0
      %3496 = vmatprep.mubr.f32.mxu0 0.0
      %v3497 = vand.u32 %v3019, 4294901760
      %3498 = vmatmul.mubr.f32.gmra.mxu0 %v3497
      %v3499 = vpop.f32.mrf.mxu0
      %v3500 = vadd.f32 %v3406, %v3499
      %v3501 = vpop.f32.mrf.mxu0
      %3502 = vmatprep.mubr.f32.mxu0 0.0
      %v3503 = vand.u32 %v3022, 4294901760
      %3504 = vmatmul.mubr.f32.gmra.mxu0 %v3503
      %v3505 = vpop.f32.mrf.mxu0
      %v3506 = vadd.f32 %v3414, %v3505
      %v3507 = vpop.f32.mrf.mxu0
      %3508 = vdwg.mxu0
      %3509 = vmatprep.subr.mxu0 0.0
      %3510 = vmatpush1.msra.mxu0 0.0
      %3511 = vmatprep.subr.mxu0 0.0
      %3512 = vmatpush1.msra.mxu0 0.0
      %3513 = vmatprep.subr.mxu0 0.0
      %3514 = vmatpush1.msra.mxu0 0.0
      %3515 = vmatprep.subr.mxu0 0.0
      %3516 = vmatpush1.msra.mxu0 0.0
      %3517 = vmatprep.subr.mxu0 0.0
      %3518 = vmatpush1.msra.mxu0 0.0
      %3519 = vmatprep.subr.mxu0 0.0
      %3520 = vmatpush1.msra.mxu0 0.0
      %3521 = vmatprep.subr.mxu0 0.0
      %3522 = vmatpush1.msra.mxu0 0.0
      %3523 = vmatprep.subr.mxu0 0.0
      %3524 = vmatpush1.msra.mxu0 0.0
      %3525 = vmatprep.subr.mxu0 0.0
      %3526 = vmatpush1.msra.mxu0 0.0
      %3527 = vmatprep.subr.mxu0 0.0
      %3528 = vmatpush1.msra.mxu0 0.0
      %3529 = vmatprep.subr.mxu0 0.0
      %3530 = vmatpush1.msra.mxu0 0.0
      %3531 = vmatprep.subr.mxu0 0.0
      %3532 = vmatpush1.msra.mxu0 0.0
      %3533 = vmatprep.subr.mxu0 0.0
      %3534 = vmatpush1.msra.mxu0 0.0
      %3535 = vmatprep.subr.mxu0 0.0
      %3536 = vmatpush1.msra.mxu0 0.0
      %3537 = vmatprep.subr.mxu0 0.0
      %3538 = vmatpush1.msra.mxu0 0.0
      %3539 = vmatprep.subr.mxu0 0.0
      %v3540 = vand.u32 %v2343, 4294901760
      %3541 = vmatpush1.msra.mxu0 %v3540
      %3542 = vmatprep.subr.mxu0 0.0
      %3543 = vmatpush2.msra.mxu0 0.0
      %3544 = vmatprep.subr.mxu0 0.0
      %3545 = vmatpush2.msra.mxu0 0.0
      %3546 = vmatprep.subr.mxu0 0.0
      %3547 = vmatpush2.msra.mxu0 0.0
      %3548 = vmatprep.subr.mxu0 0.0
      %3549 = vmatpush2.msra.mxu0 0.0
      %3550 = vmatprep.subr.mxu0 0.0
      %3551 = vmatpush2.msra.mxu0 0.0
      %3552 = vmatprep.subr.mxu0 0.0
      %3553 = vmatpush2.msra.mxu0 0.0
      %3554 = vmatprep.subr.mxu0 0.0
      %3555 = vmatpush2.msra.mxu0 0.0
      %3556 = vmatprep.subr.mxu0 0.0
      %3557 = vmatpush2.msra.mxu0 0.0
      %3558 = vmatprep.subr.mxu0 0.0
      %3559 = vmatpush2.msra.mxu0 0.0
      %3560 = vmatprep.subr.mxu0 0.0
      %3561 = vmatpush2.msra.mxu0 0.0
      %3562 = vmatprep.subr.mxu0 0.0
      %3563 = vmatpush2.msra.mxu0 0.0
      %3564 = vmatprep.subr.mxu0 0.0
      %3565 = vmatpush2.msra.mxu0 0.0
      %3566 = vmatprep.subr.mxu0 0.0
      %3567 = vmatpush2.msra.mxu0 0.0
      %3568 = vmatprep.subr.mxu0 0.0
      %3569 = vmatpush2.msra.mxu0 0.0
      %3570 = vmatprep.subr.mxu0 0.0
      %3571 = vmatpush2.msra.mxu0 0.0
      %3572 = vmatprep.subr.mxu0 0.0
      %3573 = vmatpush2.msra.mxu0 0.0
      %3574 = vmatprep.mubr.f32.mxu0 0.0
      %v3575 = vand.u32 %v3013, 4294901760
      %3576 = vmatmul.mubr.f32.gmra.mxu0 %v3575
      %v3577 = vpop.f32.mrf.mxu0
      %v3578 = vadd.f32 %v3488, %v3577
      %v3579 = vpop.f32.mrf.mxu0
      %3580 = vmatprep.mubr.f32.mxu0 0.0
      %v3581 = vand.u32 %v3016, 4294901760
      %3582 = vmatmul.mubr.f32.gmra.mxu0 %v3581
      %v3583 = vpop.f32.mrf.mxu0
      %v3584 = vadd.f32 %v3494, %v3583
      %v3585 = vpop.f32.mrf.mxu0
      %3586 = vmatprep.mubr.f32.mxu0 0.0
      %v3587 = vand.u32 %v3019, 4294901760
      %3588 = vmatmul.mubr.f32.gmra.mxu0 %v3587
      %v3589 = vpop.f32.mrf.mxu0
      %v3590 = vadd.f32 %v3500, %v3589
      %v3591 = vpop.f32.mrf.mxu0
      %3592 = vmatprep.mubr.f32.mxu0 0.0
      %v3593 = vand.u32 %v3022, 4294901760
      %3594 = vmatmul.mubr.f32.gmra.mxu0 %v3593
      %v3595 = vpop.f32.mrf.mxu0
      %v3596 = vadd.f32 %v3506, %v3595
      %v3597 = vpop.f32.mrf.mxu0
      %3598 = vdwg.mxu0
      %v3599 = vsub.f32 0.0, %v3578
      %v3600 = vsub.f32 0.0, %v3584
      %v3601 = vsub.f32 0.0, %v3590
      %v3602 = vsub.f32 0.0, %v3596
      %v3603 = vmul.f32 %v3599, 1.442695
      %v3604 = vpow.pop %v3603
      %v3605 = vmul.f32 %v3600, 1.442695
      %v3606 = vpow.pop %v3605
      %v3607 = vmul.f32 %v3601, 1.442695
      %v3608 = vpow.pop %v3607
      %v3609 = vmul.f32 %v3602, 1.442695
      %v3610 = vpow.pop %v3609
      %v3611 = vadd.f32 %v3604, 1.0
      %v3612 = vadd.f32 %v3606, 1.0
      %v3613 = vadd.f32 %v3608, 1.0
      %v3614 = vadd.f32 %v3610, 1.0
      %v3615 = vrcp.pop %v3611
      %v3616 = vmul.f32 1.0, %v3615
      %v3617 = vrcp.pop %v3612
      %v3618 = vmul.f32 1.0, %v3617
      %v3619 = vrcp.pop %v3613
      %v3620 = vmul.f32 1.0, %v3619
      %v3621 = vrcp.pop %v3614
      %v3622 = vmul.f32 1.0, %v3621
      %v3623 = vlaneseq
      %v3624 = vshrl.u32 %v3623, 7
      %v3625 = vsub.s32 0, %v3624
      %v3626 = vrot.slane %v2977, %v3625
      %3628 = vbcast.lane.b32.xlu0 %v3626, 256
      %v3629 = vpop.permute.xlu0 %3628
      %s3631 = sor.u32 256, 8
      %3632 = vbcast.lane.b32.xlu0 %v3626, %s3631
      %v3633 = vpop.permute.xlu0 %3632
      %v3634 = vlaneseq
      %v3635 = vshrl.u32 %v3634, 7
      %v3636 = vsub.s32 1, %v3635
      %v3637 = vrot.slane %v2977, %v3636
      %3639 = vbcast.lane.b32.xlu0 %v3637, 256
      %v3640 = vpop.permute.xlu0 %3639
      %s3642 = sor.u32 256, 8
      %3643 = vbcast.lane.b32.xlu0 %v3637, %s3642
      %v3644 = vpop.permute.xlu0 %3643
      %v3645 = vlaneseq
      %v3646 = vshrl.u32 %v3645, 7
      %v3647 = vsub.s32 2, %v3646
      %v3648 = vrot.slane %v2977, %v3647
      %3650 = vbcast.lane.b32.xlu0 %v3648, 256
      %v3651 = vpop.permute.xlu0 %3650
      %s3653 = sor.u32 256, 8
      %3654 = vbcast.lane.b32.xlu0 %v3648, %s3653
      %v3655 = vpop.permute.xlu0 %3654
      %v3656 = vlaneseq
      %v3657 = vshrl.u32 %v3656, 7
      %v3658 = vsub.s32 3, %v3657
      %v3659 = vrot.slane %v2977, %v3658
      %3661 = vbcast.lane.b32.xlu0 %v3659, 256
      %v3662 = vpop.permute.xlu0 %3661
      %s3664 = sor.u32 256, 8
      %3665 = vbcast.lane.b32.xlu0 %v3659, %s3664
      %v3666 = vpop.permute.xlu0 %3665
      %v3667 = vlaneseq
      %v3668 = vshrl.u32 %v3667, 7
      %v3669 = vsub.s32 4, %v3668
      %v3670 = vrot.slane %v2977, %v3669
      %3672 = vbcast.lane.b32.xlu0 %v3670, 256
      %v3673 = vpop.permute.xlu0 %3672
      %s3675 = sor.u32 256, 8
      %3676 = vbcast.lane.b32.xlu0 %v3670, %s3675
      %v3677 = vpop.permute.xlu0 %3676
      %v3678 = vlaneseq
      %v3679 = vshrl.u32 %v3678, 7
      %v3680 = vsub.s32 5, %v3679
      %v3681 = vrot.slane %v2977, %v3680
      %3683 = vbcast.lane.b32.xlu0 %v3681, 256
      %v3684 = vpop.permute.xlu0 %3683
      %s3686 = sor.u32 256, 8
      %3687 = vbcast.lane.b32.xlu0 %v3681, %s3686
      %v3688 = vpop.permute.xlu0 %3687
      %v3689 = vlaneseq
      %v3690 = vshrl.u32 %v3689, 7
      %v3691 = vsub.s32 6, %v3690
      %v3692 = vrot.slane %v2977, %v3691
      %3694 = vbcast.lane.b32.xlu0 %v3692, 256
      %v3695 = vpop.permute.xlu0 %3694
      %s3697 = sor.u32 256, 8
      %3698 = vbcast.lane.b32.xlu0 %v3692, %s3697
      %v3699 = vpop.permute.xlu0 %3698
      %v3700 = vlaneseq
      %v3701 = vshrl.u32 %v3700, 7
      %v3702 = vsub.s32 7, %v3701
      %v3703 = vrot.slane %v2977, %v3702
      %3705 = vbcast.lane.b32.xlu0 %v3703, 256
      %v3706 = vpop.permute.xlu0 %3705
      %s3708 = sor.u32 256, 8
      %3709 = vbcast.lane.b32.xlu0 %v3703, %s3708
      %v3710 = vpop.permute.xlu0 %3709
      %v3711 = vlaneseq
      %v3712 = vshrl.u32 %v3711, 7
      %v3713 = vsub.s32 0, %v3712
      %v3714 = vrot.slane %v2979, %v3713
      %3716 = vbcast.lane.b32.xlu0 %v3714, 256
      %v3717 = vpop.permute.xlu0 %3716
      %s3719 = sor.u32 256, 8
      %3720 = vbcast.lane.b32.xlu0 %v3714, %s3719
      %v3721 = vpop.permute.xlu0 %3720
      %v3722 = vlaneseq
      %v3723 = vshrl.u32 %v3722, 7
      %v3724 = vsub.s32 1, %v3723
      %v3725 = vrot.slane %v2979, %v3724
      %3727 = vbcast.lane.b32.xlu0 %v3725, 256
      %v3728 = vpop.permute.xlu0 %3727
      %s3730 = sor.u32 256, 8
      %3731 = vbcast.lane.b32.xlu0 %v3725, %s3730
      %v3732 = vpop.permute.xlu0 %3731
      %v3733 = vlaneseq
      %v3734 = vshrl.u32 %v3733, 7
      %v3735 = vsub.s32 2, %v3734
      %v3736 = vrot.slane %v2979, %v3735
      %3738 = vbcast.lane.b32.xlu0 %v3736, 256
      %v3739 = vpop.permute.xlu0 %3738
      %s3741 = sor.u32 256, 8
      %3742 = vbcast.lane.b32.xlu0 %v3736, %s3741
      %v3743 = vpop.permute.xlu0 %3742
      %v3744 = vlaneseq
      %v3745 = vshrl.u32 %v3744, 7
      %v3746 = vsub.s32 3, %v3745
      %v3747 = vrot.slane %v2979, %v3746
      %3749 = vbcast.lane.b32.xlu0 %v3747, 256
      %v3750 = vpop.permute.xlu0 %3749
      %s3752 = sor.u32 256, 8
      %3753 = vbcast.lane.b32.xlu0 %v3747, %s3752
      %v3754 = vpop.permute.xlu0 %3753
      %v3755 = vlaneseq
      %v3756 = vshrl.u32 %v3755, 7
      %v3757 = vsub.s32 4, %v3756
      %v3758 = vrot.slane %v2979, %v3757
      %3760 = vbcast.lane.b32.xlu0 %v3758, 256
      %v3761 = vpop.permute.xlu0 %3760
      %s3763 = sor.u32 256, 8
      %3764 = vbcast.lane.b32.xlu0 %v3758, %s3763
      %v3765 = vpop.permute.xlu0 %3764
      %v3766 = vlaneseq
      %v3767 = vshrl.u32 %v3766, 7
      %v3768 = vsub.s32 5, %v3767
      %v3769 = vrot.slane %v2979, %v3768
      %3771 = vbcast.lane.b32.xlu0 %v3769, 256
      %v3772 = vpop.permute.xlu0 %3771
      %s3774 = sor.u32 256, 8
      %3775 = vbcast.lane.b32.xlu0 %v3769, %s3774
      %v3776 = vpop.permute.xlu0 %3775
      %v3777 = vlaneseq
      %v3778 = vshrl.u32 %v3777, 7
      %v3779 = vsub.s32 6, %v3778
      %v3780 = vrot.slane %v2979, %v3779
      %3782 = vbcast.lane.b32.xlu0 %v3780, 256
      %v3783 = vpop.permute.xlu0 %3782
      %s3785 = sor.u32 256, 8
      %3786 = vbcast.lane.b32.xlu0 %v3780, %s3785
      %v3787 = vpop.permute.xlu0 %3786
      %v3788 = vlaneseq
      %v3789 = vshrl.u32 %v3788, 7
      %v3790 = vsub.s32 7, %v3789
      %v3791 = vrot.slane %v2979, %v3790
      %3793 = vbcast.lane.b32.xlu0 %v3791, 256
      %v3794 = vpop.permute.xlu0 %3793
      %s3796 = sor.u32 256, 8
      %3797 = vbcast.lane.b32.xlu0 %v3791, %s3796
      %v3798 = vpop.permute.xlu0 %3797
      %v3799 = vlaneseq
      %v3800 = vshrl.u32 %v3799, 7
      %v3801 = vsub.s32 0, %v3800
      %v3802 = vrot.slane %v2981, %v3801
      %3804 = vbcast.lane.b32.xlu0 %v3802, 256
      %v3805 = vpop.permute.xlu0 %3804
      %s3807 = sor.u32 256, 8
      %3808 = vbcast.lane.b32.xlu0 %v3802, %s3807
      %v3809 = vpop.permute.xlu0 %3808
      %v3810 = vlaneseq
      %v3811 = vshrl.u32 %v3810, 7
      %v3812 = vsub.s32 1, %v3811
      %v3813 = vrot.slane %v2981, %v3812
      %3815 = vbcast.lane.b32.xlu0 %v3813, 256
      %v3816 = vpop.permute.xlu0 %3815
      %s3818 = sor.u32 256, 8
      %3819 = vbcast.lane.b32.xlu0 %v3813, %s3818
      %v3820 = vpop.permute.xlu0 %3819
      %v3821 = vlaneseq
      %v3822 = vshrl.u32 %v3821, 7
      %v3823 = vsub.s32 2, %v3822
      %v3824 = vrot.slane %v2981, %v3823
      %3826 = vbcast.lane.b32.xlu0 %v3824, 256
      %v3827 = vpop.permute.xlu0 %3826
      %s3829 = sor.u32 256, 8
      %3830 = vbcast.lane.b32.xlu0 %v3824, %s3829
      %v3831 = vpop.permute.xlu0 %3830
      %v3832 = vlaneseq
      %v3833 = vshrl.u32 %v3832, 7
      %v3834 = vsub.s32 3, %v3833
      %v3835 = vrot.slane %v2981, %v3834
      %3837 = vbcast.lane.b32.xlu0 %v3835, 256
      %v3838 = vpop.permute.xlu0 %3837
      %s3840 = sor.u32 256, 8
      %3841 = vbcast.lane.b32.xlu0 %v3835, %s3840
      %v3842 = vpop.permute.xlu0 %3841
      %v3843 = vlaneseq
      %v3844 = vshrl.u32 %v3843, 7
      %v3845 = vsub.s32 4, %v3844
      %v3846 = vrot.slane %v2981, %v3845
      %3848 = vbcast.lane.b32.xlu0 %v3846, 256
      %v3849 = vpop.permute.xlu0 %3848
      %s3851 = sor.u32 256, 8
      %3852 = vbcast.lane.b32.xlu0 %v3846, %s3851
      %v3853 = vpop.permute.xlu0 %3852
      %v3854 = vlaneseq
      %v3855 = vshrl.u32 %v3854, 7
      %v3856 = vsub.s32 5, %v3855
      %v3857 = vrot.slane %v2981, %v3856
      %3859 = vbcast.lane.b32.xlu0 %v3857, 256
      %v3860 = vpop.permute.xlu0 %3859
      %s3862 = sor.u32 256, 8
      %3863 = vbcast.lane.b32.xlu0 %v3857, %s3862
      %v3864 = vpop.permute.xlu0 %3863
      %v3865 = vlaneseq
      %v3866 = vshrl.u32 %v3865, 7
      %v3867 = vsub.s32 6, %v3866
      %v3868 = vrot.slane %v2981, %v3867
      %3870 = vbcast.lane.b32.xlu0 %v3868, 256
      %v3871 = vpop.permute.xlu0 %3870
      %s3873 = sor.u32 256, 8
      %3874 = vbcast.lane.b32.xlu0 %v3868, %s3873
      %v3875 = vpop.permute.xlu0 %3874
      %v3876 = vlaneseq
      %v3877 = vshrl.u32 %v3876, 7
      %v3878 = vsub.s32 7, %v3877
      %v3879 = vrot.slane %v2981, %v3878
      %3881 = vbcast.lane.b32.xlu0 %v3879, 256
      %v3882 = vpop.permute.xlu0 %3881
      %s3884 = sor.u32 256, 8
      %3885 = vbcast.lane.b32.xlu0 %v3879, %s3884
      %v3886 = vpop.permute.xlu0 %3885
      %v3887 = vlaneseq
      %v3888 = vshrl.u32 %v3887, 7
      %v3889 = vsub.s32 0, %v3888
      %v3890 = vrot.slane %v2983, %v3889
      %3892 = vbcast.lane.b32.xlu0 %v3890, 256
      %v3893 = vpop.permute.xlu0 %3892
      %s3895 = sor.u32 256, 8
      %3896 = vbcast.lane.b32.xlu0 %v3890, %s3895
      %v3897 = vpop.permute.xlu0 %3896
      %v3898 = vlaneseq
      %v3899 = vshrl.u32 %v3898, 7
      %v3900 = vsub.s32 1, %v3899
      %v3901 = vrot.slane %v2983, %v3900
      %3903 = vbcast.lane.b32.xlu0 %v3901, 256
      %v3904 = vpop.permute.xlu0 %3903
      %s3906 = sor.u32 256, 8
      %3907 = vbcast.lane.b32.xlu0 %v3901, %s3906
      %v3908 = vpop.permute.xlu0 %3907
      %v3909 = vlaneseq
      %v3910 = vshrl.u32 %v3909, 7
      %v3911 = vsub.s32 2, %v3910
      %v3912 = vrot.slane %v2983, %v3911
      %3914 = vbcast.lane.b32.xlu0 %v3912, 256
      %v3915 = vpop.permute.xlu0 %3914
      %s3917 = sor.u32 256, 8
      %3918 = vbcast.lane.b32.xlu0 %v3912, %s3917
      %v3919 = vpop.permute.xlu0 %3918
      %v3920 = vlaneseq
      %v3921 = vshrl.u32 %v3920, 7
      %v3922 = vsub.s32 3, %v3921
      %v3923 = vrot.slane %v2983, %v3922
      %3925 = vbcast.lane.b32.xlu0 %v3923, 256
      %v3926 = vpop.permute.xlu0 %3925
      %s3928 = sor.u32 256, 8
      %3929 = vbcast.lane.b32.xlu0 %v3923, %s3928
      %v3930 = vpop.permute.xlu0 %3929
      %v3931 = vlaneseq
      %v3932 = vshrl.u32 %v3931, 7
      %v3933 = vsub.s32 4, %v3932
      %v3934 = vrot.slane %v2983, %v3933
      %3936 = vbcast.lane.b32.xlu0 %v3934, 256
      %v3937 = vpop.permute.xlu0 %3936
      %s3939 = sor.u32 256, 8
      %3940 = vbcast.lane.b32.xlu0 %v3934, %s3939
      %v3941 = vpop.permute.xlu0 %3940
      %v3942 = vlaneseq
      %v3943 = vshrl.u32 %v3942, 7
      %v3944 = vsub.s32 5, %v3943
      %v3945 = vrot.slane %v2983, %v3944
      %3947 = vbcast.lane.b32.xlu0 %v3945, 256
      %v3948 = vpop.permute.xlu0 %3947
      %s3950 = sor.u32 256, 8
      %3951 = vbcast.lane.b32.xlu0 %v3945, %s3950
      %v3952 = vpop.permute.xlu0 %3951
      %v3953 = vlaneseq
      %v3954 = vshrl.u32 %v3953, 7
      %v3955 = vsub.s32 6, %v3954
      %v3956 = vrot.slane %v2983, %v3955
      %3958 = vbcast.lane.b32.xlu0 %v3956, 256
      %v3959 = vpop.permute.xlu0 %3958
      %s3961 = sor.u32 256, 8
      %3962 = vbcast.lane.b32.xlu0 %v3956, %s3961
      %v3963 = vpop.permute.xlu0 %3962
      %v3964 = vlaneseq
      %v3965 = vshrl.u32 %v3964, 7
      %v3966 = vsub.s32 7, %v3965
      %v3967 = vrot.slane %v2983, %v3966
      %3969 = vbcast.lane.b32.xlu0 %v3967, 256
      %v3970 = vpop.permute.xlu0 %3969
      %s3972 = sor.u32 256, 8
      %3973 = vbcast.lane.b32.xlu0 %v3967, %s3972
      %v3974 = vpop.permute.xlu0 %3973
      %v3979 = vcombine.high %v3616, %v3616
      %v3981 = vunpack.c.l.s4 1966171168
      %v3982 = vunpack.c.0.s8 %v3981
      %v3983 = vlaneseq
      %v3984 = vshrl.u32 %v3983, 7
      %v3985 = vsub.s32 %v3982, %v3984
      %v3986 = vrot.slane %v3616, %v3985
      %v3988 = vunpack.c.l.s4 1966171168
      %v3989 = vunpack.c.0.s8 %v3988
      %v3990 = vlaneseq
      %v3991 = vshrl.u32 %v3990, 7
      %v3992 = vsub.s32 %v3989, %v3991
      %v3993 = vrot.slane %v3979, %v3992
      %v3994 = vcombine.high %v3986, %v3986
      %v3995 = vcombine.high %v3993, %v3993
      %v3997 = vunpack.c.l.s4 1966171168
      %v3998 = vunpack.c.0.s8 %v3997
      %v3999 = vlaneseq
      %v4000 = vshrl.u32 %v3999, 7
      %v4001 = vsub.s32 %v3998, %v4000
      %v4002 = vrot.slane %v3986, %v4001
      %v4004 = vunpack.c.l.s4 1966171168
      %v4005 = vunpack.c.0.s8 %v4004
      %v4006 = vlaneseq
      %v4007 = vshrl.u32 %v4006, 7
      %v4008 = vsub.s32 %v4005, %v4007
      %v4009 = vrot.slane %v3993, %v4008
      %v4011 = vunpack.c.l.s4 1966171168
      %v4012 = vunpack.c.0.s8 %v4011
      %v4013 = vlaneseq
      %v4014 = vshrl.u32 %v4013, 7
      %v4015 = vsub.s32 %v4012, %v4014
      %v4016 = vrot.slane %v3994, %v4015
      %v4018 = vunpack.c.l.s4 1966171168
      %v4019 = vunpack.c.0.s8 %v4018
      %v4020 = vlaneseq
      %v4021 = vshrl.u32 %v4020, 7
      %v4022 = vsub.s32 %v4019, %v4021
      %v4023 = vrot.slane %v3995, %v4022
      %v4024 = vcombine.high %v4002, %v4002
      %v4025 = vcombine.high %v4009, %v4009
      %v4026 = vcombine.high %v4016, %v4016
      %v4027 = vcombine.high %v4023, %v4023
      %v4028 = vcombine.high %v3618, %v3618
      %v4030 = vunpack.c.l.s4 1966171168
      %v4031 = vunpack.c.0.s8 %v4030
      %v4032 = vlaneseq
      %v4033 = vshrl.u32 %v4032, 7
      %v4034 = vsub.s32 %v4031, %v4033
      %v4035 = vrot.slane %v3618, %v4034
      %v4037 = vunpack.c.l.s4 1966171168
      %v4038 = vunpack.c.0.s8 %v4037
      %v4039 = vlaneseq
      %v4040 = vshrl.u32 %v4039, 7
      %v4041 = vsub.s32 %v4038, %v4040
      %v4042 = vrot.slane %v4028, %v4041
      %v4043 = vcombine.high %v4035, %v4035
      %v4044 = vcombine.high %v4042, %v4042
      %v4046 = vunpack.c.l.s4 1966171168
      %v4047 = vunpack.c.0.s8 %v4046
      %v4048 = vlaneseq
      %v4049 = vshrl.u32 %v4048, 7
      %v4050 = vsub.s32 %v4047, %v4049
      %v4051 = vrot.slane %v4035, %v4050
      %v4053 = vunpack.c.l.s4 1966171168
      %v4054 = vunpack.c.0.s8 %v4053
      %v4055 = vlaneseq
      %v4056 = vshrl.u32 %v4055, 7
      %v4057 = vsub.s32 %v4054, %v4056
      %v4058 = vrot.slane %v4042, %v4057
      %v4060 = vunpack.c.l.s4 1966171168
      %v4061 = vunpack.c.0.s8 %v4060
      %v4062 = vlaneseq
      %v4063 = vshrl.u32 %v4062, 7
      %v4064 = vsub.s32 %v4061, %v4063
      %v4065 = vrot.slane %v4043, %v4064
      %v4067 = vunpack.c.l.s4 1966171168
      %v4068 = vunpack.c.0.s8 %v4067
      %v4069 = vlaneseq
      %v4070 = vshrl.u32 %v4069, 7
      %v4071 = vsub.s32 %v4068, %v4070
      %v4072 = vrot.slane %v4044, %v4071
      %v4073 = vcombine.high %v4051, %v4051
      %v4074 = vcombine.high %v4058, %v4058
      %v4075 = vcombine.high %v4065, %v4065
      %v4076 = vcombine.high %v4072, %v4072
      %v4077 = vcombine.high %v3620, %v3620
      %v4079 = vunpack.c.l.s4 1966171168
      %v4080 = vunpack.c.0.s8 %v4079
      %v4081 = vlaneseq
      %v4082 = vshrl.u32 %v4081, 7
      %v4083 = vsub.s32 %v4080, %v4082
      %v4084 = vrot.slane %v3620, %v4083
      %v4086 = vunpack.c.l.s4 1966171168
      %v4087 = vunpack.c.0.s8 %v4086
      %v4088 = vlaneseq
      %v4089 = vshrl.u32 %v4088, 7
      %v4090 = vsub.s32 %v4087, %v4089
      %v4091 = vrot.slane %v4077, %v4090
      %v4092 = vcombine.high %v4084, %v4084
      %v4093 = vcombine.high %v4091, %v4091
      %v4095 = vunpack.c.l.s4 1966171168
      %v4096 = vunpack.c.0.s8 %v4095
      %v4097 = vlaneseq
      %v4098 = vshrl.u32 %v4097, 7
      %v4099 = vsub.s32 %v4096, %v4098
      %v4100 = vrot.slane %v4084, %v4099
      %v4102 = vunpack.c.l.s4 1966171168
      %v4103 = vunpack.c.0.s8 %v4102
      %v4104 = vlaneseq
      %v4105 = vshrl.u32 %v4104, 7
      %v4106 = vsub.s32 %v4103, %v4105
      %v4107 = vrot.slane %v4091, %v4106
      %v4109 = vunpack.c.l.s4 1966171168
      %v4110 = vunpack.c.0.s8 %v4109
      %v4111 = vlaneseq
      %v4112 = vshrl.u32 %v4111, 7
      %v4113 = vsub.s32 %v4110, %v4112
      %v4114 = vrot.slane %v4092, %v4113
      %v4116 = vunpack.c.l.s4 1966171168
      %v4117 = vunpack.c.0.s8 %v4116
      %v4118 = vlaneseq
      %v4119 = vshrl.u32 %v4118, 7
      %v4120 = vsub.s32 %v4117, %v4119
      %v4121 = vrot.slane %v4093, %v4120
      %v4122 = vcombine.high %v4100, %v4100
      %v4123 = vcombine.high %v4107, %v4107
      %v4124 = vcombine.high %v4114, %v4114
      %v4125 = vcombine.high %v4121, %v4121
      %v4126 = vcombine.high %v3622, %v3622
      %v4128 = vunpack.c.l.s4 1966171168
      %v4129 = vunpack.c.0.s8 %v4128
      %v4130 = vlaneseq
      %v4131 = vshrl.u32 %v4130, 7
      %v4132 = vsub.s32 %v4129, %v4131
      %v4133 = vrot.slane %v3622, %v4132
      %v4135 = vunpack.c.l.s4 1966171168
      %v4136 = vunpack.c.0.s8 %v4135
      %v4137 = vlaneseq
      %v4138 = vshrl.u32 %v4137, 7
      %v4139 = vsub.s32 %v4136, %v4138
      %v4140 = vrot.slane %v4126, %v4139
      %v4141 = vcombine.high %v4133, %v4133
      %v4142 = vcombine.high %v4140, %v4140
      %v4144 = vunpack.c.l.s4 1966171168
      %v4145 = vunpack.c.0.s8 %v4144
      %v4146 = vlaneseq
      %v4147 = vshrl.u32 %v4146, 7
      %v4148 = vsub.s32 %v4145, %v4147
      %v4149 = vrot.slane %v4133, %v4148
      %v4151 = vunpack.c.l.s4 1966171168
      %v4152 = vunpack.c.0.s8 %v4151
      %v4153 = vlaneseq
      %v4154 = vshrl.u32 %v4153, 7
      %v4155 = vsub.s32 %v4152, %v4154
      %v4156 = vrot.slane %v4140, %v4155
      %v4158 = vunpack.c.l.s4 1966171168
      %v4159 = vunpack.c.0.s8 %v4158
      %v4160 = vlaneseq
      %v4161 = vshrl.u32 %v4160, 7
      %v4162 = vsub.s32 %v4159, %v4161
      %v4163 = vrot.slane %v4141, %v4162
      %v4165 = vunpack.c.l.s4 1966171168
      %v4166 = vunpack.c.0.s8 %v4165
      %v4167 = vlaneseq
      %v4168 = vshrl.u32 %v4167, 7
      %v4169 = vsub.s32 %v4166, %v4168
      %v4170 = vrot.slane %v4142, %v4169
      %v4171 = vcombine.high %v4149, %v4149
      %v4172 = vcombine.high %v4156, %v4156
      %v4173 = vcombine.high %v4163, %v4163
      %v4174 = vcombine.high %v4170, %v4170
      %v4175 = vlaneseq
      %v4176 = vshrl.u32 %v4175, 7
      %v4177 = vsub.s32 0, %v4176
      %v4178 = vrot.slane %v4002, %v4177
      %v4179 = vlaneseq
      %v4180 = vshrl.u32 %v4179, 7
      %v4181 = vsub.s32 0, %v4180
      %v4182 = vrot.slane %v4016, %v4181
      %v4183 = vlaneseq
      %v4184 = vshrl.u32 %v4183, 7
      %v4185 = vsub.s32 0, %v4184
      %v4186 = vrot.slane %v4024, %v4185
      %v4187 = vlaneseq
      %v4188 = vshrl.u32 %v4187, 7
      %v4189 = vsub.s32 0, %v4188
      %v4190 = vrot.slane %v4026, %v4189
      %v4191 = vlaneseq
      %v4192 = vshrl.u32 %v4191, 7
      %v4193 = vsub.s32 0, %v4192
      %v4194 = vrot.slane %v4009, %v4193
      %v4195 = vlaneseq
      %v4196 = vshrl.u32 %v4195, 7
      %v4197 = vsub.s32 0, %v4196
      %v4198 = vrot.slane %v4023, %v4197
      %v4199 = vlaneseq
      %v4200 = vshrl.u32 %v4199, 7
      %v4201 = vsub.s32 0, %v4200
      %v4202 = vrot.slane %v4025, %v4201
      %v4203 = vlaneseq
      %v4204 = vshrl.u32 %v4203, 7
      %v4205 = vsub.s32 0, %v4204
      %v4206 = vrot.slane %v4027, %v4205
      %v4207 = vlaneseq
      %v4208 = vshrl.u32 %v4207, 7
      %v4209 = vsub.s32 0, %v4208
      %v4210 = vrot.slane %v4051, %v4209
      %v4211 = vlaneseq
      %v4212 = vshrl.u32 %v4211, 7
      %v4213 = vsub.s32 0, %v4212
      %v4214 = vrot.slane %v4065, %v4213
      %v4215 = vlaneseq
      %v4216 = vshrl.u32 %v4215, 7
      %v4217 = vsub.s32 0, %v4216
      %v4218 = vrot.slane %v4073, %v4217
      %v4219 = vlaneseq
      %v4220 = vshrl.u32 %v4219, 7
      %v4221 = vsub.s32 0, %v4220
      %v4222 = vrot.slane %v4075, %v4221
      %v4223 = vlaneseq
      %v4224 = vshrl.u32 %v4223, 7
      %v4225 = vsub.s32 0, %v4224
      %v4226 = vrot.slane %v4058, %v4225
      %v4227 = vlaneseq
      %v4228 = vshrl.u32 %v4227, 7
      %v4229 = vsub.s32 0, %v4228
      %v4230 = vrot.slane %v4072, %v4229
      %v4231 = vlaneseq
      %v4232 = vshrl.u32 %v4231, 7
      %v4233 = vsub.s32 0, %v4232
      %v4234 = vrot.slane %v4074, %v4233
      %v4235 = vlaneseq
      %v4236 = vshrl.u32 %v4235, 7
      %v4237 = vsub.s32 0, %v4236
      %v4238 = vrot.slane %v4076, %v4237
      %v4239 = vlaneseq
      %v4240 = vshrl.u32 %v4239, 7
      %v4241 = vsub.s32 0, %v4240
      %v4242 = vrot.slane %v4100, %v4241
      %v4243 = vlaneseq
      %v4244 = vshrl.u32 %v4243, 7
      %v4245 = vsub.s32 0, %v4244
      %v4246 = vrot.slane %v4114, %v4245
      %v4247 = vlaneseq
      %v4248 = vshrl.u32 %v4247, 7
      %v4249 = vsub.s32 0, %v4248
      %v4250 = vrot.slane %v4122, %v4249
      %v4251 = vlaneseq
      %v4252 = vshrl.u32 %v4251, 7
      %v4253 = vsub.s32 0, %v4252
      %v4254 = vrot.slane %v4124, %v4253
      %v4255 = vlaneseq
      %v4256 = vshrl.u32 %v4255, 7
      %v4257 = vsub.s32 0, %v4256
      %v4258 = vrot.slane %v4107, %v4257
      %v4259 = vlaneseq
      %v4260 = vshrl.u32 %v4259, 7
      %v4261 = vsub.s32 0, %v4260
      %v4262 = vrot.slane %v4121, %v4261
      %v4263 = vlaneseq
      %v4264 = vshrl.u32 %v4263, 7
      %v4265 = vsub.s32 0, %v4264
      %v4266 = vrot.slane %v4123, %v4265
      %v4267 = vlaneseq
      %v4268 = vshrl.u32 %v4267, 7
      %v4269 = vsub.s32 0, %v4268
      %v4270 = vrot.slane %v4125, %v4269
      %v4271 = vlaneseq
      %v4272 = vshrl.u32 %v4271, 7
      %v4273 = vsub.s32 0, %v4272
      %v4274 = vrot.slane %v4149, %v4273
      %v4275 = vlaneseq
      %v4276 = vshrl.u32 %v4275, 7
      %v4277 = vsub.s32 0, %v4276
      %v4278 = vrot.slane %v4163, %v4277
      %v4279 = vlaneseq
      %v4280 = vshrl.u32 %v4279, 7
      %v4281 = vsub.s32 0, %v4280
      %v4282 = vrot.slane %v4171, %v4281
      %v4283 = vlaneseq
      %v4284 = vshrl.u32 %v4283, 7
      %v4285 = vsub.s32 0, %v4284
      %v4286 = vrot.slane %v4173, %v4285
      %v4287 = vlaneseq
      %v4288 = vshrl.u32 %v4287, 7
      %v4289 = vsub.s32 0, %v4288
      %v4290 = vrot.slane %v4156, %v4289
      %v4291 = vlaneseq
      %v4292 = vshrl.u32 %v4291, 7
      %v4293 = vsub.s32 0, %v4292
      %v4294 = vrot.slane %v4170, %v4293
      %v4295 = vlaneseq
      %v4296 = vshrl.u32 %v4295, 7
      %v4297 = vsub.s32 0, %v4296
      %v4298 = vrot.slane %v4172, %v4297
      %v4299 = vlaneseq
      %v4300 = vshrl.u32 %v4299, 7
      %v4301 = vsub.s32 0, %v4300
      %v4302 = vrot.slane %v4174, %v4301
      %v4335 = vmul.f32 %v3629, %v4178
      %v4336 = vmul.f32 %v3633, %v4178
      %v4337 = vmul.f32 %v3640, %v4182
      %v4338 = vmul.f32 %v3644, %v4182
      %v4339 = vmul.f32 %v3651, %v4186
      %v4340 = vmul.f32 %v3655, %v4186
      %v4341 = vmul.f32 %v3662, %v4190
      %v4342 = vmul.f32 %v3666, %v4190
      %v4343 = vmul.f32 %v3673, %v4194
      %v4344 = vmul.f32 %v3677, %v4194
      %v4345 = vmul.f32 %v3684, %v4198
      %v4346 = vmul.f32 %v3688, %v4198
      %v4347 = vmul.f32 %v3695, %v4202
      %v4348 = vmul.f32 %v3699, %v4202
      %v4349 = vmul.f32 %v3706, %v4206
      %v4350 = vmul.f32 %v3710, %v4206
      %v4351 = vmul.f32 %v3717, %v4210
      %v4352 = vmul.f32 %v3721, %v4210
      %v4353 = vmul.f32 %v3728, %v4214
      %v4354 = vmul.f32 %v3732, %v4214
      %v4355 = vmul.f32 %v3739, %v4218
      %v4356 = vmul.f32 %v3743, %v4218
      %v4357 = vmul.f32 %v3750, %v4222
      %v4358 = vmul.f32 %v3754, %v4222
      %v4359 = vmul.f32 %v3761, %v4226
      %v4360 = vmul.f32 %v3765, %v4226
      %v4361 = vmul.f32 %v3772, %v4230
      %v4362 = vmul.f32 %v3776, %v4230
      %v4363 = vmul.f32 %v3783, %v4234
      %v4364 = vmul.f32 %v3787, %v4234
      %v4365 = vmul.f32 %v3794, %v4238
      %v4366 = vmul.f32 %v3798, %v4238
      %v4367 = vmul.f32 %v3805, %v4242
      %v4368 = vmul.f32 %v3809, %v4242
      %v4369 = vmul.f32 %v3816, %v4246
      %v4370 = vmul.f32 %v3820, %v4246
      %v4371 = vmul.f32 %v3827, %v4250
      %v4372 = vmul.f32 %v3831, %v4250
      %v4373 = vmul.f32 %v3838, %v4254
      %v4374 = vmul.f32 %v3842, %v4254
      %v4375 = vmul.f32 %v3849, %v4258
      %v4376 = vmul.f32 %v3853, %v4258
      %v4377 = vmul.f32 %v3860, %v4262
      %v4378 = vmul.f32 %v3864, %v4262
      %v4379 = vmul.f32 %v3871, %v4266
      %v4380 = vmul.f32 %v3875, %v4266
      %v4381 = vmul.f32 %v3882, %v4270
      %v4382 = vmul.f32 %v3886, %v4270
      %v4383 = vmul.f32 %v3893, %v4274
      %v4384 = vmul.f32 %v3897, %v4274
      %v4385 = vmul.f32 %v3904, %v4278
      %v4386 = vmul.f32 %v3908, %v4278
      %v4387 = vmul.f32 %v3915, %v4282
      %v4388 = vmul.f32 %v3919, %v4282
      %v4389 = vmul.f32 %v3926, %v4286
      %v4390 = vmul.f32 %v3930, %v4286
      %v4391 = vmul.f32 %v3937, %v4290
      %v4392 = vmul.f32 %v3941, %v4290
      %v4393 = vmul.f32 %v3948, %v4294
      %v4394 = vmul.f32 %v3952, %v4294
      %v4395 = vmul.f32 %v3959, %v4298
      %v4396 = vmul.f32 %v3963, %v4298
      %v4397 = vmul.f32 %v3970, %v4302
      %v4398 = vmul.f32 %v3974, %v4302
      %v4399 = vmul.f32 %v306, %v4335
      %v4400 = vmul.f32 %v307, %v4336
      %v4401 = vmul.f32 %v308, %v4337
      %v4402 = vmul.f32 %v309, %v4338
      %v4403 = vmul.f32 %v310, %v4339
      %v4404 = vmul.f32 %v311, %v4340
      %v4405 = vmul.f32 %v312, %v4341
      %v4406 = vmul.f32 %v313, %v4342
      %v4407 = vmul.f32 %v314, %v4343
      %v4408 = vmul.f32 %v315, %v4344
      %v4409 = vmul.f32 %v316, %v4345
      %v4410 = vmul.f32 %v317, %v4346
      %v4411 = vmul.f32 %v318, %v4347
      %v4412 = vmul.f32 %v319, %v4348
      %v4413 = vmul.f32 %v320, %v4349
      %v4414 = vmul.f32 %v321, %v4350
      %v4415 = vmul.f32 %v322, %v4351
      %v4416 = vmul.f32 %v323, %v4352
      %v4417 = vmul.f32 %v324, %v4353
      %v4418 = vmul.f32 %v325, %v4354
      %v4419 = vmul.f32 %v326, %v4355
      %v4420 = vmul.f32 %v327, %v4356
      %v4421 = vmul.f32 %v328, %v4357
      %v4422 = vmul.f32 %v329, %v4358
      %v4423 = vmul.f32 %v330, %v4359
      %v4424 = vmul.f32 %v331, %v4360
      %v4425 = vmul.f32 %v332, %v4361
      %v4426 = vmul.f32 %v333, %v4362
      %v4427 = vmul.f32 %v334, %v4363
      %v4428 = vmul.f32 %v335, %v4364
      %v4429 = vmul.f32 %v336, %v4365
      %v4430 = vmul.f32 %v337, %v4366
      %v4431 = vmul.f32 %v338, %v4367
      %v4432 = vmul.f32 %v339, %v4368
      %v4433 = vmul.f32 %v340, %v4369
      %v4434 = vmul.f32 %v341, %v4370
      %v4435 = vmul.f32 %v342, %v4371
      %v4436 = vmul.f32 %v343, %v4372
      %v4437 = vmul.f32 %v344, %v4373
      %v4438 = vmul.f32 %v345, %v4374
      %v4439 = vmul.f32 %v346, %v4375
      %v4440 = vmul.f32 %v347, %v4376
      %v4441 = vmul.f32 %v348, %v4377
      %v4442 = vmul.f32 %v349, %v4378
      %v4443 = vmul.f32 %v350, %v4379
      %v4444 = vmul.f32 %v351, %v4380
      %v4445 = vmul.f32 %v352, %v4381
      %v4446 = vmul.f32 %v353, %v4382
      %v4447 = vmul.f32 %v354, %v4383
      %v4448 = vmul.f32 %v355, %v4384
      %v4449 = vmul.f32 %v356, %v4385
      %v4450 = vmul.f32 %v357, %v4386
      %v4451 = vmul.f32 %v358, %v4387
      %v4452 = vmul.f32 %v359, %v4388
      %v4453 = vmul.f32 %v360, %v4389
      %v4454 = vmul.f32 %v361, %v4390
      %v4455 = vmul.f32 %v362, %v4391
      %v4456 = vmul.f32 %v363, %v4392
      %v4457 = vmul.f32 %v364, %v4393
      %v4458 = vmul.f32 %v365, %v4394
      %v4459 = vmul.f32 %v366, %v4395
      %v4460 = vmul.f32 %v367, %v4396
      %v4461 = vmul.f32 %v368, %v4397
      %v4462 = vmul.f32 %v369, %v4398
      %4463 = vst.msk [vmem:[%s305] sm:$0xff] %vm370, %v4399
      %4464 = vst.msk [vmem:[%s305 + $0x8] sm:$0xff] %vm370, %v4400
      %4465 = vst.msk [vmem:[%s305 + $0x10] sm:$0xff] %vm370, %v4401
      %4466 = vst.msk [vmem:[%s305 + $0x18] sm:$0xff] %vm370, %v4402
      %4467 = vst.msk [vmem:[%s305 + $0x20] sm:$0xff] %vm370, %v4403
      %4468 = vst.msk [vmem:[%s305 + $0x28] sm:$0xff] %vm370, %v4404
      %4469 = vst.msk [vmem:[%s305 + $0x30] sm:$0xff] %vm370, %v4405
      %4470 = vst.msk [vmem:[%s305 + $0x38] sm:$0xff] %vm370, %v4406
      %4471 = vst.msk [vmem:[%s305 + $0x40] sm:$0xff] %vm370, %v4407
      %4472 = vst.msk [vmem:[%s305 + $0x48] sm:$0xff] %vm370, %v4408
      %4473 = vst.msk [vmem:[%s305 + $0x50] sm:$0xff] %vm370, %v4409
      %4474 = vst.msk [vmem:[%s305 + $0x58] sm:$0xff] %vm370, %v4410
      %4475 = vst.msk [vmem:[%s305 + $0x60] sm:$0xff] %vm370, %v4411
      %4476 = vst.msk [vmem:[%s305 + $0x68] sm:$0xff] %vm370, %v4412
      %4477 = vst.msk [vmem:[%s305 + $0x70] sm:$0xff] %vm370, %v4413
      %4478 = vst.msk [vmem:[%s305 + $0x78] sm:$0xff] %vm370, %v4414
      %4479 = vst.msk [vmem:[%s305 + $0x80] sm:$0xff] %vm370, %v4415
      %4480 = vst.msk [vmem:[%s305 + $0x88] sm:$0xff] %vm370, %v4416
      %4481 = vst.msk [vmem:[%s305 + $0x90] sm:$0xff] %vm370, %v4417
      %4482 = vst.msk [vmem:[%s305 + $0x98] sm:$0xff] %vm370, %v4418
      %4483 = vst.msk [vmem:[%s305 + $0xa0] sm:$0xff] %vm370, %v4419
      %4484 = vst.msk [vmem:[%s305 + $0xa8] sm:$0xff] %vm370, %v4420
      %4485 = vst.msk [vmem:[%s305 + $0xb0] sm:$0xff] %vm370, %v4421
      %4486 = vst.msk [vmem:[%s305 + $0xb8] sm:$0xff] %vm370, %v4422
      %4487 = vst.msk [vmem:[%s305 + $0xc0] sm:$0xff] %vm370, %v4423
      %4488 = vst.msk [vmem:[%s305 + $0xc8] sm:$0xff] %vm370, %v4424
      %4489 = vst.msk [vmem:[%s305 + $0xd0] sm:$0xff] %vm370, %v4425
      %4490 = vst.msk [vmem:[%s305 + $0xd8] sm:$0xff] %vm370, %v4426
      %4491 = vst.msk [vmem:[%s305 + $0xe0] sm:$0xff] %vm370, %v4427
      %4492 = vst.msk [vmem:[%s305 + $0xe8] sm:$0xff] %vm370, %v4428
      %4493 = vst.msk [vmem:[%s305 + $0xf0] sm:$0xff] %vm370, %v4429
      %4494 = vst.msk [vmem:[%s305 + $0xf8] sm:$0xff] %vm370, %v4430
      %4495 = vst.msk [vmem:[%s305 + $0x100] sm:$0xff] %vm370, %v4431
      %4496 = vst.msk [vmem:[%s305 + $0x108] sm:$0xff] %vm370, %v4432
      %4497 = vst.msk [vmem:[%s305 + $0x110] sm:$0xff] %vm370, %v4433
      %4498 = vst.msk [vmem:[%s305 + $0x118] sm:$0xff] %vm370, %v4434
      %4499 = vst.msk [vmem:[%s305 + $0x120] sm:$0xff] %vm370, %v4435
      %4500 = vst.msk [vmem:[%s305 + $0x128] sm:$0xff] %vm370, %v4436
      %4501 = vst.msk [vmem:[%s305 + $0x130] sm:$0xff] %vm370, %v4437
      %4502 = vst.msk [vmem:[%s305 + $0x138] sm:$0xff] %vm370, %v4438
      %4503 = vst.msk [vmem:[%s305 + $0x140] sm:$0xff] %vm370, %v4439
      %4504 = vst.msk [vmem:[%s305 + $0x148] sm:$0xff] %vm370, %v4440
      %4505 = vst.msk [vmem:[%s305 + $0x150] sm:$0xff] %vm370, %v4441
      %4506 = vst.msk [vmem:[%s305 + $0x158] sm:$0xff] %vm370, %v4442
      %4507 = vst.msk [vmem:[%s305 + $0x160] sm:$0xff] %vm370, %v4443
      %4508 = vst.msk [vmem:[%s305 + $0x168] sm:$0xff] %vm370, %v4444
      %4509 = vst.msk [vmem:[%s305 + $0x170] sm:$0xff] %vm370, %v4445
      %4510 = vst.msk [vmem:[%s305 + $0x178] sm:$0xff] %vm370, %v4446
      %4511 = vst.msk [vmem:[%s305 + $0x180] sm:$0xff] %vm370, %v4447
      %4512 = vst.msk [vmem:[%s305 + $0x188] sm:$0xff] %vm370, %v4448
      %4513 = vst.msk [vmem:[%s305 + $0x190] sm:$0xff] %vm370, %v4449
      %4514 = vst.msk [vmem:[%s305 + $0x198] sm:$0xff] %vm370, %v4450
      %4515 = vst.msk [vmem:[%s305 + $0x1a0] sm:$0xff] %vm370, %v4451
      %4516 = vst.msk [vmem:[%s305 + $0x1a8] sm:$0xff] %vm370, %v4452
      %4517 = vst.msk [vmem:[%s305 + $0x1b0] sm:$0xff] %vm370, %v4453
      %4518 = vst.msk [vmem:[%s305 + $0x1b8] sm:$0xff] %vm370, %v4454
      %4519 = vst.msk [vmem:[%s305 + $0x1c0] sm:$0xff] %vm370, %v4455
      %4520 = vst.msk [vmem:[%s305 + $0x1c8] sm:$0xff] %vm370, %v4456
      %4521 = vst.msk [vmem:[%s305 + $0x1d0] sm:$0xff] %vm370, %v4457
      %4522 = vst.msk [vmem:[%s305 + $0x1d8] sm:$0xff] %vm370, %v4458
      %4523 = vst.msk [vmem:[%s305 + $0x1e0] sm:$0xff] %vm370, %v4459
      %4524 = vst.msk [vmem:[%s305 + $0x1e8] sm:$0xff] %vm370, %v4460
      %4525 = vst.msk [vmem:[%s305 + $0x1f0] sm:$0xff] %vm370, %v4461
      %4526 = vst.msk [vmem:[%s305 + $0x1f8] sm:$0xff] %vm370, %v4462
      %p4527 = scmp.lt.s32.totalorder %s19, 1
      %s4528 = scalar_select %p4527, %s19, 1
      %s4529 = smul.addr %s4528, 64
      %s4530 = smul.addr %s4529, 8
      %s4531 = scalar_lea.vmem %s8, %s4530
      // Predicated region
      $region53: #{tpu_custom_call.1} parent=51 // pred_check
        %p4532 = pneg %p210
      $region54: #{tpu_custom_call.1} parent=51 // pred_check_branch
        %4534 = sbr.rel (%p4532) target = $region56
      $region55: #{tpu_custom_call.1} parent=51 // pred_region
        _
      $region56: #{tpu_custom_call.1} parent=51 // pred_fallthru
        _
    $region52: #{tpu_custom_call.1} parent=5 // pred_fallthru
      _
    %p4535 = scmp.le.s32.totalorder 2, %s14
    // Predicated region
    $region57: #{tpu_custom_call.1} parent=5 // pred_check
      %p4536 = pneg %p4535
    $region58: #{tpu_custom_call.1} parent=5 // pred_check_branch
      %4538 = sbr.rel (%p4536) target = $region60
    $region59: #{tpu_custom_call.1} parent=5 // pred_region
      %s4539 = ssub.s32 %s14, 2
      // Predicated region
      $region61: #{tpu_custom_call.1} parent=59 // pred_check
        %p4540 = pneg %p216
      $region62: #{tpu_custom_call.1} parent=59 // pred_check_branch
        %4542 = sbr.rel (%p4540) target = $region64
      $region63: #{tpu_custom_call.1} parent=59 // pred_region
        %p4543 = scmp.lt.s32.totalorder %s20, 1
        %s4544 = scalar_select %p4543, %s20, 1
        %s4545 = smul.addr %s4544, 64
        %s4546 = smul.addr %s4545, 8
        %s4547 = scalar_lea.vmem %s8, %s4546
      $region64: #{tpu_custom_call.1} parent=59 // pred_fallthru
        _
    $region60: #{tpu_custom_call.1} parent=5 // pred_fallthru
      _
  $region6: #{tpu_custom_call.1} parent=0 // loop_footer
    %s18 = sadd.s32 1, %s14
  $region7: #{tpu_custom_call.1} parent=0 // loop_footer_branch
    %13 = sbr.rel target = $region3
  $region8: #{tpu_custom_call.1} parent=0 // loop_exit
    _

</llo_original>
